<compile_context>
chip_gen: v6e
topology: v6e:2x2x1
jax: 0.10.0
libtpu: 0.0.40
codegen_flags: <defaults>
</compile_context>

<pallas_src>
import jax
import jax.numpy as jnp
import numpy as np
from jax import lax
from jax.experimental import pallas as pl
from jax.experimental.pallas import tpu as pltpu

# ------------------------- model dimensions -------------------------
B = 2               # graphs per call (grid axis, "parallel")
N = 32              # nodes per graph
F_IN = 16           # raw node feature dim
EMBED = 4           # per-head embed dim
HEADS = 8
D = EMBED * HEADS   # 32 = embed_dim * num_heads
HN = HEADS * N      # 256 = lane-stacked (head, neighbour) axis
HIDDEN = D // 2     # 16 (GraphPredict hidden)
OUT_DIM = 8
NUM_LAYER = 2
LEAKY_SLOPE = 0.2
LN_EPS = 1e-5

# dot_general dims: contract the last dim of both operands (A @ B^T, MXU-native)
_AB_T = (((1,), (1,)), ((), ()))


# ------------------------- fused forward kernel -------------------------
def _gat_fused_kernel(nfeat_ref, adj_ref, w_enc_ref, b_enc_ref,
                      w0_ref, adst0_ref, asrc0_ref,
                      w1_ref, adst1_ref, asrc1_ref,
                      wp1_ref, bp1_ref, wp2_ref, bp2_ref,
                      rep_ref, rep_t_ref, headmask_ref, blockmask_ref,
                      segsum_ref, headexp_ref,
                      out_ref):
    x = nfeat_ref[0]                   # [N, F_IN]
    adj = adj_ref[0]                   # [N, N] 0/1, row i = incoming edges of node i

    rep = rep_ref[...]                 # [N, HN]    rep[j, hd*N+j] = 1
    rep_t = rep_t_ref[...]             # [HN, N]    rep_t[hd*N+j, j] = 1
    headmask = headmask_ref[...]       # [HEADS, HN] headmask[h, hd*N+j] = (h==hd)
    blockmask = blockmask_ref[...]     # [HN, D]    blockmask[hd*N+j, hd'*E+d] = (hd==hd')
    segsum = segsum_ref[...]           # [HN, HEADS] segsum[hd*N+j, hd] = 1
    headexp = headexp_ref[...]         # [HEADS, D] headexp[hd, hd*E+d] = 1

    # ---- atom encoder: Linear + ReLU (dropout p=0 -> identity) ----
    h = jnp.dot(x, w_enc_ref[...], preferred_element_type=jnp.float32) + b_enc_ref[...]
    h = jnp.maximum(h, 0.0)

    # ---- hoisted (layer-invariant): adjacency replicated per head along lanes ----
    # adj_stack[i, hd*N + j] = adj[i, j]       (MXU lane-replication, no reshape)
    adj_stack = jnp.dot(adj, rep, preferred_element_type=jnp.float32)      # [N, HN]

    layer_refs = ((w0_ref, adst0_ref, asrc0_ref),
                  (w1_ref, adst1_ref, asrc1_ref))

    for w_ref, adst_ref, asrc_ref in layer_refs:       # static unroll (NUM_LAYER=2)
        wh = jnp.dot(h, w_ref[...], preferred_element_type=jnp.float32)    # [N, D]

        # Destination scores, already lane-stacked per head:
        #   dst[i, hd*N + j] = a_dst[hd] . Wh_hd[i]   (independent of j)
        dst = jnp.dot(wh, adst_ref[...], preferred_element_type=jnp.float32)   # [N, HN]

        # Source scores: s_src_t[hd, j] = a_src[hd] . Wh_hd[j]; lane-stack them:
        #   src_row[0, hd*N + j] = s_src_t[hd, j]
        s_src_t = lax.dot_general(asrc_ref[...], wh, _AB_T,
                                  preferred_element_type=jnp.float32)          # [HEADS, N]
        t = jnp.dot(s_src_t, rep, preferred_element_type=jnp.float32)          # [HEADS, HN]
        src_row = jnp.sum(t * headmask, axis=0, keepdims=True)                 # [1, HN]

        # DGL GATConv convention: e[i, j] = LeakyReLU(a_src.Wh_j + a_dst.Wh_i),
        # softmax over incoming neighbours j of destination i, per head.
        e = dst + src_row                                                      # [N, HN]
        e = jnp.where(e > 0.0, e, LEAKY_SLOPE * e)                             # LeakyReLU(0.2)
        m = jnp.max(e, axis=-1, keepdims=True)         # row-constant shift: exact per segment
        p = jnp.exp(e - m) * adj_stack                 # mask non-edges (adj is 0/1)

        # Neighbour aggregation for all heads in ONE matmul:
        #   wh_stack[hd*N + j, :] = Wh[j, :] masked to head hd's columns
        wh_stack = (jnp.dot(rep_t, wh, preferred_element_type=jnp.float32)
                    * blockmask)                                               # [HN, D]
        acc = jnp.dot(p, wh_stack, preferred_element_type=jnp.float32)         # [N, D]

        # Per-head softmax denominators, expanded back to each head's D columns.
        ssum = jnp.dot(p, segsum, preferred_element_type=jnp.float32)          # [N, HEADS]
        inv = pl.reciprocal(ssum, approx=True)
        acc = acc * jnp.dot(inv, headexp, preferred_element_type=jnp.float32)  # [N, D]

        # LayerNorm(affine=False) over features, then ReLU (dropout p=0 -> identity)
        mu = jnp.mean(acc, axis=-1, keepdims=True)
        var = jnp.mean((acc - mu) ** 2, axis=-1, keepdims=True)
        h = jnp.maximum((acc - mu) * lax.rsqrt(var + LN_EPS), 0.0)

    # ---- mean pooling + GraphPredict (Linear-ReLU-Linear) ----
    g = jnp.mean(h, axis=0, keepdims=True)                                     # [1, D]
    hid = jnp.dot(g, wp1_ref[...], preferred_element_type=jnp.float32) + bp1_ref[...]
    hid = jnp.maximum(hid, 0.0)
    out_ref[0] = (jnp.dot(hid, wp2_ref[...], preferred_element_type=jnp.float32)
                  + bp2_ref[...])                                              # [1, OUT_DIM]


# ------------------------- trace-time constant tables -------------------------
def _head_block(a):
    """[HEADS, EMBED] attention vector -> [HEADS, D] head-block matrix.

    Row hd carries a[hd] in columns hd*EMBED:(hd+1)*EMBED, zeros elsewhere, so
    (A_block @ Wh^T)[hd, j] == a[hd] . Wh_hd[j].
    """
    eye = jnp.eye(HEADS, dtype=jnp.float32)
    return (eye[:, :, None] * a[:, None, :]).reshape(HEADS, D)


def _adst_stack(a_dst):
    """[HEADS, EMBED] -> [D, HN] so that (Wh @ out)[i, hd*N+j] == a_dst[hd].Wh_hd[i]."""
    blk = _head_block(a_dst)                     # [HEADS, D]
    return jnp.repeat(blk, N, axis=0).T          # [D, HN]


def _static_tables():
    r = np.arange(HN)
    j = np.arange(N)
    hd = np.arange(HEADS)
    d = np.arange(D)
    rep = (j[:, None] == (r[None, :] % N)).astype(np.float32)                   # [N, HN]
    rep_t = np.ascontiguousarray(rep.T)                                          # [HN, N]
    headmask = (hd[:, None] == (r[None, :] // N)).astype(np.float32)             # [HEADS, HN]
    blockmask = ((r[:, None] // N) == (d[None, :] // EMBED)).astype(np.float32)  # [HN, D]
    segsum = ((r[:, None] // N) == hd[None, :]).astype(np.float32)               # [HN, HEADS]
    headexp = (hd[:, None] == (d[None, :] // EMBED)).astype(np.float32)          # [HEADS, D]
    return tuple(jnp.asarray(a) for a in
                 (rep, rep_t, headmask, blockmask, segsum, headexp))


# ------------------------- wrapper -------------------------
def gat_graph_forward(params, adj, nfeat):
    """adj: [B, N, N] dense neighbour mask (row i = incoming edges of node i),
       nfeat: [B, N, F_IN].  Returns [B, OUT_DIM]."""
    bsz = nfeat.shape[0]
    l0, l1 = params["layers"]
    tables = _static_tables()
    ins = (nfeat, adj,
           params["w_enc"], params["b_enc"],
           l0["w"], _adst_stack(l0["a_dst"]), _head_block(l0["a_src"]),
           l1["w"], _adst_stack(l1["a_dst"]), _head_block(l1["a_src"]),
           params["w1"], params["b1"], params["w2"], params["b2"]) + tables

    def batched(shape):
        return pl.BlockSpec((1,) + tuple(shape[1:]),
                            lambda b, n=len(shape): (b,) + (0,) * (n - 1))

    def shared(shape):
        return pl.BlockSpec(tuple(shape), lambda b, n=len(shape): (0,) * n)

    in_specs = ([batched(nfeat.shape), batched(adj.shape)]
                + [shared(x.shape) for x in ins[2:]])

    out = pl.pallas_call(
        _gat_fused_kernel,
        out_shape=jax.ShapeDtypeStruct((bsz, 1, OUT_DIM), jnp.float32),
        grid=(bsz,),
        in_specs=in_specs,
        out_specs=pl.BlockSpec((1, 1, OUT_DIM), lambda b: (b, 0, 0)),
        compiler_params=pltpu.CompilerParams(dimension_semantics=("parallel",)),
    )(*ins)
    return out.reshape(bsz, OUT_DIM)


# ------------------------- params & driver -------------------------
def init_params(key):
    ks = jax.random.split(key, 3 + 3 * NUM_LAYER)
    scale = 0.1
    params = {
        "w_enc": scale * jax.random.normal(ks[0], (F_IN, D), jnp.float32),
        "b_enc": jnp.zeros((1, D), jnp.float32),
        "w1": scale * jax.random.normal(ks[1], (D, HIDDEN), jnp.float32),
        "b1": jnp.zeros((1, HIDDEN), jnp.float32),
        "w2": scale * jax.random.normal(ks[2], (HIDDEN, OUT_DIM), jnp.float32),
        "b2": jnp.zeros((1, OUT_DIM), jnp.float32),
        "layers": [],
    }
    for i in range(NUM_LAYER):
        params["layers"].append({
            "w": scale * jax.random.normal(ks[3 + 3 * i], (D, HEADS * EMBED), jnp.float32),
            "a_src": scale * jax.random.normal(ks[4 + 3 * i], (HEADS, EMBED), jnp.float32),
            "a_dst": scale * jax.random.normal(ks[5 + 3 * i], (HEADS, EMBED), jnp.float32),
        })
    return params


if __name__ == "__main__":
    key = jax.random.PRNGKey(0)
    k_param, k_feat, k_adj = jax.random.split(key, 3)

    params = init_params(k_param)

    # deterministic small batch of graphs: random symmetric adjacency + self loops
    nfeat = jax.random.normal(k_feat, (B, N, F_IN), jnp.float32)
    adj = (jax.random.uniform(k_adj, (B, N, N)) < 0.3).astype(jnp.float32)
    adj = jnp.maximum(adj, jnp.transpose(adj, (0, 2, 1)))
    idx = jnp.arange(N)
    adj = adj.at[:, idx, idx].set(1.0)   # self loops guard against isolated rows

    out = gat_graph_forward(params, adj, nfeat)
    out = jax.block_until_ready(out)
    assert out.shape == (B, OUT_DIM) and out.dtype == jnp.float32
    assert bool(jnp.isfinite(out).all())
    print("KERNEL_OK")
</pallas_src>

<mosaic_0001>
module attributes {stable_mosaic.version = 11 : i64} {
  func.func @_gat_fused_kernel(%arg0: i32, %arg1: memref<1x32x16xf32, #tpu.memory_space<vmem>>, %arg2: memref<1x32x32xf32, #tpu.memory_space<vmem>>, %arg3: memref<16x32xf32, #tpu.memory_space<vmem>>, %arg4: memref<1x32xf32, #tpu.memory_space<vmem>>, %arg5: memref<32x32xf32, #tpu.memory_space<vmem>>, %arg6: memref<32x256xf32, #tpu.memory_space<vmem>>, %arg7: memref<8x32xf32, #tpu.memory_space<vmem>>, %arg8: memref<32x32xf32, #tpu.memory_space<vmem>>, %arg9: memref<32x256xf32, #tpu.memory_space<vmem>>, %arg10: memref<8x32xf32, #tpu.memory_space<vmem>>, %arg11: memref<32x16xf32, #tpu.memory_space<vmem>>, %arg12: memref<1x16xf32, #tpu.memory_space<vmem>>, %arg13: memref<16x8xf32, #tpu.memory_space<vmem>>, %arg14: memref<1x8xf32, #tpu.memory_space<vmem>>, %arg15: memref<32x256xf32, #tpu.memory_space<vmem>>, %arg16: memref<256x32xf32, #tpu.memory_space<vmem>>, %arg17: memref<8x256xf32, #tpu.memory_space<vmem>>, %arg18: memref<256x32xf32, #tpu.memory_space<vmem>>, %arg19: memref<256x8xf32, #tpu.memory_space<vmem>>, %arg20: memref<8x32xf32, #tpu.memory_space<vmem>>, %arg21: memref<1x1x8xf32, #tpu.memory_space<vmem>>) attributes {dimension_semantics = [#tpu.dimension_semantics<parallel>], iteration_bounds = array<i64: 2>, scalar_prefetch = 0 : i64, scratch_operands = 0 : i64, tpu.core_type = #tpu.core_type<tc>, window_params = [{transform_indices = @transform_0, window_bounds = array<i64: 1, 32, 16>}, {transform_indices = @transform_1, window_bounds = array<i64: 1, 32, 32>}, {pipeline_mode = #tpu.pipeline_mode<synchronous>, transform_indices = @transform_2, window_bounds = array<i64: 16, 32>}, {pipeline_mode = #tpu.pipeline_mode<synchronous>, transform_indices = @transform_3, window_bounds = array<i64: 1, 32>}, {pipeline_mode = #tpu.pipeline_mode<synchronous>, transform_indices = @transform_4, window_bounds = array<i64: 32, 32>}, {pipeline_mode = #tpu.pipeline_mode<synchronous>, transform_indices = @transform_5, window_bounds = array<i64: 32, 256>}, {pipeline_mode = #tpu.pipeline_mode<synchronous>, transform_indices = @transform_6, window_bounds = array<i64: 8, 32>}, {pipeline_mode = #tpu.pipeline_mode<synchronous>, transform_indices = @transform_7, window_bounds = array<i64: 32, 32>}, {pipeline_mode = #tpu.pipeline_mode<synchronous>, transform_indices = @transform_8, window_bounds = array<i64: 32, 256>}, {pipeline_mode = #tpu.pipeline_mode<synchronous>, transform_indices = @transform_9, window_bounds = array<i64: 8, 32>}, {pipeline_mode = #tpu.pipeline_mode<synchronous>, transform_indices = @transform_10, window_bounds = array<i64: 32, 16>}, {pipeline_mode = #tpu.pipeline_mode<synchronous>, transform_indices = @transform_11, window_bounds = array<i64: 1, 16>}, {pipeline_mode = #tpu.pipeline_mode<synchronous>, transform_indices = @transform_12, window_bounds = array<i64: 16, 8>}, {pipeline_mode = #tpu.pipeline_mode<synchronous>, transform_indices = @transform_13, window_bounds = array<i64: 1, 8>}, {pipeline_mode = #tpu.pipeline_mode<synchronous>, transform_indices = @transform_14, window_bounds = array<i64: 32, 256>}, {pipeline_mode = #tpu.pipeline_mode<synchronous>, transform_indices = @transform_15, window_bounds = array<i64: 256, 32>}, {pipeline_mode = #tpu.pipeline_mode<synchronous>, transform_indices = @transform_16, window_bounds = array<i64: 8, 256>}, {pipeline_mode = #tpu.pipeline_mode<synchronous>, transform_indices = @transform_17, window_bounds = array<i64: 256, 32>}, {pipeline_mode = #tpu.pipeline_mode<synchronous>, transform_indices = @transform_18, window_bounds = array<i64: 256, 8>}, {pipeline_mode = #tpu.pipeline_mode<synchronous>, transform_indices = @transform_19, window_bounds = array<i64: 8, 32>}, {transform_indices = @transform_20, window_bounds = array<i64: 1, 1, 8>}]} {
    %c0 = arith.constant 0 : index
    %c0_0 = arith.constant 0 : index
    %c0_1 = arith.constant 0 : index
    %0 = vector.load %arg1[%c0, %c0_0, %c0_1] : memref<1x32x16xf32, #tpu.memory_space<vmem>>, vector<1x32x16xf32>
    %1 = vector.shape_cast %0 : vector<1x32x16xf32> to vector<32x16xf32>
    %c0_2 = arith.constant 0 : index
    %c0_3 = arith.constant 0 : index
    %c0_4 = arith.constant 0 : index
    %2 = vector.load %arg2[%c0_2, %c0_3, %c0_4] : memref<1x32x32xf32, #tpu.memory_space<vmem>>, vector<1x32x32xf32>
    %3 = vector.shape_cast %2 : vector<1x32x32xf32> to vector<32x32xf32>
    %c0_5 = arith.constant 0 : index
    %c0_6 = arith.constant 0 : index
    %4 = vector.load %arg15[%c0_5, %c0_6] : memref<32x256xf32, #tpu.memory_space<vmem>>, vector<32x256xf32>
    %c0_7 = arith.constant 0 : index
    %c0_8 = arith.constant 0 : index
    %5 = vector.load %arg16[%c0_7, %c0_8] : memref<256x32xf32, #tpu.memory_space<vmem>>, vector<256x32xf32>
    %c0_9 = arith.constant 0 : index
    %c0_10 = arith.constant 0 : index
    %6 = vector.load %arg17[%c0_9, %c0_10] : memref<8x256xf32, #tpu.memory_space<vmem>>, vector<8x256xf32>
    %c0_11 = arith.constant 0 : index
    %c0_12 = arith.constant 0 : index
    %7 = vector.load %arg18[%c0_11, %c0_12] : memref<256x32xf32, #tpu.memory_space<vmem>>, vector<256x32xf32>
    %c0_13 = arith.constant 0 : index
    %c0_14 = arith.constant 0 : index
    %8 = vector.load %arg19[%c0_13, %c0_14] : memref<256x8xf32, #tpu.memory_space<vmem>>, vector<256x8xf32>
    %c0_15 = arith.constant 0 : index
    %c0_16 = arith.constant 0 : index
    %9 = vector.load %arg20[%c0_15, %c0_16] : memref<8x32xf32, #tpu.memory_space<vmem>>, vector<8x32xf32>
    %c0_17 = arith.constant 0 : index
    %c0_18 = arith.constant 0 : index
    %10 = vector.load %arg3[%c0_17, %c0_18] : memref<16x32xf32, #tpu.memory_space<vmem>>, vector<16x32xf32>
    %cst = arith.constant dense<0.000000e+00> : vector<32x32xf32>
    %11 = tpu.matmul %1, %10, %cst {dimension_numbers = #tpu.dot_dimension_numbers<[1], [0], [0], [1], [0, 0, 1, 1], [], []>} : vector<32x16xf32>, vector<16x32xf32>, vector<32x32xf32> -> vector<32x32xf32>
    %c0_19 = arith.constant 0 : index
    %c0_20 = arith.constant 0 : index
    %12 = vector.load %arg4[%c0_19, %c0_20] : memref<1x32xf32, #tpu.memory_space<vmem>>, vector<1x32xf32>
    %13 = vector.broadcast %12 : vector<1x32xf32> to vector<32x32xf32>
    %14 = arith.addf %11, %13 : vector<32x32xf32>
    %cst_21 = arith.constant 0.000000e+00 : f32
    %15 = vector.broadcast %cst_21 : f32 to vector<32x32xf32>
    %16 = arith.maximumf %14, %15 : vector<32x32xf32>
    %cst_22 = arith.constant dense<0.000000e+00> : vector<32x256xf32>
    %17 = tpu.matmul %3, %4, %cst_22 {dimension_numbers = #tpu.dot_dimension_numbers<[1], [0], [0], [1], [0, 0, 1, 1], [], []>} : vector<32x32xf32>, vector<32x256xf32>, vector<32x256xf32> -> vector<32x256xf32>
    %c0_23 = arith.constant 0 : index
    %c0_24 = arith.constant 0 : index
    %18 = vector.load %arg5[%c0_23, %c0_24] : memref<32x32xf32, #tpu.memory_space<vmem>>, vector<32x32xf32>
    %cst_25 = arith.constant dense<0.000000e+00> : vector<32x32xf32>
    %19 = tpu.matmul %16, %18, %cst_25 {dimension_numbers = #tpu.dot_dimension_numbers<[1], [0], [0], [1], [0, 0, 1, 1], [], []>} : vector<32x32xf32>, vector<32x32xf32>, vector<32x32xf32> -> vector<32x32xf32>
    %c0_26 = arith.constant 0 : index
    %c0_27 = arith.constant 0 : index
    %20 = vector.load %arg6[%c0_26, %c0_27] : memref<32x256xf32, #tpu.memory_space<vmem>>, vector<32x256xf32>
    %cst_28 = arith.constant dense<0.000000e+00> : vector<32x256xf32>
    %21 = tpu.matmul %19, %20, %cst_28 {dimension_numbers = #tpu.dot_dimension_numbers<[1], [0], [0], [1], [0, 0, 1, 1], [], []>} : vector<32x32xf32>, vector<32x256xf32>, vector<32x256xf32> -> vector<32x256xf32>
    %c0_29 = arith.constant 0 : index
    %c0_30 = arith.constant 0 : index
    %22 = vector.load %arg7[%c0_29, %c0_30] : memref<8x32xf32, #tpu.memory_space<vmem>>, vector<8x32xf32>
    %cst_31 = arith.constant dense<0.000000e+00> : vector<8x32xf32>
    %23 = tpu.matmul %22, %19, %cst_31 {dimension_numbers = #tpu.dot_dimension_numbers<[1], [1], [0], [0], [0, 0, 1, 0], [], []>} : vector<8x32xf32>, vector<32x32xf32>, vector<8x32xf32> -> vector<8x32xf32>
    %cst_32 = arith.constant dense<0.000000e+00> : vector<8x256xf32>
    %24 = tpu.matmul %23, %4, %cst_32 {dimension_numbers = #tpu.dot_dimension_numbers<[1], [0], [0], [1], [0, 0, 1, 1], [], []>} : vector<8x32xf32>, vector<32x256xf32>, vector<8x256xf32> -> vector<8x256xf32>
    %25 = arith.mulf %24, %6 : vector<8x256xf32>
    %cst_33 = arith.constant dense<0.000000e+00> : vector<256xf32>
    %26 = vector.multi_reduction <add>, %25, %cst_33 [0] : vector<8x256xf32> to vector<256xf32>
    %27 = vector.shape_cast %26 : vector<256xf32> to vector<1x256xf32>
    %28 = vector.broadcast %27 : vector<1x256xf32> to vector<32x256xf32>
    %29 = arith.addf %21, %28 : vector<32x256xf32>
    %cst_34 = arith.constant 0.000000e+00 : f32
    %30 = vector.broadcast %cst_34 : f32 to vector<32x256xf32>
    %31 = arith.cmpf ogt, %29, %30 : vector<32x256xf32>
    %cst_35 = arith.constant 2.000000e-01 : f32
    %32 = vector.broadcast %cst_35 : f32 to vector<32x256xf32>
    %33 = arith.mulf %32, %29 : vector<32x256xf32>
    %34 = arith.select %31, %29, %33 : vector<32x256xi1>, vector<32x256xf32>
    %cst_36 = arith.constant dense<0xFF800000> : vector<32xf32>
    %35 = vector.multi_reduction <maximumf>, %34, %cst_36 [1] : vector<32x256xf32> to vector<32xf32>
    %36 = vector.shape_cast %35 : vector<32xf32> to vector<32x1xf32>
    %37 = vector.broadcast %36 : vector<32x1xf32> to vector<32x256xf32>
    %38 = arith.subf %34, %37 : vector<32x256xf32>
    %39 = math.exp %38 : vector<32x256xf32>
    %40 = arith.mulf %39, %17 : vector<32x256xf32>
    %cst_37 = arith.constant dense<0.000000e+00> : vector<256x32xf32>
    %41 = tpu.matmul %5, %19, %cst_37 {dimension_numbers = #tpu.dot_dimension_numbers<[1], [0], [0], [1], [0, 0, 1, 1], [], []>} : vector<256x32xf32>, vector<32x32xf32>, vector<256x32xf32> -> vector<256x32xf32>
    %42 = arith.mulf %41, %7 : vector<256x32xf32>
    %cst_38 = arith.constant dense<0.000000e+00> : vector<32x32xf32>
    %43 = tpu.matmul %40, %42, %cst_38 {dimension_numbers = #tpu.dot_dimension_numbers<[1], [0], [0], [1], [0, 0, 1, 1], [], []>} : vector<32x256xf32>, vector<256x32xf32>, vector<32x32xf32> -> vector<32x32xf32>
    %cst_39 = arith.constant dense<0.000000e+00> : vector<32x8xf32>
    %44 = tpu.matmul %40, %8, %cst_39 {dimension_numbers = #tpu.dot_dimension_numbers<[1], [0], [0], [1], [0, 0, 1, 1], [], []>} : vector<32x256xf32>, vector<256x8xf32>, vector<32x8xf32> -> vector<32x8xf32>
    %45 = tpu.reciprocal %44 {approx = true} : vector<32x8xf32> -> vector<32x8xf32>
    %cst_40 = arith.constant dense<0.000000e+00> : vector<32x32xf32>
    %46 = tpu.matmul %45, %9, %cst_40 {dimension_numbers = #tpu.dot_dimension_numbers<[1], [0], [0], [1], [0, 0, 1, 1], [], []>} : vector<32x8xf32>, vector<8x32xf32>, vector<32x32xf32> -> vector<32x32xf32>
    %47 = arith.mulf %43, %46 : vector<32x32xf32>
    %cst_41 = arith.constant dense<0.000000e+00> : vector<32xf32>
    %48 = vector.multi_reduction <add>, %47, %cst_41 [1] : vector<32x32xf32> to vector<32xf32>
    %49 = vector.shape_cast %48 : vector<32xf32> to vector<32x1xf32>
    %cst_42 = arith.constant 3.200000e+01 : f32
    %50 = vector.broadcast %cst_42 : f32 to vector<32x1xf32>
    %51 = arith.divf %49, %50 : vector<32x1xf32>
    %52 = vector.broadcast %51 : vector<32x1xf32> to vector<32x32xf32>
    %53 = arith.subf %47, %52 : vector<32x32xf32>
    %54 = arith.mulf %53, %53 : vector<32x32xf32>
    %cst_43 = arith.constant dense<0.000000e+00> : vector<32xf32>
    %55 = vector.multi_reduction <add>, %54, %cst_43 [1] : vector<32x32xf32> to vector<32xf32>
    %56 = vector.shape_cast %55 : vector<32xf32> to vector<32x1xf32>
    %cst_44 = arith.constant 3.200000e+01 : f32
    %57 = vector.broadcast %cst_44 : f32 to vector<32x1xf32>
    %58 = arith.divf %56, %57 : vector<32x1xf32>
    %59 = vector.broadcast %51 : vector<32x1xf32> to vector<32x32xf32>
    %60 = arith.subf %47, %59 : vector<32x32xf32>
    %cst_45 = arith.constant 9.99999974E-6 : f32
    %61 = vector.broadcast %cst_45 : f32 to vector<32x1xf32>
    %62 = arith.addf %58, %61 : vector<32x1xf32>
    %63 = math.rsqrt %62 : vector<32x1xf32>
    %64 = vector.broadcast %63 : vector<32x1xf32> to vector<32x32xf32>
    %65 = arith.mulf %60, %64 : vector<32x32xf32>
    %cst_46 = arith.constant 0.000000e+00 : f32
    %66 = vector.broadcast %cst_46 : f32 to vector<32x32xf32>
    %67 = arith.maximumf %65, %66 : vector<32x32xf32>
    %c0_47 = arith.constant 0 : index
    %c0_48 = arith.constant 0 : index
    %68 = vector.load %arg8[%c0_47, %c0_48] : memref<32x32xf32, #tpu.memory_space<vmem>>, vector<32x32xf32>
    %cst_49 = arith.constant dense<0.000000e+00> : vector<32x32xf32>
    %69 = tpu.matmul %67, %68, %cst_49 {dimension_numbers = #tpu.dot_dimension_numbers<[1], [0], [0], [1], [0, 0, 1, 1], [], []>} : vector<32x32xf32>, vector<32x32xf32>, vector<32x32xf32> -> vector<32x32xf32>
    %c0_50 = arith.constant 0 : index
    %c0_51 = arith.constant 0 : index
    %70 = vector.load %arg9[%c0_50, %c0_51] : memref<32x256xf32, #tpu.memory_space<vmem>>, vector<32x256xf32>
    %cst_52 = arith.constant dense<0.000000e+00> : vector<32x256xf32>
    %71 = tpu.matmul %69, %70, %cst_52 {dimension_numbers = #tpu.dot_dimension_numbers<[1], [0], [0], [1], [0, 0, 1, 1], [], []>} : vector<32x32xf32>, vector<32x256xf32>, vector<32x256xf32> -> vector<32x256xf32>
    %c0_53 = arith.constant 0 : index
    %c0_54 = arith.constant 0 : index
    %72 = vector.load %arg10[%c0_53, %c0_54] : memref<8x32xf32, #tpu.memory_space<vmem>>, vector<8x32xf32>
    %cst_55 = arith.constant dense<0.000000e+00> : vector<8x32xf32>
    %73 = tpu.matmul %72, %69, %cst_55 {dimension_numbers = #tpu.dot_dimension_numbers<[1], [1], [0], [0], [0, 0, 1, 0], [], []>} : vector<8x32xf32>, vector<32x32xf32>, vector<8x32xf32> -> vector<8x32xf32>
    %cst_56 = arith.constant dense<0.000000e+00> : vector<8x256xf32>
    %74 = tpu.matmul %73, %4, %cst_56 {dimension_numbers = #tpu.dot_dimension_numbers<[1], [0], [0], [1], [0, 0, 1, 1], [], []>} : vector<8x32xf32>, vector<32x256xf32>, vector<8x256xf32> -> vector<8x256xf32>
    %75 = arith.mulf %74, %6 : vector<8x256xf32>
    %cst_57 = arith.constant dense<0.000000e+00> : vector<256xf32>
    %76 = vector.multi_reduction <add>, %75, %cst_57 [0] : vector<8x256xf32> to vector<256xf32>
    %77 = vector.shape_cast %76 : vector<256xf32> to vector<1x256xf32>
    %78 = vector.broadcast %77 : vector<1x256xf32> to vector<32x256xf32>
    %79 = arith.addf %71, %78 : vector<32x256xf32>
    %cst_58 = arith.constant 0.000000e+00 : f32
    %80 = vector.broadcast %cst_58 : f32 to vector<32x256xf32>
    %81 = arith.cmpf ogt, %79, %80 : vector<32x256xf32>
    %cst_59 = arith.constant 2.000000e-01 : f32
    %82 = vector.broadcast %cst_59 : f32 to vector<32x256xf32>
    %83 = arith.mulf %82, %79 : vector<32x256xf32>
    %84 = arith.select %81, %79, %83 : vector<32x256xi1>, vector<32x256xf32>
    %cst_60 = arith.constant dense<0xFF800000> : vector<32xf32>
    %85 = vector.multi_reduction <maximumf>, %84, %cst_60 [1] : vector<32x256xf32> to vector<32xf32>
    %86 = vector.shape_cast %85 : vector<32xf32> to vector<32x1xf32>
    %87 = vector.broadcast %86 : vector<32x1xf32> to vector<32x256xf32>
    %88 = arith.subf %84, %87 : vector<32x256xf32>
    %89 = math.exp %88 : vector<32x256xf32>
    %90 = arith.mulf %89, %17 : vector<32x256xf32>
    %cst_61 = arith.constant dense<0.000000e+00> : vector<256x32xf32>
    %91 = tpu.matmul %5, %69, %cst_61 {dimension_numbers = #tpu.dot_dimension_numbers<[1], [0], [0], [1], [0, 0, 1, 1], [], []>} : vector<256x32xf32>, vector<32x32xf32>, vector<256x32xf32> -> vector<256x32xf32>
    %92 = arith.mulf %91, %7 : vector<256x32xf32>
    %cst_62 = arith.constant dense<0.000000e+00> : vector<32x32xf32>
    %93 = tpu.matmul %90, %92, %cst_62 {dimension_numbers = #tpu.dot_dimension_numbers<[1], [0], [0], [1], [0, 0, 1, 1], [], []>} : vector<32x256xf32>, vector<256x32xf32>, vector<32x32xf32> -> vector<32x32xf32>
    %cst_63 = arith.constant dense<0.000000e+00> : vector<32x8xf32>
    %94 = tpu.matmul %90, %8, %cst_63 {dimension_numbers = #tpu.dot_dimension_numbers<[1], [0], [0], [1], [0, 0, 1, 1], [], []>} : vector<32x256xf32>, vector<256x8xf32>, vector<32x8xf32> -> vector<32x8xf32>
    %95 = tpu.reciprocal %94 {approx = true} : vector<32x8xf32> -> vector<32x8xf32>
    %cst_64 = arith.constant dense<0.000000e+00> : vector<32x32xf32>
    %96 = tpu.matmul %95, %9, %cst_64 {dimension_numbers = #tpu.dot_dimension_numbers<[1], [0], [0], [1], [0, 0, 1, 1], [], []>} : vector<32x8xf32>, vector<8x32xf32>, vector<32x32xf32> -> vector<32x32xf32>
    %97 = arith.mulf %93, %96 : vector<32x32xf32>
    %cst_65 = arith.constant dense<0.000000e+00> : vector<32xf32>
    %98 = vector.multi_reduction <add>, %97, %cst_65 [1] : vector<32x32xf32> to vector<32xf32>
    %99 = vector.shape_cast %98 : vector<32xf32> to vector<32x1xf32>
    %cst_66 = arith.constant 3.200000e+01 : f32
    %100 = vector.broadcast %cst_66 : f32 to vector<32x1xf32>
    %101 = arith.divf %99, %100 : vector<32x1xf32>
    %102 = vector.broadcast %101 : vector<32x1xf32> to vector<32x32xf32>
    %103 = arith.subf %97, %102 : vector<32x32xf32>
    %104 = arith.mulf %103, %103 : vector<32x32xf32>
    %cst_67 = arith.constant dense<0.000000e+00> : vector<32xf32>
    %105 = vector.multi_reduction <add>, %104, %cst_67 [1] : vector<32x32xf32> to vector<32xf32>
    %106 = vector.shape_cast %105 : vector<32xf32> to vector<32x1xf32>
    %cst_68 = arith.constant 3.200000e+01 : f32
    %107 = vector.broadcast %cst_68 : f32 to vector<32x1xf32>
    %108 = arith.divf %106, %107 : vector<32x1xf32>
    %109 = vector.broadcast %101 : vector<32x1xf32> to vector<32x32xf32>
    %110 = arith.subf %97, %109 : vector<32x32xf32>
    %cst_69 = arith.constant 9.99999974E-6 : f32
    %111 = vector.broadcast %cst_69 : f32 to vector<32x1xf32>
    %112 = arith.addf %108, %111 : vector<32x1xf32>
    %113 = math.rsqrt %112 : vector<32x1xf32>
    %114 = vector.broadcast %113 : vector<32x1xf32> to vector<32x32xf32>
    %115 = arith.mulf %110, %114 : vector<32x32xf32>
    %cst_70 = arith.constant 0.000000e+00 : f32
    %116 = vector.broadcast %cst_70 : f32 to vector<32x32xf32>
    %117 = arith.maximumf %115, %116 : vector<32x32xf32>
    %cst_71 = arith.constant dense<0.000000e+00> : vector<32xf32>
    %118 = vector.multi_reduction <add>, %117, %cst_71 [0] : vector<32x32xf32> to vector<32xf32>
    %119 = vector.shape_cast %118 : vector<32xf32> to vector<1x32xf32>
    %cst_72 = arith.constant 3.200000e+01 : f32
    %120 = vector.broadcast %cst_72 : f32 to vector<1x32xf32>
    %121 = arith.divf %119, %120 : vector<1x32xf32>
    %c0_73 = arith.constant 0 : index
    %c0_74 = arith.constant 0 : index
    %122 = vector.load %arg11[%c0_73, %c0_74] : memref<32x16xf32, #tpu.memory_space<vmem>>, vector<32x16xf32>
    %cst_75 = arith.constant dense<0.000000e+00> : vector<1x16xf32>
    %123 = tpu.matmul %121, %122, %cst_75 {dimension_numbers = #tpu.dot_dimension_numbers<[1], [0], [0], [1], [0, 0, 1, 1], [], []>} : vector<1x32xf32>, vector<32x16xf32>, vector<1x16xf32> -> vector<1x16xf32>
    %c0_76 = arith.constant 0 : index
    %c0_77 = arith.constant 0 : index
    %124 = vector.load %arg12[%c0_76, %c0_77] : memref<1x16xf32, #tpu.memory_space<vmem>>, vector<1x16xf32>
    %125 = arith.addf %123, %124 : vector<1x16xf32>
    %cst_78 = arith.constant 0.000000e+00 : f32
    %126 = vector.broadcast %cst_78 : f32 to vector<1x16xf32>
    %127 = arith.maximumf %125, %126 : vector<1x16xf32>
    %c0_79 = arith.constant 0 : index
    %c0_80 = arith.constant 0 : index
    %128 = vector.load %arg13[%c0_79, %c0_80] : memref<16x8xf32, #tpu.memory_space<vmem>>, vector<16x8xf32>
    %cst_81 = arith.constant dense<0.000000e+00> : vector<1x8xf32>
    %129 = tpu.matmul %127, %128, %cst_81 {dimension_numbers = #tpu.dot_dimension_numbers<[1], [0], [0], [1], [0, 0, 1, 1], [], []>} : vector<1x16xf32>, vector<16x8xf32>, vector<1x8xf32> -> vector<1x8xf32>
    %c0_82 = arith.constant 0 : index
    %c0_83 = arith.constant 0 : index
    %130 = vector.load %arg14[%c0_82, %c0_83] : memref<1x8xf32, #tpu.memory_space<vmem>>, vector<1x8xf32>
    %131 = arith.addf %129, %130 : vector<1x8xf32>
    %c0_84 = arith.constant 0 : index
    %c0_85 = arith.constant 0 : index
    %c0_86 = arith.constant 0 : index
    %132 = vector.load %arg21[%c0_84, %c0_85, %c0_86] : memref<1x1x8xf32, #tpu.memory_space<vmem>>, vector<1x1x8xf32>
    %133 = vector.shape_cast %132 : vector<1x1x8xf32> to vector<1x8xf32>
    %134 = vector.shape_cast %131 : vector<1x8xf32> to vector<1x1x8xf32>
    tpu.vector_store %arg21[%c0_84, %c0_85, %c0_86], %134 {strides = array<i32>} : memref<1x1x8xf32, #tpu.memory_space<vmem>>, vector<1x1x8xf32>,
    return
  }
  func.func @transform_0(%arg0: i32) -> (i32, i32, i32) {
    %c0_i32 = arith.constant 0 : i32
    %c0_i32_0 = arith.constant 0 : i32
    %c0_i32_1 = arith.constant 0 : i32
    return %arg0, %c0_i32, %c0_i32_0 : i32, i32, i32
  }
  func.func @transform_1(%arg0: i32) -> (i32, i32, i32) {
    %c0_i32 = arith.constant 0 : i32
    %c0_i32_0 = arith.constant 0 : i32
    %c0_i32_1 = arith.constant 0 : i32
    return %arg0, %c0_i32, %c0_i32_0 : i32, i32, i32
  }
  func.func @transform_2(%arg0: i32) -> (i32, i32) {
    %c0_i32 = arith.constant 0 : i32
    %c0_i32_0 = arith.constant 0 : i32
    %c0_i32_1 = arith.constant 0 : i32
    return %c0_i32, %c0_i32_0 : i32, i32
  }
  func.func @transform_3(%arg0: i32) -> (i32, i32) {
    %c0_i32 = arith.constant 0 : i32
    %c0_i32_0 = arith.constant 0 : i32
    %c0_i32_1 = arith.constant 0 : i32
    return %c0_i32, %c0_i32_0 : i32, i32
  }
  func.func @transform_4(%arg0: i32) -> (i32, i32) {
    %c0_i32 = arith.constant 0 : i32
    %c0_i32_0 = arith.constant 0 : i32
    %c0_i32_1 = arith.constant 0 : i32
    return %c0_i32, %c0_i32_0 : i32, i32
  }
  func.func @transform_5(%arg0: i32) -> (i32, i32) {
    %c0_i32 = arith.constant 0 : i32
    %c0_i32_0 = arith.constant 0 : i32
    %c0_i32_1 = arith.constant 0 : i32
    return %c0_i32, %c0_i32_0 : i32, i32
  }
  func.func @transform_6(%arg0: i32) -> (i32, i32) {
    %c0_i32 = arith.constant 0 : i32
    %c0_i32_0 = arith.constant 0 : i32
    %c0_i32_1 = arith.constant 0 : i32
    return %c0_i32, %c0_i32_0 : i32, i32
  }
  func.func @transform_7(%arg0: i32) -> (i32, i32) {
    %c0_i32 = arith.constant 0 : i32
    %c0_i32_0 = arith.constant 0 : i32
    %c0_i32_1 = arith.constant 0 : i32
    return %c0_i32, %c0_i32_0 : i32, i32
  }
  func.func @transform_8(%arg0: i32) -> (i32, i32) {
    %c0_i32 = arith.constant 0 : i32
    %c0_i32_0 = arith.constant 0 : i32
    %c0_i32_1 = arith.constant 0 : i32
    return %c0_i32, %c0_i32_0 : i32, i32
  }
  func.func @transform_9(%arg0: i32) -> (i32, i32) {
    %c0_i32 = arith.constant 0 : i32
    %c0_i32_0 = arith.constant 0 : i32
    %c0_i32_1 = arith.constant 0 : i32
    return %c0_i32, %c0_i32_0 : i32, i32
  }
  func.func @transform_10(%arg0: i32) -> (i32, i32) {
    %c0_i32 = arith.constant 0 : i32
    %c0_i32_0 = arith.constant 0 : i32
    %c0_i32_1 = arith.constant 0 : i32
    return %c0_i32, %c0_i32_0 : i32, i32
  }
  func.func @transform_11(%arg0: i32) -> (i32, i32) {
    %c0_i32 = arith.constant 0 : i32
    %c0_i32_0 = arith.constant 0 : i32
    %c0_i32_1 = arith.constant 0 : i32
    return %c0_i32, %c0_i32_0 : i32, i32
  }
  func.func @transform_12(%arg0: i32) -> (i32, i32) {
    %c0_i32 = arith.constant 0 : i32
    %c0_i32_0 = arith.constant 0 : i32
    %c0_i32_1 = arith.constant 0 : i32
    return %c0_i32, %c0_i32_0 : i32, i32
  }
  func.func @transform_13(%arg0: i32) -> (i32, i32) {
    %c0_i32 = arith.constant 0 : i32
    %c0_i32_0 = arith.constant 0 : i32
    %c0_i32_1 = arith.constant 0 : i32
    return %c0_i32, %c0_i32_0 : i32, i32
  }
  func.func @transform_14(%arg0: i32) -> (i32, i32) {
    %c0_i32 = arith.constant 0 : i32
    %c0_i32_0 = arith.constant 0 : i32
    %c0_i32_1 = arith.constant 0 : i32
    return %c0_i32, %c0_i32_0 : i32, i32
  }
  func.func @transform_15(%arg0: i32) -> (i32, i32) {
    %c0_i32 = arith.constant 0 : i32
    %c0_i32_0 = arith.constant 0 : i32
    %c0_i32_1 = arith.constant 0 : i32
    return %c0_i32, %c0_i32_0 : i32, i32
  }
  func.func @transform_16(%arg0: i32) -> (i32, i32) {
    %c0_i32 = arith.constant 0 : i32
    %c0_i32_0 = arith.constant 0 : i32
    %c0_i32_1 = arith.constant 0 : i32
    return %c0_i32, %c0_i32_0 : i32, i32
  }
  func.func @transform_17(%arg0: i32) -> (i32, i32) {
    %c0_i32 = arith.constant 0 : i32
    %c0_i32_0 = arith.constant 0 : i32
    %c0_i32_1 = arith.constant 0 : i32
    return %c0_i32, %c0_i32_0 : i32, i32
  }
  func.func @transform_18(%arg0: i32) -> (i32, i32) {
    %c0_i32 = arith.constant 0 : i32
    %c0_i32_0 = arith.constant 0 : i32
    %c0_i32_1 = arith.constant 0 : i32
    return %c0_i32, %c0_i32_0 : i32, i32
  }
  func.func @transform_19(%arg0: i32) -> (i32, i32) {
    %c0_i32 = arith.constant 0 : i32
    %c0_i32_0 = arith.constant 0 : i32
    %c0_i32_1 = arith.constant 0 : i32
    return %c0_i32, %c0_i32_0 : i32, i32
  }
  func.func @transform_20(%arg0: i32) -> (i32, i32, i32) {
    %c0_i32 = arith.constant 0 : i32
    %c0_i32_0 = arith.constant 0 : i32
    %c0_i32_1 = arith.constant 0 : i32
    return %arg0, %c0_i32, %c0_i32_0 : i32, i32, i32
  }
}

</mosaic_0001>

<llo_original>
// kernel: tpu_custom_call.1
$region0: #{tpu_custom_call.1}
  #allocation0 [shape = 'u32[]', space=smem, size = 0x4, offset = 0x4, fixed_abs, tag = 'smem constant byte address 0x4 - core index']
  #allocation1 [shape = 'u32[144,128]{1,0:T(1,128)}', space=vmem, size = 0x12000, scoped, tag = 'internal scratch']
  %s0 = inlined_call_operand.vmem [shape: f32[2,32,16], index: 0, kind: input, shape index: {}]
  %s1 = inlined_call_operand.vmem [shape: f32[2,32,32], index: 1, kind: input, shape index: {}]
  %s2 = inlined_call_operand.vmem [shape: f32[16,32], index: 2, kind: input, shape index: {}]
  %s3 = inlined_call_operand.vmem [shape: f32[1,32], index: 3, kind: input, shape index: {}]
  %s4 = inlined_call_operand.vmem [shape: f32[32,32], index: 4, kind: input, shape index: {}]
  %s5 = inlined_call_operand.vmem [shape: f32[32,256], index: 5, kind: input, shape index: {}]
  %s6 = inlined_call_operand.vmem [shape: f32[8,32], index: 6, kind: input, shape index: {}]
  %s7 = inlined_call_operand.vmem [shape: f32[32,32], index: 7, kind: input, shape index: {}]
  %s8 = inlined_call_operand.vmem [shape: f32[32,256], index: 8, kind: input, shape index: {}]
  %s9 = inlined_call_operand.vmem [shape: f32[8,32], index: 9, kind: input, shape index: {}]
  %s10 = inlined_call_operand.vmem [shape: f32[32,16], index: 10, kind: input, shape index: {}]
  %s11 = inlined_call_operand.vmem [shape: f32[1,16], index: 11, kind: input, shape index: {}]
  %s12 = inlined_call_operand.vmem [shape: f32[16,8], index: 12, kind: input, shape index: {}]
  %s13 = inlined_call_operand.vmem [shape: f32[1,8], index: 13, kind: input, shape index: {}]
  %s14 = inlined_call_operand.vmem [shape: f32[32,256], index: 14, kind: input, shape index: {}]
  %s15 = inlined_call_operand.vmem [shape: f32[256,32], index: 15, kind: input, shape index: {}]
  %s16 = inlined_call_operand.vmem [shape: f32[8,256], index: 16, kind: input, shape index: {}]
  %s17 = inlined_call_operand.vmem [shape: f32[256,32], index: 17, kind: input, shape index: {}]
  %s18 = inlined_call_operand.vmem [shape: f32[256,8], index: 18, kind: input, shape index: {}]
  %s19 = inlined_call_operand.vmem [shape: f32[8,32], index: 19, kind: input, shape index: {}]
  %s20 = inlined_call_operand.hbm [shape: f32[2,1,8], index: 20, kind: output, shape index: {}]
  %s21 = sld [smem:[#allocation0]]
  $region113: #{tpu_custom_call.1} parent=0
    _
  %s23 = ssub.s32 1, %s21
  %s24 = scalar_select 0, %s23, %s21
  $region1: #{tpu_custom_call.1} parent=0
    #allocation2 [shape = 'u8[1024]{0}', space=vmem, size = 0x400, scoped, tag = 'output window, operand 0']
    #allocation3 [shape = 's32[2]{0}', space=sflag, size = 0x8, scoped, tag = 'scoped memory for tpu_custom_call.1']
    %25 = vsyncpa [#allocation3], 0
    %s26 = scalar_lea.sflag [#allocation3], 1
    %27 = vsyncpa %s26, 0
    loop: start=0, step=1, limit=4
    $region2: #{tpu_custom_call.1} parent=1 // loop_pre_header
      _
    $region3: #{tpu_custom_call.1} parent=1 // loop_header
      %s29 = sphi 0, %s33
      %p30 = scmp.ge.s32.totalorder %s29, 4
      %s39 = sphi 0, %s41
      %s42 = sphi 0, %s39
      %s43 = sphi 0, %s42
      %s59 = sphi 0, %s43
      %s65 = sphi 0, %s67
      %s68 = sphi 0, %s65
      %s69 = sphi 0, %s68
      %s85 = sphi 0, %s69
      %s89 = sphi 0, %s89
      %s91 = sphi 0, %s89
      %s92 = sphi 0, %s91
      %s106 = sphi 0, %s92
      %s110 = sphi 0, %s110
      %s112 = sphi 0, %s110
      %s113 = sphi 0, %s112
      %s127 = sphi 0, %s113
      %s131 = sphi 0, %s131
      %s133 = sphi 0, %s131
      %s134 = sphi 0, %s133
      %s148 = sphi 0, %s134
      %s152 = sphi 0, %s152
      %s154 = sphi 0, %s152
      %s155 = sphi 0, %s154
      %s169 = sphi 0, %s155
      %s173 = sphi 0, %s173
      %s175 = sphi 0, %s173
      %s176 = sphi 0, %s175
      %s190 = sphi 0, %s176
      %s194 = sphi 0, %s194
      %s196 = sphi 0, %s194
      %s197 = sphi 0, %s196
      %s211 = sphi 0, %s197
      %s215 = sphi 0, %s215
      %s217 = sphi 0, %s215
      %s218 = sphi 0, %s217
      %s232 = sphi 0, %s218
      %s236 = sphi 0, %s236
      %s238 = sphi 0, %s236
      %s239 = sphi 0, %s238
      %s253 = sphi 0, %s239
      %s257 = sphi 0, %s257
      %s259 = sphi 0, %s257
      %s260 = sphi 0, %s259
      %s274 = sphi 0, %s260
      %s278 = sphi 0, %s278
      %s280 = sphi 0, %s278
      %s281 = sphi 0, %s280
      %s295 = sphi 0, %s281
      %s299 = sphi 0, %s299
      %s301 = sphi 0, %s299
      %s302 = sphi 0, %s301
      %s316 = sphi 0, %s302
      %s320 = sphi 0, %s320
      %s322 = sphi 0, %s320
      %s323 = sphi 0, %s322
      %s337 = sphi 0, %s323
      %s341 = sphi 0, %s341
      %s343 = sphi 0, %s341
      %s344 = sphi 0, %s343
      %s358 = sphi 0, %s344
      %s362 = sphi 0, %s362
      %s364 = sphi 0, %s362
      %s365 = sphi 0, %s364
      %s379 = sphi 0, %s365
      %s383 = sphi 0, %s383
      %s385 = sphi 0, %s383
      %s386 = sphi 0, %s385
      %s400 = sphi 0, %s386
      %s404 = sphi 0, %s404
      %s406 = sphi 0, %s404
      %s407 = sphi 0, %s406
      %s421 = sphi 0, %s407
      %s425 = sphi 0, %s425
      %s427 = sphi 0, %s425
      %s428 = sphi 0, %s427
      %s442 = sphi 0, %s428
      %s446 = sphi 0, %s446
      %s448 = sphi 0, %s446
      %s449 = sphi 0, %s448
      %s463 = sphi 0, %s449
      %s469 = sphi 0, %s471
      %s472 = sphi 0, %s469
      %s473 = sphi 0, %s472
      %s489 = sphi 0, %s473
    $region4: #{tpu_custom_call.1} parent=1 // loop_header_branch
      %32 = sbr.rel (%p30) target = $region8
    $region5: #{tpu_custom_call.1} parent=1 // loop_body
      %s34 = ssub.s32 %s29, 1
      %s35 = ssub.s32 %s29, 2
      %s36 = sadd.s32 %s29, 1
      %s37 = ssub.s32 %s29, %s36
      %p38 = scmp.eq.s32.totalorder %s37, 0
      %s40 = sadd.s32 %s39, 1
      %s41 = scalar_select %p38, %s39, %s40
      %p44 = pneg %p38
      %p45 = scmp.eq.s32.totalorder %s29, 1
      %p46 = por %p44, %p45
      %p47 = scmp.ne.s32.totalorder %s39, %s42
      %p48 = scmp.eq.s32.totalorder %s29, 0
      %p49 = por %p47, %p48
      %p50 = scmp.ne.s32.totalorder %s39, %s42
      %p51 = scmp.eq.s32.totalorder %s34, 1
      %p52 = por %p50, %p51
      %p53 = scmp.ne.s32.totalorder %s42, %s43
      %p54 = scmp.eq.s32.totalorder %s34, 0
      %p55 = por %p53, %p54
      %p56 = scmp.ne.s32.totalorder %s42, %s43
      %p57 = scmp.eq.s32.totalorder %s35, 1
      %p58 = por %p56, %p57
      %p60 = scmp.ne.s32.totalorder %s43, %s59
      %p61 = scmp.eq.s32.totalorder %s35, 0
      %p62 = por %p60, %p61
      %s63 = ssub.s32 %s29, %s36
      %p64 = scmp.eq.s32.totalorder %s63, 0
      %s66 = sadd.s32 %s65, 1
      %s67 = scalar_select %p64, %s65, %s66
      %p70 = pneg %p64
      %p71 = scmp.eq.s32.totalorder %s29, 1
      %p72 = por %p70, %p71
      %p73 = scmp.ne.s32.totalorder %s65, %s68
      %p74 = scmp.eq.s32.totalorder %s29, 0
      %p75 = por %p73, %p74
      %p76 = scmp.ne.s32.totalorder %s65, %s68
      %p77 = scmp.eq.s32.totalorder %s34, 1
      %p78 = por %p76, %p77
      %p79 = scmp.ne.s32.totalorder %s68, %s69
      %p80 = scmp.eq.s32.totalorder %s34, 0
      %p81 = por %p79, %p80
      %p82 = scmp.ne.s32.totalorder %s68, %s69
      %p83 = scmp.eq.s32.totalorder %s35, 1
      %p84 = por %p82, %p83
      %p86 = scmp.ne.s32.totalorder %s69, %s85
      %p87 = scmp.eq.s32.totalorder %s35, 0
      %p88 = por %p86, %p87
      %s90 = sadd.s32 %s89, 1
      %p93 = scmp.eq.s32.totalorder %s29, 1
      %p94 = scmp.ne.s32.totalorder %s89, %s91
      %p95 = scmp.eq.s32.totalorder %s29, 0
      %p96 = por %p94, %p95
      %p97 = scmp.ne.s32.totalorder %s89, %s91
      %p98 = scmp.eq.s32.totalorder %s34, 1
      %p99 = por %p97, %p98
      %p100 = scmp.ne.s32.totalorder %s91, %s92
      %p101 = scmp.eq.s32.totalorder %s34, 0
      %p102 = por %p100, %p101
      %p103 = scmp.ne.s32.totalorder %s91, %s92
      %p104 = scmp.eq.s32.totalorder %s35, 1
      %p105 = por %p103, %p104
      %p107 = scmp.ne.s32.totalorder %s92, %s106
      %p108 = scmp.eq.s32.totalorder %s35, 0
      %p109 = por %p107, %p108
      %s111 = sadd.s32 %s110, 1
      %p114 = scmp.eq.s32.totalorder %s29, 1
      %p115 = scmp.ne.s32.totalorder %s110, %s112
      %p116 = scmp.eq.s32.totalorder %s29, 0
      %p117 = por %p115, %p116
      %p118 = scmp.ne.s32.totalorder %s110, %s112
      %p119 = scmp.eq.s32.totalorder %s34, 1
      %p120 = por %p118, %p119
      %p121 = scmp.ne.s32.totalorder %s112, %s113
      %p122 = scmp.eq.s32.totalorder %s34, 0
      %p123 = por %p121, %p122
      %p124 = scmp.ne.s32.totalorder %s112, %s113
      %p125 = scmp.eq.s32.totalorder %s35, 1
      %p126 = por %p124, %p125
      %p128 = scmp.ne.s32.totalorder %s113, %s127
      %p129 = scmp.eq.s32.totalorder %s35, 0
      %p130 = por %p128, %p129
      %s132 = sadd.s32 %s131, 1
      %p135 = scmp.eq.s32.totalorder %s29, 1
      %p136 = scmp.ne.s32.totalorder %s131, %s133
      %p137 = scmp.eq.s32.totalorder %s29, 0
      %p138 = por %p136, %p137
      %p139 = scmp.ne.s32.totalorder %s131, %s133
      %p140 = scmp.eq.s32.totalorder %s34, 1
      %p141 = por %p139, %p140
      %p142 = scmp.ne.s32.totalorder %s133, %s134
      %p143 = scmp.eq.s32.totalorder %s34, 0
      %p144 = por %p142, %p143
      %p145 = scmp.ne.s32.totalorder %s133, %s134
      %p146 = scmp.eq.s32.totalorder %s35, 1
      %p147 = por %p145, %p146
      %p149 = scmp.ne.s32.totalorder %s134, %s148
      %p150 = scmp.eq.s32.totalorder %s35, 0
      %p151 = por %p149, %p150
      %s153 = sadd.s32 %s152, 1
      %p156 = scmp.eq.s32.totalorder %s29, 1
      %p157 = scmp.ne.s32.totalorder %s152, %s154
      %p158 = scmp.eq.s32.totalorder %s29, 0
      %p159 = por %p157, %p158
      %p160 = scmp.ne.s32.totalorder %s152, %s154
      %p161 = scmp.eq.s32.totalorder %s34, 1
      %p162 = por %p160, %p161
      %p163 = scmp.ne.s32.totalorder %s154, %s155
      %p164 = scmp.eq.s32.totalorder %s34, 0
      %p165 = por %p163, %p164
      %p166 = scmp.ne.s32.totalorder %s154, %s155
      %p167 = scmp.eq.s32.totalorder %s35, 1
      %p168 = por %p166, %p167
      %p170 = scmp.ne.s32.totalorder %s155, %s169
      %p171 = scmp.eq.s32.totalorder %s35, 0
      %p172 = por %p170, %p171
      %s174 = sadd.s32 %s173, 1
      %p177 = scmp.eq.s32.totalorder %s29, 1
      %p178 = scmp.ne.s32.totalorder %s173, %s175
      %p179 = scmp.eq.s32.totalorder %s29, 0
      %p180 = por %p178, %p179
      %p181 = scmp.ne.s32.totalorder %s173, %s175
      %p182 = scmp.eq.s32.totalorder %s34, 1
      %p183 = por %p181, %p182
      %p184 = scmp.ne.s32.totalorder %s175, %s176
      %p185 = scmp.eq.s32.totalorder %s34, 0
      %p186 = por %p184, %p185
      %p187 = scmp.ne.s32.totalorder %s175, %s176
      %p188 = scmp.eq.s32.totalorder %s35, 1
      %p189 = por %p187, %p188
      %p191 = scmp.ne.s32.totalorder %s176, %s190
      %p192 = scmp.eq.s32.totalorder %s35, 0
      %p193 = por %p191, %p192
      %s195 = sadd.s32 %s194, 1
      %p198 = scmp.eq.s32.totalorder %s29, 1
      %p199 = scmp.ne.s32.totalorder %s194, %s196
      %p200 = scmp.eq.s32.totalorder %s29, 0
      %p201 = por %p199, %p200
      %p202 = scmp.ne.s32.totalorder %s194, %s196
      %p203 = scmp.eq.s32.totalorder %s34, 1
      %p204 = por %p202, %p203
      %p205 = scmp.ne.s32.totalorder %s196, %s197
      %p206 = scmp.eq.s32.totalorder %s34, 0
      %p207 = por %p205, %p206
      %p208 = scmp.ne.s32.totalorder %s196, %s197
      %p209 = scmp.eq.s32.totalorder %s35, 1
      %p210 = por %p208, %p209
      %p212 = scmp.ne.s32.totalorder %s197, %s211
      %p213 = scmp.eq.s32.totalorder %s35, 0
      %p214 = por %p212, %p213
      %s216 = sadd.s32 %s215, 1
      %p219 = scmp.eq.s32.totalorder %s29, 1
      %p220 = scmp.ne.s32.totalorder %s215, %s217
      %p221 = scmp.eq.s32.totalorder %s29, 0
      %p222 = por %p220, %p221
      %p223 = scmp.ne.s32.totalorder %s215, %s217
      %p224 = scmp.eq.s32.totalorder %s34, 1
      %p225 = por %p223, %p224
      %p226 = scmp.ne.s32.totalorder %s217, %s218
      %p227 = scmp.eq.s32.totalorder %s34, 0
      %p228 = por %p226, %p227
      %p229 = scmp.ne.s32.totalorder %s217, %s218
      %p230 = scmp.eq.s32.totalorder %s35, 1
      %p231 = por %p229, %p230
      %p233 = scmp.ne.s32.totalorder %s218, %s232
      %p234 = scmp.eq.s32.totalorder %s35, 0
      %p235 = por %p233, %p234
      %s237 = sadd.s32 %s236, 1
      %p240 = scmp.eq.s32.totalorder %s29, 1
      %p241 = scmp.ne.s32.totalorder %s236, %s238
      %p242 = scmp.eq.s32.totalorder %s29, 0
      %p243 = por %p241, %p242
      %p244 = scmp.ne.s32.totalorder %s236, %s238
      %p245 = scmp.eq.s32.totalorder %s34, 1
      %p246 = por %p244, %p245
      %p247 = scmp.ne.s32.totalorder %s238, %s239
      %p248 = scmp.eq.s32.totalorder %s34, 0
      %p249 = por %p247, %p248
      %p250 = scmp.ne.s32.totalorder %s238, %s239
      %p251 = scmp.eq.s32.totalorder %s35, 1
      %p252 = por %p250, %p251
      %p254 = scmp.ne.s32.totalorder %s239, %s253
      %p255 = scmp.eq.s32.totalorder %s35, 0
      %p256 = por %p254, %p255
      %s258 = sadd.s32 %s257, 1
      %p261 = scmp.eq.s32.totalorder %s29, 1
      %p262 = scmp.ne.s32.totalorder %s257, %s259
      %p263 = scmp.eq.s32.totalorder %s29, 0
      %p264 = por %p262, %p263
      %p265 = scmp.ne.s32.totalorder %s257, %s259
      %p266 = scmp.eq.s32.totalorder %s34, 1
      %p267 = por %p265, %p266
      %p268 = scmp.ne.s32.totalorder %s259, %s260
      %p269 = scmp.eq.s32.totalorder %s34, 0
      %p270 = por %p268, %p269
      %p271 = scmp.ne.s32.totalorder %s259, %s260
      %p272 = scmp.eq.s32.totalorder %s35, 1
      %p273 = por %p271, %p272
      %p275 = scmp.ne.s32.totalorder %s260, %s274
      %p276 = scmp.eq.s32.totalorder %s35, 0
      %p277 = por %p275, %p276
      %s279 = sadd.s32 %s278, 1
      %p282 = scmp.eq.s32.totalorder %s29, 1
      %p283 = scmp.ne.s32.totalorder %s278, %s280
      %p284 = scmp.eq.s32.totalorder %s29, 0
      %p285 = por %p283, %p284
      %p286 = scmp.ne.s32.totalorder %s278, %s280
      %p287 = scmp.eq.s32.totalorder %s34, 1
      %p288 = por %p286, %p287
      %p289 = scmp.ne.s32.totalorder %s280, %s281
      %p290 = scmp.eq.s32.totalorder %s34, 0
      %p291 = por %p289, %p290
      %p292 = scmp.ne.s32.totalorder %s280, %s281
      %p293 = scmp.eq.s32.totalorder %s35, 1
      %p294 = por %p292, %p293
      %p296 = scmp.ne.s32.totalorder %s281, %s295
      %p297 = scmp.eq.s32.totalorder %s35, 0
      %p298 = por %p296, %p297
      %s300 = sadd.s32 %s299, 1
      %p303 = scmp.eq.s32.totalorder %s29, 1
      %p304 = scmp.ne.s32.totalorder %s299, %s301
      %p305 = scmp.eq.s32.totalorder %s29, 0
      %p306 = por %p304, %p305
      %p307 = scmp.ne.s32.totalorder %s299, %s301
      %p308 = scmp.eq.s32.totalorder %s34, 1
      %p309 = por %p307, %p308
      %p310 = scmp.ne.s32.totalorder %s301, %s302
      %p311 = scmp.eq.s32.totalorder %s34, 0
      %p312 = por %p310, %p311
      %p313 = scmp.ne.s32.totalorder %s301, %s302
      %p314 = scmp.eq.s32.totalorder %s35, 1
      %p315 = por %p313, %p314
      %p317 = scmp.ne.s32.totalorder %s302, %s316
      %p318 = scmp.eq.s32.totalorder %s35, 0
      %p319 = por %p317, %p318
      %s321 = sadd.s32 %s320, 1
      %p324 = scmp.eq.s32.totalorder %s29, 1
      %p325 = scmp.ne.s32.totalorder %s320, %s322
      %p326 = scmp.eq.s32.totalorder %s29, 0
      %p327 = por %p325, %p326
      %p328 = scmp.ne.s32.totalorder %s320, %s322
      %p329 = scmp.eq.s32.totalorder %s34, 1
      %p330 = por %p328, %p329
      %p331 = scmp.ne.s32.totalorder %s322, %s323
      %p332 = scmp.eq.s32.totalorder %s34, 0
      %p333 = por %p331, %p332
      %p334 = scmp.ne.s32.totalorder %s322, %s323
      %p335 = scmp.eq.s32.totalorder %s35, 1
      %p336 = por %p334, %p335
      %p338 = scmp.ne.s32.totalorder %s323, %s337
      %p339 = scmp.eq.s32.totalorder %s35, 0
      %p340 = por %p338, %p339
      %s342 = sadd.s32 %s341, 1
      %p345 = scmp.eq.s32.totalorder %s29, 1
      %p346 = scmp.ne.s32.totalorder %s341, %s343
      %p347 = scmp.eq.s32.totalorder %s29, 0
      %p348 = por %p346, %p347
      %p349 = scmp.ne.s32.totalorder %s341, %s343
      %p350 = scmp.eq.s32.totalorder %s34, 1
      %p351 = por %p349, %p350
      %p352 = scmp.ne.s32.totalorder %s343, %s344
      %p353 = scmp.eq.s32.totalorder %s34, 0
      %p354 = por %p352, %p353
      %p355 = scmp.ne.s32.totalorder %s343, %s344
      %p356 = scmp.eq.s32.totalorder %s35, 1
      %p357 = por %p355, %p356
      %p359 = scmp.ne.s32.totalorder %s344, %s358
      %p360 = scmp.eq.s32.totalorder %s35, 0
      %p361 = por %p359, %p360
      %s363 = sadd.s32 %s362, 1
      %p366 = scmp.eq.s32.totalorder %s29, 1
      %p367 = scmp.ne.s32.totalorder %s362, %s364
      %p368 = scmp.eq.s32.totalorder %s29, 0
      %p369 = por %p367, %p368
      %p370 = scmp.ne.s32.totalorder %s362, %s364
      %p371 = scmp.eq.s32.totalorder %s34, 1
      %p372 = por %p370, %p371
      %p373 = scmp.ne.s32.totalorder %s364, %s365
      %p374 = scmp.eq.s32.totalorder %s34, 0
      %p375 = por %p373, %p374
      %p376 = scmp.ne.s32.totalorder %s364, %s365
      %p377 = scmp.eq.s32.totalorder %s35, 1
      %p378 = por %p376, %p377
      %p380 = scmp.ne.s32.totalorder %s365, %s379
      %p381 = scmp.eq.s32.totalorder %s35, 0
      %p382 = por %p380, %p381
      %s384 = sadd.s32 %s383, 1
      %p387 = scmp.eq.s32.totalorder %s29, 1
      %p388 = scmp.ne.s32.totalorder %s383, %s385
      %p389 = scmp.eq.s32.totalorder %s29, 0
      %p390 = por %p388, %p389
      %p391 = scmp.ne.s32.totalorder %s383, %s385
      %p392 = scmp.eq.s32.totalorder %s34, 1
      %p393 = por %p391, %p392
      %p394 = scmp.ne.s32.totalorder %s385, %s386
      %p395 = scmp.eq.s32.totalorder %s34, 0
      %p396 = por %p394, %p395
      %p397 = scmp.ne.s32.totalorder %s385, %s386
      %p398 = scmp.eq.s32.totalorder %s35, 1
      %p399 = por %p397, %p398
      %p401 = scmp.ne.s32.totalorder %s386, %s400
      %p402 = scmp.eq.s32.totalorder %s35, 0
      %p403 = por %p401, %p402
      %s405 = sadd.s32 %s404, 1
      %p408 = scmp.eq.s32.totalorder %s29, 1
      %p409 = scmp.ne.s32.totalorder %s404, %s406
      %p410 = scmp.eq.s32.totalorder %s29, 0
      %p411 = por %p409, %p410
      %p412 = scmp.ne.s32.totalorder %s404, %s406
      %p413 = scmp.eq.s32.totalorder %s34, 1
      %p414 = por %p412, %p413
      %p415 = scmp.ne.s32.totalorder %s406, %s407
      %p416 = scmp.eq.s32.totalorder %s34, 0
      %p417 = por %p415, %p416
      %p418 = scmp.ne.s32.totalorder %s406, %s407
      %p419 = scmp.eq.s32.totalorder %s35, 1
      %p420 = por %p418, %p419
      %p422 = scmp.ne.s32.totalorder %s407, %s421
      %p423 = scmp.eq.s32.totalorder %s35, 0
      %p424 = por %p422, %p423
      %s426 = sadd.s32 %s425, 1
      %p429 = scmp.eq.s32.totalorder %s29, 1
      %p430 = scmp.ne.s32.totalorder %s425, %s427
      %p431 = scmp.eq.s32.totalorder %s29, 0
      %p432 = por %p430, %p431
      %p433 = scmp.ne.s32.totalorder %s425, %s427
      %p434 = scmp.eq.s32.totalorder %s34, 1
      %p435 = por %p433, %p434
      %p436 = scmp.ne.s32.totalorder %s427, %s428
      %p437 = scmp.eq.s32.totalorder %s34, 0
      %p438 = por %p436, %p437
      %p439 = scmp.ne.s32.totalorder %s427, %s428
      %p440 = scmp.eq.s32.totalorder %s35, 1
      %p441 = por %p439, %p440
      %p443 = scmp.ne.s32.totalorder %s428, %s442
      %p444 = scmp.eq.s32.totalorder %s35, 0
      %p445 = por %p443, %p444
      %s447 = sadd.s32 %s446, 1
      %p450 = scmp.eq.s32.totalorder %s29, 1
      %p451 = scmp.ne.s32.totalorder %s446, %s448
      %p452 = scmp.eq.s32.totalorder %s29, 0
      %p453 = por %p451, %p452
      %p454 = scmp.ne.s32.totalorder %s446, %s448
      %p455 = scmp.eq.s32.totalorder %s34, 1
      %p456 = por %p454, %p455
      %p457 = scmp.ne.s32.totalorder %s448, %s449
      %p458 = scmp.eq.s32.totalorder %s34, 0
      %p459 = por %p457, %p458
      %p460 = scmp.ne.s32.totalorder %s448, %s449
      %p461 = scmp.eq.s32.totalorder %s35, 1
      %p462 = por %p460, %p461
      %p464 = scmp.ne.s32.totalorder %s449, %s463
      %p465 = scmp.eq.s32.totalorder %s35, 0
      %p466 = por %p464, %p465
      %s467 = ssub.s32 %s29, %s36
      %p468 = scmp.eq.s32.totalorder %s467, 0
      %s470 = sadd.s32 %s469, 1
      %s471 = scalar_select %p468, %s469, %s470
      %p474 = pneg %p468
      %p475 = scmp.eq.s32.totalorder %s29, 1
      %p476 = por %p474, %p475
      %p477 = scmp.ne.s32.totalorder %s469, %s472
      %p478 = scmp.eq.s32.totalorder %s29, 0
      %p479 = por %p477, %p478
      %p480 = scmp.ne.s32.totalorder %s469, %s472
      %p481 = scmp.eq.s32.totalorder %s34, 1
      %p482 = por %p480, %p481
      %p483 = scmp.ne.s32.totalorder %s472, %s473
      %p484 = scmp.eq.s32.totalorder %s34, 0
      %p485 = por %p483, %p484
      %p486 = scmp.ne.s32.totalorder %s472, %s473
      %p487 = scmp.eq.s32.totalorder %s35, 1
      %p488 = por %p486, %p487
      %p490 = scmp.ne.s32.totalorder %s473, %s489
      %p491 = scmp.eq.s32.totalorder %s35, 0
      %p492 = por %p490, %p491
      %p493 = scmp.le.s32.totalorder 1, %s29
      %p494 = scmp.lt.s32.totalorder %s29, 3
      %p495 = pnand %p493, %p494
      %p496 = pneg %p495
      // Predicated region
      $region9: #{tpu_custom_call.1} parent=5 // pred_check
        _
      $region10: #{tpu_custom_call.1} parent=5 // pred_check_branch
        %498 = sbr.rel (%p495) target = $region12
      $region11: #{tpu_custom_call.1} parent=5 // pred_region
        %s499 = ssub.s32 %s29, 1
        // Predicated region
        $region13: #{tpu_custom_call.1} parent=11 // pred_check
          %p500 = pneg %p102
        $region14: #{tpu_custom_call.1} parent=11 // pred_check_branch
          %502 = sbr.rel (%p500) target = $region16
        $region15: #{tpu_custom_call.1} parent=11 // pred_region
          _
        $region16: #{tpu_custom_call.1} parent=11 // pred_fallthru
          _
        // Predicated region
        $region17: #{tpu_custom_call.1} parent=11 // pred_check
          %p503 = pneg %p123
        $region18: #{tpu_custom_call.1} parent=11 // pred_check_branch
          %505 = sbr.rel (%p503) target = $region20
        $region19: #{tpu_custom_call.1} parent=11 // pred_region
          _
        $region20: #{tpu_custom_call.1} parent=11 // pred_fallthru
          _
        // Predicated region
        $region21: #{tpu_custom_call.1} parent=11 // pred_check
          %p506 = pneg %p144
        $region22: #{tpu_custom_call.1} parent=11 // pred_check_branch
          %508 = sbr.rel (%p506) target = $region24
        $region23: #{tpu_custom_call.1} parent=11 // pred_region
          _
        $region24: #{tpu_custom_call.1} parent=11 // pred_fallthru
          _
        // Predicated region
        $region25: #{tpu_custom_call.1} parent=11 // pred_check
          %p509 = pneg %p165
        $region26: #{tpu_custom_call.1} parent=11 // pred_check_branch
          %511 = sbr.rel (%p509) target = $region28
        $region27: #{tpu_custom_call.1} parent=11 // pred_region
          _
        $region28: #{tpu_custom_call.1} parent=11 // pred_fallthru
          _
        // Predicated region
        $region29: #{tpu_custom_call.1} parent=11 // pred_check
          %p512 = pneg %p186
        $region30: #{tpu_custom_call.1} parent=11 // pred_check_branch
          %514 = sbr.rel (%p512) target = $region32
        $region31: #{tpu_custom_call.1} parent=11 // pred_region
          _
        $region32: #{tpu_custom_call.1} parent=11 // pred_fallthru
          _
        // Predicated region
        $region33: #{tpu_custom_call.1} parent=11 // pred_check
          %p515 = pneg %p207
        $region34: #{tpu_custom_call.1} parent=11 // pred_check_branch
          %517 = sbr.rel (%p515) target = $region36
        $region35: #{tpu_custom_call.1} parent=11 // pred_region
          _
        $region36: #{tpu_custom_call.1} parent=11 // pred_fallthru
          _
        // Predicated region
        $region37: #{tpu_custom_call.1} parent=11 // pred_check
          %p518 = pneg %p228
        $region38: #{tpu_custom_call.1} parent=11 // pred_check_branch
          %520 = sbr.rel (%p518) target = $region40
        $region39: #{tpu_custom_call.1} parent=11 // pred_region
          _
        $region40: #{tpu_custom_call.1} parent=11 // pred_fallthru
          _
        // Predicated region
        $region41: #{tpu_custom_call.1} parent=11 // pred_check
          %p521 = pneg %p249
        $region42: #{tpu_custom_call.1} parent=11 // pred_check_branch
          %523 = sbr.rel (%p521) target = $region44
        $region43: #{tpu_custom_call.1} parent=11 // pred_region
          _
        $region44: #{tpu_custom_call.1} parent=11 // pred_fallthru
          _
        // Predicated region
        $region45: #{tpu_custom_call.1} parent=11 // pred_check
          %p524 = pneg %p270
        $region46: #{tpu_custom_call.1} parent=11 // pred_check_branch
          %526 = sbr.rel (%p524) target = $region48
        $region47: #{tpu_custom_call.1} parent=11 // pred_region
          _
        $region48: #{tpu_custom_call.1} parent=11 // pred_fallthru
          _
        // Predicated region
        $region49: #{tpu_custom_call.1} parent=11 // pred_check
          %p527 = pneg %p291
        $region50: #{tpu_custom_call.1} parent=11 // pred_check_branch
          %529 = sbr.rel (%p527) target = $region52
        $region51: #{tpu_custom_call.1} parent=11 // pred_region
          _
        $region52: #{tpu_custom_call.1} parent=11 // pred_fallthru
          _
        // Predicated region
        $region53: #{tpu_custom_call.1} parent=11 // pred_check
          %p530 = pneg %p312
        $region54: #{tpu_custom_call.1} parent=11 // pred_check_branch
          %532 = sbr.rel (%p530) target = $region56
        $region55: #{tpu_custom_call.1} parent=11 // pred_region
          _
        $region56: #{tpu_custom_call.1} parent=11 // pred_fallthru
          _
        // Predicated region
        $region57: #{tpu_custom_call.1} parent=11 // pred_check
          %p533 = pneg %p333
        $region58: #{tpu_custom_call.1} parent=11 // pred_check_branch
          %535 = sbr.rel (%p533) target = $region60
        $region59: #{tpu_custom_call.1} parent=11 // pred_region
          _
        $region60: #{tpu_custom_call.1} parent=11 // pred_fallthru
          _
        // Predicated region
        $region61: #{tpu_custom_call.1} parent=11 // pred_check
          %p536 = pneg %p354
        $region62: #{tpu_custom_call.1} parent=11 // pred_check_branch
          %538 = sbr.rel (%p536) target = $region64
        $region63: #{tpu_custom_call.1} parent=11 // pred_region
          _
        $region64: #{tpu_custom_call.1} parent=11 // pred_fallthru
          _
        // Predicated region
        $region65: #{tpu_custom_call.1} parent=11 // pred_check
          %p539 = pneg %p375
        $region66: #{tpu_custom_call.1} parent=11 // pred_check_branch
          %541 = sbr.rel (%p539) target = $region68
        $region67: #{tpu_custom_call.1} parent=11 // pred_region
          _
        $region68: #{tpu_custom_call.1} parent=11 // pred_fallthru
          _
        // Predicated region
        $region69: #{tpu_custom_call.1} parent=11 // pred_check
          %p542 = pneg %p396
        $region70: #{tpu_custom_call.1} parent=11 // pred_check_branch
          %544 = sbr.rel (%p542) target = $region72
        $region71: #{tpu_custom_call.1} parent=11 // pred_region
          _
        $region72: #{tpu_custom_call.1} parent=11 // pred_fallthru
          _
        // Predicated region
        $region73: #{tpu_custom_call.1} parent=11 // pred_check
          %p545 = pneg %p417
        $region74: #{tpu_custom_call.1} parent=11 // pred_check_branch
          %547 = sbr.rel (%p545) target = $region76
        $region75: #{tpu_custom_call.1} parent=11 // pred_region
          _
        $region76: #{tpu_custom_call.1} parent=11 // pred_fallthru
          _
        // Predicated region
        $region77: #{tpu_custom_call.1} parent=11 // pred_check
          %p548 = pneg %p438
        $region78: #{tpu_custom_call.1} parent=11 // pred_check_branch
          %550 = sbr.rel (%p548) target = $region80
        $region79: #{tpu_custom_call.1} parent=11 // pred_region
          _
        $region80: #{tpu_custom_call.1} parent=11 // pred_fallthru
          _
        // Predicated region
        $region81: #{tpu_custom_call.1} parent=11 // pred_check
          %p551 = pneg %p459
        $region82: #{tpu_custom_call.1} parent=11 // pred_check_branch
          %553 = sbr.rel (%p551) target = $region84
        $region83: #{tpu_custom_call.1} parent=11 // pred_region
          _
        $region84: #{tpu_custom_call.1} parent=11 // pred_fallthru
          _
      $region12: #{tpu_custom_call.1} parent=5 // pred_fallthru
        _
      %p554 = scmp.lt.s32.totalorder %s29, 2
      // Predicated region
      $region85: #{tpu_custom_call.1} parent=5 // pred_check
        %p555 = pneg %p554
      $region86: #{tpu_custom_call.1} parent=5 // pred_check_branch
        %557 = sbr.rel (%p555) target = $region88
      $region87: #{tpu_custom_call.1} parent=5 // pred_region
        // Predicated region
        $region89: #{tpu_custom_call.1} parent=87 // pred_check
          %p558 = pneg %p49
        $region90: #{tpu_custom_call.1} parent=87 // pred_check_branch
          %560 = sbr.rel (%p558) target = $region92
        $region91: #{tpu_custom_call.1} parent=87 // pred_region
          %p561 = scmp.lt.s32.totalorder %s29, 1
          %s562 = scalar_select %p561, %s29, 1
          %s563 = smul.addr %s562, 4
          %s564 = smul.addr %s563, 8
          %s565 = scalar_lea.vmem %s0, %s564
        $region92: #{tpu_custom_call.1} parent=87 // pred_fallthru
          _
        // Predicated region
        $region93: #{tpu_custom_call.1} parent=87 // pred_check
          %p566 = pneg %p75
        $region94: #{tpu_custom_call.1} parent=87 // pred_check_branch
          %568 = sbr.rel (%p566) target = $region96
        $region95: #{tpu_custom_call.1} parent=87 // pred_region
          %p569 = scmp.lt.s32.totalorder %s29, 1
          %s570 = scalar_select %p569, %s29, 1
          %s571 = smul.addr %s570, 4
          %s572 = smul.addr %s571, 8
          %s573 = scalar_lea.vmem %s1, %s572
        $region96: #{tpu_custom_call.1} parent=87 // pred_fallthru
          _
      $region88: #{tpu_custom_call.1} parent=5 // pred_fallthru
        _
      %p574 = scmp.le.s32.totalorder 1, %s29
      %p575 = scmp.lt.s32.totalorder %s29, 3
      %p576 = pnand %p574, %p575
      %p577 = pneg %p576
      // Predicated region
      $region97: #{tpu_custom_call.1} parent=5 // pred_check
        _
      $region98: #{tpu_custom_call.1} parent=5 // pred_check_branch
        %579 = sbr.rel (%p576) target = $region100
      $region99: #{tpu_custom_call.1} parent=5 // pred_region
        %s580 = ssub.s32 %s29, 1
        %p581 = scmp.lt.s32.totalorder %s34, 1
        %s582 = scalar_select %p581, %s34, 1
        %s583 = smul.addr %s582, 4
        %s584 = smul.addr %s583, 8
        %s585 = scalar_lea.vmem %s0, %s584
        %p586 = pneg %p55
        %p587 = pneg %p52
        %p588 = scmp.lt.s32.totalorder %s34, 1
        %s589 = scalar_select %p588, %s34, 1
        %s590 = smul.addr %s589, 4
        %s591 = smul.addr %s590, 8
        %s592 = scalar_lea.vmem %s1, %s591
        %p593 = pneg %p81
        %p594 = pneg %p78
        %p595 = pneg %p102
        %p596 = pneg %p99
        %p597 = pneg %p123
        %p598 = pneg %p120
        %p599 = pneg %p144
        %p600 = pneg %p141
        %p601 = pneg %p165
        %p602 = pneg %p162
        %p603 = pneg %p186
        %p604 = pneg %p183
        %p605 = pneg %p207
        %p606 = pneg %p204
        %p607 = pneg %p228
        %p608 = pneg %p225
        %p609 = pneg %p249
        %p610 = pneg %p246
        %p611 = pneg %p270
        %p612 = pneg %p267
        %p613 = pneg %p291
        %p614 = pneg %p288
        %p615 = pneg %p312
        %p616 = pneg %p309
        %p617 = pneg %p333
        %p618 = pneg %p330
        %p619 = pneg %p354
        %p620 = pneg %p351
        %p621 = pneg %p375
        %p622 = pneg %p372
        %p623 = pneg %p396
        %p624 = pneg %p393
        %p625 = pneg %p417
        %p626 = pneg %p414
        %p627 = pneg %p438
        %p628 = pneg %p435
        %p629 = pneg %p459
        %p630 = pneg %p456
        %p631 = pneg %p485
        %p632 = pneg %p482
        %s633 = sand.u32 %s472, 1
        %s634 = scalar_lea.sflag [#allocation3], %s633
        %s635 = sand.u32 %s472, 1
        %s636 = scalar_lea.vmem [#allocation2], %s635
        %p637 = scmp.lt.s32.totalorder %s34, 1
        %s638 = scalar_select %p637, %s34, 1
        %s639 = smul.addr %s638, 4
        %s640 = smul.addr %s639, 8
        %s641 = scalar_lea.vmem %s0, %s640
        %p642 = scmp.lt.s32.totalorder %s34, 1
        %s643 = scalar_select %p642, %s34, 1
        %s644 = smul.addr %s643, 4
        %s645 = smul.addr %s644, 8
        %s646 = scalar_lea.vmem %s1, %s645
        %v647 = vld [vmem:[%s641] sm:$0xff]
        %v648 = vld [vmem:[%s641 + $0x8] sm:$0xff]
        %v649 = vld [vmem:[%s641 + $0x10] sm:$0xff]
        %v650 = vld [vmem:[%s641 + $0x18] sm:$0xff]
        %v651 = vld [vmem:[%s646] sm:$0xff]
        %v652 = vld [vmem:[%s646 + $0x8] sm:$0xff]
        %v653 = vld [vmem:[%s646 + $0x10] sm:$0xff]
        %v654 = vld [vmem:[%s646 + $0x18] sm:$0xff]
        %v655 = vld [vmem:[%s14] sm:$0xff]
        %v656 = vld [vmem:[%s14 + $0x8] sm:$0xff]
        %v657 = vld [vmem:[%s14 + $0x10] sm:$0xff]
        %v658 = vld [vmem:[%s14 + $0x18] sm:$0xff]
        %v659 = vld [vmem:[%s14 + $0x20] sm:$0xff]
        %v660 = vld [vmem:[%s14 + $0x28] sm:$0xff]
        %v661 = vld [vmem:[%s14 + $0x30] sm:$0xff]
        %v662 = vld [vmem:[%s14 + $0x38] sm:$0xff]
        %v663 = vld [vmem:[%s15] sm:$0xff]
        %v664 = vld [vmem:[%s15 + $0x8] sm:$0xff]
        %v665 = vld [vmem:[%s15 + $0x10] sm:$0xff]
        %v666 = vld [vmem:[%s15 + $0x18] sm:$0xff]
        %v667 = vld [vmem:[%s15 + $0x20] sm:$0xff]
        %v668 = vld [vmem:[%s15 + $0x28] sm:$0xff]
        %v669 = vld [vmem:[%s15 + $0x30] sm:$0xff]
        %v670 = vld [vmem:[%s15 + $0x38] sm:$0xff]
        %v671 = vld [vmem:[%s15 + $0x40] sm:$0xff]
        %v672 = vld [vmem:[%s15 + $0x48] sm:$0xff]
        %v673 = vld [vmem:[%s15 + $0x50] sm:$0xff]
        %v674 = vld [vmem:[%s15 + $0x58] sm:$0xff]
        %v675 = vld [vmem:[%s15 + $0x60] sm:$0xff]
        %v676 = vld [vmem:[%s15 + $0x68] sm:$0xff]
        %v677 = vld [vmem:[%s15 + $0x70] sm:$0xff]
        %v678 = vld [vmem:[%s15 + $0x78] sm:$0xff]
        %v679 = vld [vmem:[%s15 + $0x80] sm:$0xff]
        %v680 = vld [vmem:[%s15 + $0x88] sm:$0xff]
        %v681 = vld [vmem:[%s15 + $0x90] sm:$0xff]
        %v682 = vld [vmem:[%s15 + $0x98] sm:$0xff]
        %v683 = vld [vmem:[%s15 + $0xa0] sm:$0xff]
        %v684 = vld [vmem:[%s15 + $0xa8] sm:$0xff]
        %v685 = vld [vmem:[%s15 + $0xb0] sm:$0xff]
        %v686 = vld [vmem:[%s15 + $0xb8] sm:$0xff]
        %v687 = vld [vmem:[%s15 + $0xc0] sm:$0xff]
        %v688 = vld [vmem:[%s15 + $0xc8] sm:$0xff]
        %v689 = vld [vmem:[%s15 + $0xd0] sm:$0xff]
        %v690 = vld [vmem:[%s15 + $0xd8] sm:$0xff]
        %v691 = vld [vmem:[%s15 + $0xe0] sm:$0xff]
        %v692 = vld [vmem:[%s15 + $0xe8] sm:$0xff]
        %v693 = vld [vmem:[%s15 + $0xf0] sm:$0xff]
        %v694 = vld [vmem:[%s15 + $0xf8] sm:$0xff]
        %v695 = vld [vmem:[%s16] sm:$0xff]
        %v696 = vld [vmem:[%s16 + $0x8] sm:$0xff]
        %v697 = vld [vmem:[%s17] sm:$0xff]
        %v698 = vld [vmem:[%s17 + $0x8] sm:$0xff]
        %v699 = vld [vmem:[%s17 + $0x10] sm:$0xff]
        %v700 = vld [vmem:[%s17 + $0x18] sm:$0xff]
        %v701 = vld [vmem:[%s17 + $0x20] sm:$0xff]
        %v702 = vld [vmem:[%s17 + $0x28] sm:$0xff]
        %v703 = vld [vmem:[%s17 + $0x30] sm:$0xff]
        %v704 = vld [vmem:[%s17 + $0x38] sm:$0xff]
        %v705 = vld [vmem:[%s17 + $0x40] sm:$0xff]
        %v706 = vld [vmem:[%s17 + $0x48] sm:$0xff]
        %v707 = vld [vmem:[%s17 + $0x50] sm:$0xff]
        %v708 = vld [vmem:[%s17 + $0x58] sm:$0xff]
        %v709 = vld [vmem:[%s17 + $0x60] sm:$0xff]
        %v710 = vld [vmem:[%s17 + $0x68] sm:$0xff]
        %v711 = vld [vmem:[%s17 + $0x70] sm:$0xff]
        %v712 = vld [vmem:[%s17 + $0x78] sm:$0xff]
        %v713 = vld [vmem:[%s17 + $0x80] sm:$0xff]
        %v714 = vld [vmem:[%s17 + $0x88] sm:$0xff]
        %v715 = vld [vmem:[%s17 + $0x90] sm:$0xff]
        %v716 = vld [vmem:[%s17 + $0x98] sm:$0xff]
        %v717 = vld [vmem:[%s17 + $0xa0] sm:$0xff]
        %v718 = vld [vmem:[%s17 + $0xa8] sm:$0xff]
        %v719 = vld [vmem:[%s17 + $0xb0] sm:$0xff]
        %v720 = vld [vmem:[%s17 + $0xb8] sm:$0xff]
        %v721 = vld [vmem:[%s17 + $0xc0] sm:$0xff]
        %v722 = vld [vmem:[%s17 + $0xc8] sm:$0xff]
        %v723 = vld [vmem:[%s17 + $0xd0] sm:$0xff]
        %v724 = vld [vmem:[%s17 + $0xd8] sm:$0xff]
        %v725 = vld [vmem:[%s17 + $0xe0] sm:$0xff]
        %v726 = vld [vmem:[%s17 + $0xe8] sm:$0xff]
        %v727 = vld [vmem:[%s17 + $0xf0] sm:$0xff]
        %v728 = vld [vmem:[%s17 + $0xf8] sm:$0xff]
        %v729 = vld [vmem:[%s18] sm:$0xff]
        %v730 = vld [vmem:[%s18 + $0x8] sm:$0xff]
        %v731 = vld [vmem:[%s18 + $0x10] sm:$0xff]
        %v732 = vld [vmem:[%s18 + $0x18] sm:$0xff]
        %v733 = vld [vmem:[%s18 + $0x20] sm:$0xff]
        %v734 = vld [vmem:[%s18 + $0x28] sm:$0xff]
        %v735 = vld [vmem:[%s18 + $0x30] sm:$0xff]
        %v736 = vld [vmem:[%s18 + $0x38] sm:$0xff]
        %v737 = vld [vmem:[%s18 + $0x40] sm:$0xff]
        %v738 = vld [vmem:[%s18 + $0x48] sm:$0xff]
        %v739 = vld [vmem:[%s18 + $0x50] sm:$0xff]
        %v740 = vld [vmem:[%s18 + $0x58] sm:$0xff]
        %v741 = vld [vmem:[%s18 + $0x60] sm:$0xff]
        %v742 = vld [vmem:[%s18 + $0x68] sm:$0xff]
        %v743 = vld [vmem:[%s18 + $0x70] sm:$0xff]
        %v744 = vld [vmem:[%s18 + $0x78] sm:$0xff]
        %v745 = vld [vmem:[%s18 + $0x80] sm:$0xff]
        %v746 = vld [vmem:[%s18 + $0x88] sm:$0xff]
        %v747 = vld [vmem:[%s18 + $0x90] sm:$0xff]
        %v748 = vld [vmem:[%s18 + $0x98] sm:$0xff]
        %v749 = vld [vmem:[%s18 + $0xa0] sm:$0xff]
        %v750 = vld [vmem:[%s18 + $0xa8] sm:$0xff]
        %v751 = vld [vmem:[%s18 + $0xb0] sm:$0xff]
        %v752 = vld [vmem:[%s18 + $0xb8] sm:$0xff]
        %v753 = vld [vmem:[%s18 + $0xc0] sm:$0xff]
        %v754 = vld [vmem:[%s18 + $0xc8] sm:$0xff]
        %v755 = vld [vmem:[%s18 + $0xd0] sm:$0xff]
        %v756 = vld [vmem:[%s18 + $0xd8] sm:$0xff]
        %v757 = vld [vmem:[%s18 + $0xe0] sm:$0xff]
        %v758 = vld [vmem:[%s18 + $0xe8] sm:$0xff]
        %v759 = vld [vmem:[%s18 + $0xf0] sm:$0xff]
        %v760 = vld [vmem:[%s18 + $0xf8] sm:$0xff]
        %v761 = vld [vmem:[%s19] sm:$0xff]
        %v762 = vld [vmem:[%s2] sm:$0xff]
        %v763 = vld [vmem:[%s2 + $0x8] sm:$0xff]
        %v764 = vld [vmem:[%s3] sm:$0x1]
        %v766 = vlaneseq
        %v767 = vshrl.u32 %v766, 7
        %v768 = vsub.s32 0, %v767
        %v769 = vrot.slane %v764, %v768
        %vm771 = vcmask 130048
        %v773 = vsel %vm771, %v647, 0
        %v776 = vsel %vm771, %v648, 0
        %v779 = vsel %vm771, %v649, 0
        %v782 = vsel %vm771, %v650, 0
        %784 = vmatprep.subr.mxu0 0.0
        %785 = vmatpush1.msra.mxu0 0.0
        %786 = vmatprep.subr.mxu0 0.0
        %787 = vmatpush1.msra.mxu0 0.0
        %788 = vmatprep.subr.mxu0 0.0
        %789 = vmatpush1.msra.mxu0 0.0
        %790 = vmatprep.subr.mxu0 0.0
        %791 = vmatpush1.msra.mxu0 0.0
        %792 = vmatprep.subr.mxu0 0.0
        %793 = vmatpush1.msra.mxu0 0.0
        %794 = vmatprep.subr.mxu0 0.0
        %795 = vmatpush1.msra.mxu0 0.0
        %796 = vmatprep.subr.mxu0 0.0
        %797 = vmatpush1.msra.mxu0 0.0
        %798 = vmatprep.subr.mxu0 0.0
        %799 = vmatpush1.msra.mxu0 0.0
        %800 = vmatprep.subr.mxu0 0.0
        %801 = vmatpush1.msra.mxu0 0.0
        %802 = vmatprep.subr.mxu0 0.0
        %803 = vmatpush1.msra.mxu0 0.0
        %804 = vmatprep.subr.mxu0 0.0
        %805 = vmatpush1.msra.mxu0 0.0
        %806 = vmatprep.subr.mxu0 0.0
        %807 = vmatpush1.msra.mxu0 0.0
        %808 = vmatprep.subr.mxu0 0.0
        %809 = vmatpush1.msra.mxu0 0.0
        %810 = vmatprep.subr.mxu0 0.0
        %811 = vmatpush1.msra.mxu0 0.0
        %812 = vmatprep.subr.mxu0 0.0
        %813 = vmatpush1.msra.mxu0 %v763
        %814 = vmatprep.subr.mxu0 0.0
        %815 = vmatpush1.msra.mxu0 %v762
        %816 = vmatprep.subr.mxu0 0.0
        %817 = vmatpush2.msra.mxu0 0.0
        %818 = vmatprep.subr.mxu0 0.0
        %819 = vmatpush2.msra.mxu0 0.0
        %820 = vmatprep.subr.mxu0 0.0
        %821 = vmatpush2.msra.mxu0 0.0
        %822 = vmatprep.subr.mxu0 0.0
        %823 = vmatpush2.msra.mxu0 0.0
        %824 = vmatprep.subr.mxu0 0.0
        %825 = vmatpush2.msra.mxu0 0.0
        %826 = vmatprep.subr.mxu0 0.0
        %827 = vmatpush2.msra.mxu0 0.0
        %828 = vmatprep.subr.mxu0 0.0
        %829 = vmatpush2.msra.mxu0 0.0
        %830 = vmatprep.subr.mxu0 0.0
        %831 = vmatpush2.msra.mxu0 0.0
        %832 = vmatprep.subr.mxu0 0.0
        %833 = vmatpush2.msra.mxu0 0.0
        %834 = vmatprep.subr.mxu0 0.0
        %835 = vmatpush2.msra.mxu0 0.0
        %836 = vmatprep.subr.mxu0 0.0
        %837 = vmatpush2.msra.mxu0 0.0
        %838 = vmatprep.subr.mxu0 0.0
        %839 = vmatpush2.msra.mxu0 0.0
        %840 = vmatprep.subr.mxu0 0.0
        %841 = vmatpush2.msra.mxu0 0.0
        %842 = vmatprep.subr.mxu0 0.0
        %843 = vmatpush2.msra.mxu0 0.0
        %844 = vmatprep.subr.mxu0 0.0
        %845 = vmatpush2.msra.mxu0 0.0
        %846 = vmatprep.subr.mxu0 0.0
        %847 = vmatpush2.msra.mxu0 0.0
        %848 = vmatprep.mubr.f32.mxu0 0.0
        %849 = vmatmul.mubr.f32.gmra.mxu0 %v773
        %v850 = vpop.f32.mrf.mxu0
        %v851 = vadd.f32 %v769, %v850
        %v852 = vpop.f32.mrf.mxu0
        %853 = vmatprep.mubr.f32.mxu0 0.0
        %854 = vmatmul.mubr.f32.gmra.mxu0 %v776
        %v855 = vpop.f32.mrf.mxu0
        %v856 = vadd.f32 %v769, %v855
        %v857 = vpop.f32.mrf.mxu0
        %858 = vmatprep.mubr.f32.mxu0 0.0
        %859 = vmatmul.mubr.f32.gmra.mxu0 %v779
        %v860 = vpop.f32.mrf.mxu0
        %v861 = vadd.f32 %v769, %v860
        %v862 = vpop.f32.mrf.mxu0
        %863 = vmatprep.mubr.f32.mxu0 0.0
        %864 = vmatmul.mubr.f32.gmra.mxu0 %v782
        %v865 = vpop.f32.mrf.mxu0
        %v866 = vadd.f32 %v769, %v865
        %v867 = vpop.f32.mrf.mxu0
        %868 = vdwg.mxu0
        %v869 = vmax.f32 %v851, 0.0
        %v870 = vmax.f32 %v856, 0.0
        %v871 = vmax.f32 %v861, 0.0
        %v872 = vmax.f32 %v866, 0.0
        %vm873 = vcmask 261120
        %v875 = vsel %vm873, %v651, 0
        %v878 = vsel %vm873, %v652, 0
        %v881 = vsel %vm873, %v653, 0
        %v884 = vsel %vm873, %v654, 0
        %886 = vmatprep.subr.mxu0 0.0
        %887 = vmatpush1.msra.mxu0 0.0
        %888 = vmatprep.subr.mxu0 0.0
        %889 = vmatpush1.msra.mxu0 0.0
        %890 = vmatprep.subr.mxu0 0.0
        %891 = vmatpush1.msra.mxu0 0.0
        %892 = vmatprep.subr.mxu0 0.0
        %893 = vmatpush1.msra.mxu0 0.0
        %894 = vmatprep.subr.mxu0 0.0
        %895 = vmatpush1.msra.mxu0 0.0
        %896 = vmatprep.subr.mxu0 0.0
        %897 = vmatpush1.msra.mxu0 0.0
        %898 = vmatprep.subr.mxu0 0.0
        %899 = vmatpush1.msra.mxu0 0.0
        %900 = vmatprep.subr.mxu0 0.0
        %901 = vmatpush1.msra.mxu0 0.0
        %902 = vmatprep.subr.mxu0 0.0
        %903 = vmatpush1.msra.mxu0 0.0
        %904 = vmatprep.subr.mxu0 0.0
        %905 = vmatpush1.msra.mxu0 0.0
        %906 = vmatprep.subr.mxu0 0.0
        %907 = vmatpush1.msra.mxu0 0.0
        %908 = vmatprep.subr.mxu0 0.0
        %909 = vmatpush1.msra.mxu0 0.0
        %910 = vmatprep.subr.mxu0 %v662
        %911 = vmatpush1.msra.mxu0 %v661
        %912 = vmatprep.subr.mxu0 %v660
        %913 = vmatpush1.msra.mxu0 %v659
        %914 = vmatprep.subr.mxu0 %v658
        %915 = vmatpush1.msra.mxu0 %v657
        %916 = vmatprep.subr.mxu0 %v656
        %917 = vmatpush1.msra.mxu0 %v655
        %918 = vmatprep.subr.mxu0 0.0
        %919 = vmatpush2.msra.mxu0 0.0
        %920 = vmatprep.subr.mxu0 0.0
        %921 = vmatpush2.msra.mxu0 0.0
        %922 = vmatprep.subr.mxu0 0.0
        %923 = vmatpush2.msra.mxu0 0.0
        %924 = vmatprep.subr.mxu0 0.0
        %925 = vmatpush2.msra.mxu0 0.0
        %926 = vmatprep.subr.mxu0 0.0
        %927 = vmatpush2.msra.mxu0 0.0
        %928 = vmatprep.subr.mxu0 0.0
        %929 = vmatpush2.msra.mxu0 0.0
        %930 = vmatprep.subr.mxu0 0.0
        %931 = vmatpush2.msra.mxu0 0.0
        %932 = vmatprep.subr.mxu0 0.0
        %933 = vmatpush2.msra.mxu0 0.0
        %934 = vmatprep.subr.mxu0 0.0
        %935 = vmatpush2.msra.mxu0 0.0
        %936 = vmatprep.subr.mxu0 0.0
        %937 = vmatpush2.msra.mxu0 0.0
        %938 = vmatprep.subr.mxu0 0.0
        %939 = vmatpush2.msra.mxu0 0.0
        %940 = vmatprep.subr.mxu0 0.0
        %941 = vmatpush2.msra.mxu0 0.0
        %942 = vmatprep.subr.mxu0 0.0
        %943 = vmatpush2.msra.mxu0 0.0
        %944 = vmatprep.subr.mxu0 0.0
        %945 = vmatpush2.msra.mxu0 0.0
        %946 = vmatprep.subr.mxu0 0.0
        %947 = vmatpush2.msra.mxu0 0.0
        %948 = vmatprep.subr.mxu0 0.0
        %949 = vmatpush2.msra.mxu0 0.0
        %950 = vmatprep.mubr.f32.mxu0 0.0
        %951 = vmatmul.mubr.f32.gmra.mxu0 %v875
        %v952 = vpop.f32.mrf.mxu0
        %v953 = vadd.f32 0.0, %v952
        %v954 = vpop.f32.mrf.mxu0
        %v955 = vadd.f32 0.0, %v954
        %956 = vmatprep.mubr.f32.mxu0 0.0
        %957 = vmatmul.mubr.f32.gmra.mxu0 %v878
        %v958 = vpop.f32.mrf.mxu0
        %v959 = vadd.f32 0.0, %v958
        %v960 = vpop.f32.mrf.mxu0
        %v961 = vadd.f32 0.0, %v960
        %962 = vmatprep.mubr.f32.mxu0 0.0
        %963 = vmatmul.mubr.f32.gmra.mxu0 %v881
        %v964 = vpop.f32.mrf.mxu0
        %v965 = vadd.f32 0.0, %v964
        %v966 = vpop.f32.mrf.mxu0
        %v967 = vadd.f32 0.0, %v966
        %968 = vmatprep.mubr.f32.mxu0 0.0
        %969 = vmatmul.mubr.f32.gmra.mxu0 %v884
        %v970 = vpop.f32.mrf.mxu0
        %v971 = vadd.f32 0.0, %v970
        %v972 = vpop.f32.mrf.mxu0
        %v973 = vadd.f32 0.0, %v972
        %974 = vdwg.mxu0
        %v975 = vld [vmem:[%s4] sm:$0xff]
        %v976 = vld [vmem:[%s4 + $0x8] sm:$0xff]
        %v977 = vld [vmem:[%s4 + $0x10] sm:$0xff]
        %v978 = vld [vmem:[%s4 + $0x18] sm:$0xff]
        %v980 = vsel %vm873, %v869, 0
        %v983 = vsel %vm873, %v870, 0
        %v986 = vsel %vm873, %v871, 0
        %v989 = vsel %vm873, %v872, 0
        %991 = vmatprep.subr.mxu0 0.0
        %992 = vmatpush1.msra.mxu0 0.0
        %993 = vmatprep.subr.mxu0 0.0
        %994 = vmatpush1.msra.mxu0 0.0
        %995 = vmatprep.subr.mxu0 0.0
        %996 = vmatpush1.msra.mxu0 0.0
        %997 = vmatprep.subr.mxu0 0.0
        %998 = vmatpush1.msra.mxu0 0.0
        %999 = vmatprep.subr.mxu0 0.0
        %1000 = vmatpush1.msra.mxu0 0.0
        %1001 = vmatprep.subr.mxu0 0.0
        %1002 = vmatpush1.msra.mxu0 0.0
        %1003 = vmatprep.subr.mxu0 0.0
        %1004 = vmatpush1.msra.mxu0 0.0
        %1005 = vmatprep.subr.mxu0 0.0
        %1006 = vmatpush1.msra.mxu0 0.0
        %1007 = vmatprep.subr.mxu0 0.0
        %1008 = vmatpush1.msra.mxu0 0.0
        %1009 = vmatprep.subr.mxu0 0.0
        %1010 = vmatpush1.msra.mxu0 0.0
        %1011 = vmatprep.subr.mxu0 0.0
        %1012 = vmatpush1.msra.mxu0 0.0
        %1013 = vmatprep.subr.mxu0 0.0
        %1014 = vmatpush1.msra.mxu0 0.0
        %1015 = vmatprep.subr.mxu0 0.0
        %1016 = vmatpush1.msra.mxu0 %v978
        %1017 = vmatprep.subr.mxu0 0.0
        %1018 = vmatpush1.msra.mxu0 %v977
        %1019 = vmatprep.subr.mxu0 0.0
        %1020 = vmatpush1.msra.mxu0 %v976
        %1021 = vmatprep.subr.mxu0 0.0
        %1022 = vmatpush1.msra.mxu0 %v975
        %1023 = vmatprep.subr.mxu0 0.0
        %1024 = vmatpush2.msra.mxu0 0.0
        %1025 = vmatprep.subr.mxu0 0.0
        %1026 = vmatpush2.msra.mxu0 0.0
        %1027 = vmatprep.subr.mxu0 0.0
        %1028 = vmatpush2.msra.mxu0 0.0
        %1029 = vmatprep.subr.mxu0 0.0
        %1030 = vmatpush2.msra.mxu0 0.0
        %1031 = vmatprep.subr.mxu0 0.0
        %1032 = vmatpush2.msra.mxu0 0.0
        %1033 = vmatprep.subr.mxu0 0.0
        %1034 = vmatpush2.msra.mxu0 0.0
        %1035 = vmatprep.subr.mxu0 0.0
        %1036 = vmatpush2.msra.mxu0 0.0
        %1037 = vmatprep.subr.mxu0 0.0
        %1038 = vmatpush2.msra.mxu0 0.0
        %1039 = vmatprep.subr.mxu0 0.0
        %1040 = vmatpush2.msra.mxu0 0.0
        %1041 = vmatprep.subr.mxu0 0.0
        %1042 = vmatpush2.msra.mxu0 0.0
        %1043 = vmatprep.subr.mxu0 0.0
        %1044 = vmatpush2.msra.mxu0 0.0
        %1045 = vmatprep.subr.mxu0 0.0
        %1046 = vmatpush2.msra.mxu0 0.0
        %1047 = vmatprep.subr.mxu0 0.0
        %1048 = vmatpush2.msra.mxu0 0.0
        %1049 = vmatprep.subr.mxu0 0.0
        %1050 = vmatpush2.msra.mxu0 0.0
        %1051 = vmatprep.subr.mxu0 0.0
        %1052 = vmatpush2.msra.mxu0 0.0
        %1053 = vmatprep.subr.mxu0 0.0
        %1054 = vmatpush2.msra.mxu0 0.0
        %1055 = vmatprep.mubr.f32.mxu0 0.0
        %1056 = vmatmul.mubr.f32.gmra.mxu0 %v980
        %v1057 = vpop.f32.mrf.mxu0
        %v1058 = vadd.f32 0.0, %v1057
        %v1059 = vpop.f32.mrf.mxu0
        %1060 = vmatprep.mubr.f32.mxu0 0.0
        %1061 = vmatmul.mubr.f32.gmra.mxu0 %v983
        %v1062 = vpop.f32.mrf.mxu0
        %v1063 = vadd.f32 0.0, %v1062
        %v1064 = vpop.f32.mrf.mxu0
        %1065 = vmatprep.mubr.f32.mxu0 0.0
        %1066 = vmatmul.mubr.f32.gmra.mxu0 %v986
        %v1067 = vpop.f32.mrf.mxu0
        %v1068 = vadd.f32 0.0, %v1067
        %v1069 = vpop.f32.mrf.mxu0
        %1070 = vmatprep.mubr.f32.mxu0 0.0
        %1071 = vmatmul.mubr.f32.gmra.mxu0 %v989
        %v1072 = vpop.f32.mrf.mxu0
        %v1073 = vadd.f32 0.0, %v1072
        %v1074 = vpop.f32.mrf.mxu0
        %1075 = vdwg.mxu0
        %v1076 = vld [vmem:[%s5] sm:$0xff]
        %v1077 = vld [vmem:[%s5 + $0x8] sm:$0xff]
        %v1078 = vld [vmem:[%s5 + $0x10] sm:$0xff]
        %v1079 = vld [vmem:[%s5 + $0x18] sm:$0xff]
        %v1080 = vld [vmem:[%s5 + $0x20] sm:$0xff]
        %v1081 = vld [vmem:[%s5 + $0x28] sm:$0xff]
        %v1082 = vld [vmem:[%s5 + $0x30] sm:$0xff]
        %v1083 = vld [vmem:[%s5 + $0x38] sm:$0xff]
        %v1084 = vld [vmem:[%s6] sm:$0xff]
        %v1086 = vsel %vm873, %v1084, 0
        %v1089 = vsel %vm873, %v1058, 0
        %v1092 = vsel %vm873, %v1063, 0
        %v1095 = vsel %vm873, %v1068, 0
        %v1098 = vsel %vm873, %v1073, 0
        %1100 = vmatprep.subr.mxu0 0.0
        %1101 = vmatpush1.xpose.msra.mxu0 0.0
        %1102 = vmatprep.subr.mxu0 0.0
        %1103 = vmatpush1.xpose.msra.mxu0 0.0
        %1104 = vmatprep.subr.mxu0 0.0
        %1105 = vmatpush1.xpose.msra.mxu0 0.0
        %1106 = vmatprep.subr.mxu0 0.0
        %1107 = vmatpush1.xpose.msra.mxu0 0.0
        %1108 = vmatprep.subr.mxu0 0.0
        %1109 = vmatpush1.xpose.msra.mxu0 0.0
        %1110 = vmatprep.subr.mxu0 0.0
        %1111 = vmatpush1.xpose.msra.mxu0 0.0
        %1112 = vmatprep.subr.mxu0 0.0
        %1113 = vmatpush1.xpose.msra.mxu0 0.0
        %1114 = vmatprep.subr.mxu0 0.0
        %1115 = vmatpush1.xpose.msra.mxu0 0.0
        %1116 = vmatprep.subr.mxu0 0.0
        %1117 = vmatpush1.xpose.msra.mxu0 0.0
        %1118 = vmatprep.subr.mxu0 0.0
        %1119 = vmatpush1.xpose.msra.mxu0 0.0
        %1120 = vmatprep.subr.mxu0 0.0
        %1121 = vmatpush1.xpose.msra.mxu0 0.0
        %1122 = vmatprep.subr.mxu0 0.0
        %1123 = vmatpush1.xpose.msra.mxu0 0.0
        %1124 = vmatprep.subr.mxu0 0.0
        %1125 = vmatpush1.xpose.msra.mxu0 %v1098
        %1126 = vmatprep.subr.mxu0 0.0
        %1127 = vmatpush1.xpose.msra.mxu0 %v1095
        %1128 = vmatprep.subr.mxu0 0.0
        %1129 = vmatpush1.xpose.msra.mxu0 %v1092
        %1130 = vmatprep.subr.mxu0 0.0
        %1131 = vmatpush1.xpose.msra.mxu0 %v1089
        %1132 = vmatprep.subr.mxu0 0.0
        %1133 = vmatpush2.xpose.msra.mxu0 0.0
        %1134 = vmatprep.subr.mxu0 0.0
        %1135 = vmatpush2.xpose.msra.mxu0 0.0
        %1136 = vmatprep.subr.mxu0 0.0
        %1137 = vmatpush2.xpose.msra.mxu0 0.0
        %1138 = vmatprep.subr.mxu0 0.0
        %1139 = vmatpush2.xpose.msra.mxu0 0.0
        %1140 = vmatprep.subr.mxu0 0.0
        %1141 = vmatpush2.xpose.msra.mxu0 0.0
        %1142 = vmatprep.subr.mxu0 0.0
        %1143 = vmatpush2.xpose.msra.mxu0 0.0
        %1144 = vmatprep.subr.mxu0 0.0
        %1145 = vmatpush2.xpose.msra.mxu0 0.0
        %1146 = vmatprep.subr.mxu0 0.0
        %1147 = vmatpush2.xpose.msra.mxu0 0.0
        %1148 = vmatprep.subr.mxu0 0.0
        %1149 = vmatpush2.xpose.msra.mxu0 0.0
        %1150 = vmatprep.subr.mxu0 0.0
        %1151 = vmatpush2.xpose.msra.mxu0 0.0
        %1152 = vmatprep.subr.mxu0 0.0
        %1153 = vmatpush2.xpose.msra.mxu0 0.0
        %1154 = vmatprep.subr.mxu0 0.0
        %1155 = vmatpush2.xpose.msra.mxu0 0.0
        %1156 = vmatprep.subr.mxu0 0.0
        %1157 = vmatpush2.xpose.msra.mxu0 0.0
        %1158 = vmatprep.subr.mxu0 0.0
        %1159 = vmatpush2.xpose.msra.mxu0 0.0
        %1160 = vmatprep.subr.mxu0 0.0
        %1161 = vmatpush2.xpose.msra.mxu0 0.0
        %1162 = vmatprep.subr.mxu0 0.0
        %1163 = vmatpush2.xpose.msra.mxu0 0.0
        %1164 = vmatprep.mubr.f32.mxu0 0.0
        %1165 = vmatmul.mubr.f32.gmra.mxu0 %v1086
        %v1166 = vpop.f32.mrf.mxu0
        %v1167 = vadd.f32 0.0, %v1166
        %v1168 = vpop.f32.mrf.mxu0
        %1169 = vdwg.mxu0
        %v1171 = vsel %vm873, %v1167, 0
        %1173 = vmatprep.subr.mxu0 0.0
        %1174 = vmatpush1.msra.mxu0 0.0
        %1175 = vmatprep.subr.mxu0 0.0
        %1176 = vmatpush1.msra.mxu0 0.0
        %1177 = vmatprep.subr.mxu0 0.0
        %1178 = vmatpush1.msra.mxu0 0.0
        %1179 = vmatprep.subr.mxu0 0.0
        %1180 = vmatpush1.msra.mxu0 0.0
        %1181 = vmatprep.subr.mxu0 0.0
        %1182 = vmatpush1.msra.mxu0 0.0
        %1183 = vmatprep.subr.mxu0 0.0
        %1184 = vmatpush1.msra.mxu0 0.0
        %1185 = vmatprep.subr.mxu0 0.0
        %1186 = vmatpush1.msra.mxu0 0.0
        %1187 = vmatprep.subr.mxu0 0.0
        %1188 = vmatpush1.msra.mxu0 0.0
        %1189 = vmatprep.subr.mxu0 0.0
        %1190 = vmatpush1.msra.mxu0 0.0
        %1191 = vmatprep.subr.mxu0 0.0
        %1192 = vmatpush1.msra.mxu0 0.0
        %1193 = vmatprep.subr.mxu0 0.0
        %1194 = vmatpush1.msra.mxu0 0.0
        %1195 = vmatprep.subr.mxu0 0.0
        %1196 = vmatpush1.msra.mxu0 0.0
        %1197 = vmatprep.subr.mxu0 %v662
        %1198 = vmatpush1.msra.mxu0 %v661
        %1199 = vmatprep.subr.mxu0 %v660
        %1200 = vmatpush1.msra.mxu0 %v659
        %1201 = vmatprep.subr.mxu0 %v658
        %1202 = vmatpush1.msra.mxu0 %v657
        %1203 = vmatprep.subr.mxu0 %v656
        %1204 = vmatpush1.msra.mxu0 %v655
        %1205 = vmatprep.subr.mxu0 0.0
        %1206 = vmatpush2.msra.mxu0 0.0
        %1207 = vmatprep.subr.mxu0 0.0
        %1208 = vmatpush2.msra.mxu0 0.0
        %1209 = vmatprep.subr.mxu0 0.0
        %1210 = vmatpush2.msra.mxu0 0.0
        %1211 = vmatprep.subr.mxu0 0.0
        %1212 = vmatpush2.msra.mxu0 0.0
        %1213 = vmatprep.subr.mxu0 0.0
        %1214 = vmatpush2.msra.mxu0 0.0
        %1215 = vmatprep.subr.mxu0 0.0
        %1216 = vmatpush2.msra.mxu0 0.0
        %1217 = vmatprep.subr.mxu0 0.0
        %1218 = vmatpush2.msra.mxu0 0.0
        %1219 = vmatprep.subr.mxu0 0.0
        %1220 = vmatpush2.msra.mxu0 0.0
        %1221 = vmatprep.subr.mxu0 0.0
        %1222 = vmatpush2.msra.mxu0 0.0
        %1223 = vmatprep.subr.mxu0 0.0
        %1224 = vmatpush2.msra.mxu0 0.0
        %1225 = vmatprep.subr.mxu0 0.0
        %1226 = vmatpush2.msra.mxu0 0.0
        %1227 = vmatprep.subr.mxu0 0.0
        %1228 = vmatpush2.msra.mxu0 0.0
        %1229 = vmatprep.subr.mxu0 0.0
        %1230 = vmatpush2.msra.mxu0 0.0
        %1231 = vmatprep.subr.mxu0 0.0
        %1232 = vmatpush2.msra.mxu0 0.0
        %1233 = vmatprep.subr.mxu0 0.0
        %1234 = vmatpush2.msra.mxu0 0.0
        %1235 = vmatprep.subr.mxu0 0.0
        %1236 = vmatpush2.msra.mxu0 0.0
        %1237 = vmatprep.mubr.f32.mxu0 0.0
        %1238 = vmatmul.mubr.f32.gmra.mxu0 %v1171
        %v1239 = vpop.f32.mrf.mxu0
        %v1240 = vadd.f32 0.0, %v1239
        %v1241 = vpop.f32.mrf.mxu0
        %v1242 = vadd.f32 0.0, %v1241
        %1243 = vdwg.mxu0
        %v1244 = vmul.f32 %v1240, %v695
        %v1245 = vmul.f32 %v1242, %v696
        %v1246 = vrot.slane %v1244, 4
        %v1247 = vadd.f32 %v1244, %v1246
        %v1248 = vrot.slane %v1247, 2
        %v1249 = vadd.f32 %v1247, %v1248
        %v1250 = vrot.slane %v1249, 1
        %v1251 = vadd.f32 %v1249, %v1250
        %v1252 = vrot.slane %v1245, 4
        %v1253 = vadd.f32 %v1245, %v1252
        %v1254 = vrot.slane %v1253, 2
        %v1255 = vadd.f32 %v1253, %v1254
        %v1256 = vrot.slane %v1255, 1
        %v1257 = vadd.f32 %v1255, %v1256
        %1258 = vmatprep.subr.mxu0 0.0
        %1259 = vmatpush1.msra.mxu0 0.0
        %1260 = vmatprep.subr.mxu0 0.0
        %1261 = vmatpush1.msra.mxu0 0.0
        %1262 = vmatprep.subr.mxu0 0.0
        %1263 = vmatpush1.msra.mxu0 0.0
        %1264 = vmatprep.subr.mxu0 0.0
        %1265 = vmatpush1.msra.mxu0 0.0
        %1266 = vmatprep.subr.mxu0 0.0
        %1267 = vmatpush1.msra.mxu0 0.0
        %1268 = vmatprep.subr.mxu0 0.0
        %1269 = vmatpush1.msra.mxu0 0.0
        %1270 = vmatprep.subr.mxu0 0.0
        %1271 = vmatpush1.msra.mxu0 0.0
        %1272 = vmatprep.subr.mxu0 0.0
        %1273 = vmatpush1.msra.mxu0 0.0
        %1274 = vmatprep.subr.mxu0 0.0
        %1275 = vmatpush1.msra.mxu0 0.0
        %1276 = vmatprep.subr.mxu0 0.0
        %1277 = vmatpush1.msra.mxu0 0.0
        %1278 = vmatprep.subr.mxu0 0.0
        %1279 = vmatpush1.msra.mxu0 0.0
        %1280 = vmatprep.subr.mxu0 0.0
        %1281 = vmatpush1.msra.mxu0 0.0
        %1282 = vmatprep.subr.mxu0 %v1083
        %1283 = vmatpush1.msra.mxu0 %v1082
        %1284 = vmatprep.subr.mxu0 %v1081
        %1285 = vmatpush1.msra.mxu0 %v1080
        %1286 = vmatprep.subr.mxu0 %v1079
        %1287 = vmatpush1.msra.mxu0 %v1078
        %1288 = vmatprep.subr.mxu0 %v1077
        %1289 = vmatpush1.msra.mxu0 %v1076
        %1290 = vmatprep.subr.mxu0 0.0
        %1291 = vmatpush2.msra.mxu0 0.0
        %1292 = vmatprep.subr.mxu0 0.0
        %1293 = vmatpush2.msra.mxu0 0.0
        %1294 = vmatprep.subr.mxu0 0.0
        %1295 = vmatpush2.msra.mxu0 0.0
        %1296 = vmatprep.subr.mxu0 0.0
        %1297 = vmatpush2.msra.mxu0 0.0
        %1298 = vmatprep.subr.mxu0 0.0
        %1299 = vmatpush2.msra.mxu0 0.0
        %1300 = vmatprep.subr.mxu0 0.0
        %1301 = vmatpush2.msra.mxu0 0.0
        %1302 = vmatprep.subr.mxu0 0.0
        %1303 = vmatpush2.msra.mxu0 0.0
        %1304 = vmatprep.subr.mxu0 0.0
        %1305 = vmatpush2.msra.mxu0 0.0
        %1306 = vmatprep.subr.mxu0 0.0
        %1307 = vmatpush2.msra.mxu0 0.0
        %1308 = vmatprep.subr.mxu0 0.0
        %1309 = vmatpush2.msra.mxu0 0.0
        %1310 = vmatprep.subr.mxu0 0.0
        %1311 = vmatpush2.msra.mxu0 0.0
        %1312 = vmatprep.subr.mxu0 0.0
        %1313 = vmatpush2.msra.mxu0 0.0
        %1314 = vmatprep.subr.mxu0 0.0
        %1315 = vmatpush2.msra.mxu0 0.0
        %1316 = vmatprep.subr.mxu0 0.0
        %1317 = vmatpush2.msra.mxu0 0.0
        %1318 = vmatprep.subr.mxu0 0.0
        %1319 = vmatpush2.msra.mxu0 0.0
        %1320 = vmatprep.subr.mxu0 0.0
        %1321 = vmatpush2.msra.mxu0 0.0
        %1322 = vmatprep.mubr.f32.mxu0 0.0
        %1323 = vmatmul.mubr.f32.gmra.mxu0 %v1089
        %v1324 = vpop.f32.mrf.mxu0
        %v1325 = vadd.f32 %v1251, %v1324
        %v1326 = vpop.f32.mrf.mxu0
        %v1327 = vadd.f32 %v1257, %v1326
        %1328 = vmatprep.mubr.f32.mxu0 0.0
        %1329 = vmatmul.mubr.f32.gmra.mxu0 %v1092
        %v1330 = vpop.f32.mrf.mxu0
        %v1331 = vadd.f32 %v1251, %v1330
        %v1332 = vpop.f32.mrf.mxu0
        %v1333 = vadd.f32 %v1257, %v1332
        %1334 = vmatprep.mubr.f32.mxu0 0.0
        %1335 = vmatmul.mubr.f32.gmra.mxu0 %v1095
        %v1336 = vpop.f32.mrf.mxu0
        %v1337 = vadd.f32 %v1251, %v1336
        %v1338 = vpop.f32.mrf.mxu0
        %v1339 = vadd.f32 %v1257, %v1338
        %1340 = vmatprep.mubr.f32.mxu0 0.0
        %1341 = vmatmul.mubr.f32.gmra.mxu0 %v1098
        %v1342 = vpop.f32.mrf.mxu0
        %v1343 = vadd.f32 %v1251, %v1342
        %v1344 = vpop.f32.mrf.mxu0
        %v1345 = vadd.f32 %v1257, %v1344
        %1346 = vdwg.mxu0
        %vm1347 = vcmp.gt.f32.partialorder %v1325, 0.0
        %vm1348 = vcmp.gt.f32.partialorder %v1327, 0.0
        %vm1349 = vcmp.gt.f32.partialorder %v1331, 0.0
        %vm1350 = vcmp.gt.f32.partialorder %v1333, 0.0
        %vm1351 = vcmp.gt.f32.partialorder %v1337, 0.0
        %vm1352 = vcmp.gt.f32.partialorder %v1339, 0.0
        %vm1353 = vcmp.gt.f32.partialorder %v1343, 0.0
        %vm1354 = vcmp.gt.f32.partialorder %v1345, 0.0
        %v1355 = vmul.f32 %v1325, 0.2
        %v1356 = vmul.f32 %v1327, 0.2
        %v1357 = vmul.f32 %v1331, 0.2
        %v1358 = vmul.f32 %v1333, 0.2
        %v1359 = vmul.f32 %v1337, 0.2
        %v1360 = vmul.f32 %v1339, 0.2
        %v1361 = vmul.f32 %v1343, 0.2
        %v1362 = vmul.f32 %v1345, 0.2
        %v1363 = vsel %vm1347, %v1325, %v1355
        %v1364 = vsel %vm1348, %v1327, %v1356
        %v1365 = vsel %vm1349, %v1331, %v1357
        %v1366 = vsel %vm1350, %v1333, %v1358
        %v1367 = vsel %vm1351, %v1337, %v1359
        %v1368 = vsel %vm1352, %v1339, %v1360
        %v1369 = vsel %vm1353, %v1343, %v1361
        %v1370 = vsel %vm1354, %v1345, %v1362
        %v1371 = vmax.f32 %v1363, %v1364
        %1372 = vmax.xlane.f32.xlu0 %v1371
        %v1373 = vpop.xlane.xlu0 %1372
        %v1374 = vmax.f32 %v1365, %v1366
        %1375 = vmax.xlane.f32.xlu0 %v1374
        %v1376 = vpop.xlane.xlu0 %1375
        %v1377 = vmax.f32 %v1367, %v1368
        %1378 = vmax.xlane.f32.xlu0 %v1377
        %v1379 = vpop.xlane.xlu0 %1378
        %v1380 = vmax.f32 %v1369, %v1370
        %1381 = vmax.xlane.f32.xlu0 %v1380
        %v1382 = vpop.xlane.xlu0 %1381
        %v1383 = vsub.f32 %v1363, %v1373
        %v1384 = vsub.f32 %v1364, %v1373
        %v1385 = vsub.f32 %v1365, %v1376
        %v1386 = vsub.f32 %v1366, %v1376
        %v1387 = vsub.f32 %v1367, %v1379
        %v1388 = vsub.f32 %v1368, %v1379
        %v1389 = vsub.f32 %v1369, %v1382
        %v1390 = vsub.f32 %v1370, %v1382
        %v1391 = vmul.f32 %v1383, 1.442695
        %v1392 = vpow.pop %v1391
        %v1393 = vmul.f32 %v1384, 1.442695
        %v1394 = vpow.pop %v1393
        %v1395 = vmul.f32 %v1385, 1.442695
        %v1396 = vpow.pop %v1395
        %v1397 = vmul.f32 %v1386, 1.442695
        %v1398 = vpow.pop %v1397
        %v1399 = vmul.f32 %v1387, 1.442695
        %v1400 = vpow.pop %v1399
        %v1401 = vmul.f32 %v1388, 1.442695
        %v1402 = vpow.pop %v1401
        %v1403 = vmul.f32 %v1389, 1.442695
        %v1404 = vpow.pop %v1403
        %v1405 = vmul.f32 %v1390, 1.442695
        %v1406 = vpow.pop %v1405
        %v1407 = vmul.f32 %v1392, %v953
        %v1408 = vmul.f32 %v1394, %v955
        %v1409 = vmul.f32 %v1396, %v959
        %v1410 = vmul.f32 %v1398, %v961
        %v1411 = vmul.f32 %v1400, %v965
        %v1412 = vmul.f32 %v1402, %v967
        %v1413 = vmul.f32 %v1404, %v971
        %v1414 = vmul.f32 %v1406, %v973
        %v1416 = vsel %vm873, %v663, 0
        %v1419 = vsel %vm873, %v664, 0
        %v1422 = vsel %vm873, %v665, 0
        %v1425 = vsel %vm873, %v666, 0
        %v1428 = vsel %vm873, %v667, 0
        %v1431 = vsel %vm873, %v668, 0
        %v1434 = vsel %vm873, %v669, 0
        %v1437 = vsel %vm873, %v670, 0
        %v1440 = vsel %vm873, %v671, 0
        %v1443 = vsel %vm873, %v672, 0
        %v1446 = vsel %vm873, %v673, 0
        %v1449 = vsel %vm873, %v674, 0
        %v1452 = vsel %vm873, %v675, 0
        %v1455 = vsel %vm873, %v676, 0
        %v1458 = vsel %vm873, %v677, 0
        %v1461 = vsel %vm873, %v678, 0
        %v1464 = vsel %vm873, %v679, 0
        %v1467 = vsel %vm873, %v680, 0
        %v1470 = vsel %vm873, %v681, 0
        %v1473 = vsel %vm873, %v682, 0
        %v1476 = vsel %vm873, %v683, 0
        %v1479 = vsel %vm873, %v684, 0
        %v1482 = vsel %vm873, %v685, 0
        %v1485 = vsel %vm873, %v686, 0
        %v1488 = vsel %vm873, %v687, 0
        %v1491 = vsel %vm873, %v688, 0
        %v1494 = vsel %vm873, %v689, 0
        %v1497 = vsel %vm873, %v690, 0
        %v1500 = vsel %vm873, %v691, 0
        %v1503 = vsel %vm873, %v692, 0
        %v1506 = vsel %vm873, %v693, 0
        %v1509 = vsel %vm873, %v694, 0
        %1511 = vmatprep.subr.mxu0 0.0
        %1512 = vmatpush1.msra.mxu0 0.0
        %1513 = vmatprep.subr.mxu0 0.0
        %1514 = vmatpush1.msra.mxu0 0.0
        %1515 = vmatprep.subr.mxu0 0.0
        %1516 = vmatpush1.msra.mxu0 0.0
        %1517 = vmatprep.subr.mxu0 0.0
        %1518 = vmatpush1.msra.mxu0 0.0
        %1519 = vmatprep.subr.mxu0 0.0
        %1520 = vmatpush1.msra.mxu0 0.0
        %1521 = vmatprep.subr.mxu0 0.0
        %1522 = vmatpush1.msra.mxu0 0.0
        %1523 = vmatprep.subr.mxu0 0.0
        %1524 = vmatpush1.msra.mxu0 0.0
        %1525 = vmatprep.subr.mxu0 0.0
        %1526 = vmatpush1.msra.mxu0 0.0
        %1527 = vmatprep.subr.mxu0 0.0
        %1528 = vmatpush1.msra.mxu0 0.0
        %1529 = vmatprep.subr.mxu0 0.0
        %1530 = vmatpush1.msra.mxu0 0.0
        %1531 = vmatprep.subr.mxu0 0.0
        %1532 = vmatpush1.msra.mxu0 0.0
        %1533 = vmatprep.subr.mxu0 0.0
        %1534 = vmatpush1.msra.mxu0 0.0
        %1535 = vmatprep.subr.mxu0 0.0
        %1536 = vmatpush1.msra.mxu0 %v1073
        %1537 = vmatprep.subr.mxu0 0.0
        %1538 = vmatpush1.msra.mxu0 %v1068
        %1539 = vmatprep.subr.mxu0 0.0
        %1540 = vmatpush1.msra.mxu0 %v1063
        %1541 = vmatprep.subr.mxu0 0.0
        %1542 = vmatpush1.msra.mxu0 %v1058
        %1543 = vmatprep.subr.mxu0 0.0
        %1544 = vmatpush2.msra.mxu0 0.0
        %1545 = vmatprep.subr.mxu0 0.0
        %1546 = vmatpush2.msra.mxu0 0.0
        %1547 = vmatprep.subr.mxu0 0.0
        %1548 = vmatpush2.msra.mxu0 0.0
        %1549 = vmatprep.subr.mxu0 0.0
        %1550 = vmatpush2.msra.mxu0 0.0
        %1551 = vmatprep.subr.mxu0 0.0
        %1552 = vmatpush2.msra.mxu0 0.0
        %1553 = vmatprep.subr.mxu0 0.0
        %1554 = vmatpush2.msra.mxu0 0.0
        %1555 = vmatprep.subr.mxu0 0.0
        %1556 = vmatpush2.msra.mxu0 0.0
        %1557 = vmatprep.subr.mxu0 0.0
        %1558 = vmatpush2.msra.mxu0 0.0
        %1559 = vmatprep.subr.mxu0 0.0
        %1560 = vmatpush2.msra.mxu0 0.0
        %1561 = vmatprep.subr.mxu0 0.0
        %1562 = vmatpush2.msra.mxu0 0.0
        %1563 = vmatprep.subr.mxu0 0.0
        %1564 = vmatpush2.msra.mxu0 0.0
        %1565 = vmatprep.subr.mxu0 0.0
        %1566 = vmatpush2.msra.mxu0 0.0
        %1567 = vmatprep.subr.mxu0 0.0
        %1568 = vmatpush2.msra.mxu0 0.0
        %1569 = vmatprep.subr.mxu0 0.0
        %1570 = vmatpush2.msra.mxu0 0.0
        %1571 = vmatprep.subr.mxu0 0.0
        %1572 = vmatpush2.msra.mxu0 0.0
        %1573 = vmatprep.subr.mxu0 0.0
        %1574 = vmatpush2.msra.mxu0 0.0
        %1575 = vmatprep.mubr.f32.mxu0 0.0
        %1576 = vmatmul.mubr.f32.gmra.mxu0 %v1416
        %v1577 = vpop.f32.mrf.mxu0
        %v1578 = vadd.f32 0.0, %v1577
        %v1579 = vpop.f32.mrf.mxu0
        %1580 = vmatprep.mubr.f32.mxu0 0.0
        %1581 = vmatmul.mubr.f32.gmra.mxu0 %v1419
        %v1582 = vpop.f32.mrf.mxu0
        %v1583 = vadd.f32 0.0, %v1582
        %v1584 = vpop.f32.mrf.mxu0
        %1585 = vmatprep.mubr.f32.mxu0 0.0
        %1586 = vmatmul.mubr.f32.gmra.mxu0 %v1422
        %v1587 = vpop.f32.mrf.mxu0
        %v1588 = vadd.f32 0.0, %v1587
        %v1589 = vpop.f32.mrf.mxu0
        %1590 = vmatprep.mubr.f32.mxu0 0.0
        %1591 = vmatmul.mubr.f32.gmra.mxu0 %v1425
        %v1592 = vpop.f32.mrf.mxu0
        %v1593 = vadd.f32 0.0, %v1592
        %v1594 = vpop.f32.mrf.mxu0
        %1595 = vmatprep.mubr.f32.mxu0 0.0
        %1596 = vmatmul.mubr.f32.gmra.mxu0 %v1428
        %v1597 = vpop.f32.mrf.mxu0
        %v1598 = vadd.f32 0.0, %v1597
        %v1599 = vpop.f32.mrf.mxu0
        %1600 = vmatprep.mubr.f32.mxu0 0.0
        %1601 = vmatmul.mubr.f32.gmra.mxu0 %v1431
        %v1602 = vpop.f32.mrf.mxu0
        %v1603 = vadd.f32 0.0, %v1602
        %v1604 = vpop.f32.mrf.mxu0
        %1605 = vmatprep.mubr.f32.mxu0 0.0
        %1606 = vmatmul.mubr.f32.gmra.mxu0 %v1434
        %v1607 = vpop.f32.mrf.mxu0
        %v1608 = vadd.f32 0.0, %v1607
        %v1609 = vpop.f32.mrf.mxu0
        %1610 = vmatprep.mubr.f32.mxu0 0.0
        %1611 = vmatmul.mubr.f32.gmra.mxu0 %v1437
        %v1612 = vpop.f32.mrf.mxu0
        %v1613 = vadd.f32 0.0, %v1612
        %v1614 = vpop.f32.mrf.mxu0
        %1615 = vmatprep.mubr.f32.mxu0 0.0
        %1616 = vmatmul.mubr.f32.gmra.mxu0 %v1440
        %v1617 = vpop.f32.mrf.mxu0
        %v1618 = vadd.f32 0.0, %v1617
        %v1619 = vpop.f32.mrf.mxu0
        %1620 = vmatprep.mubr.f32.mxu0 0.0
        %1621 = vmatmul.mubr.f32.gmra.mxu0 %v1443
        %v1622 = vpop.f32.mrf.mxu0
        %v1623 = vadd.f32 0.0, %v1622
        %v1624 = vpop.f32.mrf.mxu0
        %1625 = vmatprep.mubr.f32.mxu0 0.0
        %1626 = vmatmul.mubr.f32.gmra.mxu0 %v1446
        %v1627 = vpop.f32.mrf.mxu0
        %v1628 = vadd.f32 0.0, %v1627
        %v1629 = vpop.f32.mrf.mxu0
        %1630 = vmatprep.mubr.f32.mxu0 0.0
        %1631 = vmatmul.mubr.f32.gmra.mxu0 %v1449
        %v1632 = vpop.f32.mrf.mxu0
        %v1633 = vadd.f32 0.0, %v1632
        %v1634 = vpop.f32.mrf.mxu0
        %1635 = vmatprep.mubr.f32.mxu0 0.0
        %1636 = vmatmul.mubr.f32.gmra.mxu0 %v1452
        %v1637 = vpop.f32.mrf.mxu0
        %v1638 = vadd.f32 0.0, %v1637
        %v1639 = vpop.f32.mrf.mxu0
        %1640 = vmatprep.mubr.f32.mxu0 0.0
        %1641 = vmatmul.mubr.f32.gmra.mxu0 %v1455
        %v1642 = vpop.f32.mrf.mxu0
        %v1643 = vadd.f32 0.0, %v1642
        %v1644 = vpop.f32.mrf.mxu0
        %1645 = vmatprep.mubr.f32.mxu0 0.0
        %1646 = vmatmul.mubr.f32.gmra.mxu0 %v1458
        %v1647 = vpop.f32.mrf.mxu0
        %v1648 = vadd.f32 0.0, %v1647
        %v1649 = vpop.f32.mrf.mxu0
        %1650 = vmatprep.mubr.f32.mxu0 0.0
        %1651 = vmatmul.mubr.f32.gmra.mxu0 %v1461
        %v1652 = vpop.f32.mrf.mxu0
        %v1653 = vadd.f32 0.0, %v1652
        %v1654 = vpop.f32.mrf.mxu0
        %1655 = vmatprep.mubr.f32.mxu0 0.0
        %1656 = vmatmul.mubr.f32.gmra.mxu0 %v1464
        %v1657 = vpop.f32.mrf.mxu0
        %v1658 = vadd.f32 0.0, %v1657
        %v1659 = vpop.f32.mrf.mxu0
        %1660 = vmatprep.mubr.f32.mxu0 0.0
        %1661 = vmatmul.mubr.f32.gmra.mxu0 %v1467
        %v1662 = vpop.f32.mrf.mxu0
        %v1663 = vadd.f32 0.0, %v1662
        %v1664 = vpop.f32.mrf.mxu0
        %1665 = vmatprep.mubr.f32.mxu0 0.0
        %1666 = vmatmul.mubr.f32.gmra.mxu0 %v1470
        %v1667 = vpop.f32.mrf.mxu0
        %v1668 = vadd.f32 0.0, %v1667
        %v1669 = vpop.f32.mrf.mxu0
        %1670 = vmatprep.mubr.f32.mxu0 0.0
        %1671 = vmatmul.mubr.f32.gmra.mxu0 %v1473
        %v1672 = vpop.f32.mrf.mxu0
        %v1673 = vadd.f32 0.0, %v1672
        %v1674 = vpop.f32.mrf.mxu0
        %1675 = vmatprep.mubr.f32.mxu0 0.0
        %1676 = vmatmul.mubr.f32.gmra.mxu0 %v1476
        %v1677 = vpop.f32.mrf.mxu0
        %v1678 = vadd.f32 0.0, %v1677
        %v1679 = vpop.f32.mrf.mxu0
        %1680 = vmatprep.mubr.f32.mxu0 0.0
        %1681 = vmatmul.mubr.f32.gmra.mxu0 %v1479
        %v1682 = vpop.f32.mrf.mxu0
        %v1683 = vadd.f32 0.0, %v1682
        %v1684 = vpop.f32.mrf.mxu0
        %1685 = vmatprep.mubr.f32.mxu0 0.0
        %1686 = vmatmul.mubr.f32.gmra.mxu0 %v1482
        %v1687 = vpop.f32.mrf.mxu0
        %v1688 = vadd.f32 0.0, %v1687
        %v1689 = vpop.f32.mrf.mxu0
        %1690 = vmatprep.mubr.f32.mxu0 0.0
        %1691 = vmatmul.mubr.f32.gmra.mxu0 %v1485
        %v1692 = vpop.f32.mrf.mxu0
        %v1693 = vadd.f32 0.0, %v1692
        %v1694 = vpop.f32.mrf.mxu0
        %1695 = vmatprep.mubr.f32.mxu0 0.0
        %1696 = vmatmul.mubr.f32.gmra.mxu0 %v1488
        %v1697 = vpop.f32.mrf.mxu0
        %v1698 = vadd.f32 0.0, %v1697
        %v1699 = vpop.f32.mrf.mxu0
        %1700 = vmatprep.mubr.f32.mxu0 0.0
        %1701 = vmatmul.mubr.f32.gmra.mxu0 %v1491
        %v1702 = vpop.f32.mrf.mxu0
        %v1703 = vadd.f32 0.0, %v1702
        %v1704 = vpop.f32.mrf.mxu0
        %1705 = vmatprep.mubr.f32.mxu0 0.0
        %1706 = vmatmul.mubr.f32.gmra.mxu0 %v1494
        %v1707 = vpop.f32.mrf.mxu0
        %v1708 = vadd.f32 0.0, %v1707
        %v1709 = vpop.f32.mrf.mxu0
        %1710 = vmatprep.mubr.f32.mxu0 0.0
        %1711 = vmatmul.mubr.f32.gmra.mxu0 %v1497
        %v1712 = vpop.f32.mrf.mxu0
        %v1713 = vadd.f32 0.0, %v1712
        %v1714 = vpop.f32.mrf.mxu0
        %1715 = vmatprep.mubr.f32.mxu0 0.0
        %1716 = vmatmul.mubr.f32.gmra.mxu0 %v1500
        %v1717 = vpop.f32.mrf.mxu0
        %v1718 = vadd.f32 0.0, %v1717
        %v1719 = vpop.f32.mrf.mxu0
        %1720 = vmatprep.mubr.f32.mxu0 0.0
        %1721 = vmatmul.mubr.f32.gmra.mxu0 %v1503
        %v1722 = vpop.f32.mrf.mxu0
        %v1723 = vadd.f32 0.0, %v1722
        %v1724 = vpop.f32.mrf.mxu0
        %1725 = vmatprep.mubr.f32.mxu0 0.0
        %1726 = vmatmul.mubr.f32.gmra.mxu0 %v1506
        %v1727 = vpop.f32.mrf.mxu0
        %v1728 = vadd.f32 0.0, %v1727
        %v1729 = vpop.f32.mrf.mxu0
        %1730 = vmatprep.mubr.f32.mxu0 0.0
        %1731 = vmatmul.mubr.f32.gmra.mxu0 %v1509
        %v1732 = vpop.f32.mrf.mxu0
        %v1733 = vadd.f32 0.0, %v1732
        %v1734 = vpop.f32.mrf.mxu0
        %1735 = vdwg.mxu0
        %v1736 = vmul.f32 %v1578, %v697
        %v1737 = vmul.f32 %v1583, %v698
        %v1738 = vmul.f32 %v1588, %v699
        %v1739 = vmul.f32 %v1593, %v700
        %v1740 = vmul.f32 %v1598, %v701
        %v1741 = vmul.f32 %v1603, %v702
        %v1742 = vmul.f32 %v1608, %v703
        %v1743 = vmul.f32 %v1613, %v704
        %v1744 = vmul.f32 %v1618, %v705
        %v1745 = vmul.f32 %v1623, %v706
        %v1746 = vmul.f32 %v1628, %v707
        %v1747 = vmul.f32 %v1633, %v708
        %v1748 = vmul.f32 %v1638, %v709
        %v1749 = vmul.f32 %v1643, %v710
        %v1750 = vmul.f32 %v1648, %v711
        %v1751 = vmul.f32 %v1653, %v712
        %v1752 = vmul.f32 %v1658, %v713
        %v1753 = vmul.f32 %v1663, %v714
        %v1754 = vmul.f32 %v1668, %v715
        %v1755 = vmul.f32 %v1673, %v716
        %v1756 = vmul.f32 %v1678, %v717
        %v1757 = vmul.f32 %v1683, %v718
        %v1758 = vmul.f32 %v1688, %v719
        %v1759 = vmul.f32 %v1693, %v720
        %v1760 = vmul.f32 %v1698, %v721
        %v1761 = vmul.f32 %v1703, %v722
        %v1762 = vmul.f32 %v1708, %v723
        %v1763 = vmul.f32 %v1713, %v724
        %v1764 = vmul.f32 %v1718, %v725
        %v1765 = vmul.f32 %v1723, %v726
        %v1766 = vmul.f32 %v1728, %v727
        %v1767 = vmul.f32 %v1733, %v728
        %1768 = vmatprep.subr.mxu0 0.0
        %1769 = vmatpush1.msra.mxu0 %v1751
        %1770 = vmatprep.subr.mxu0 0.0
        %1771 = vmatpush1.msra.mxu0 %v1750
        %1772 = vmatprep.subr.mxu0 0.0
        %1773 = vmatpush1.msra.mxu0 %v1749
        %1774 = vmatprep.subr.mxu0 0.0
        %1775 = vmatpush1.msra.mxu0 %v1748
        %1776 = vmatprep.subr.mxu0 0.0
        %1777 = vmatpush1.msra.mxu0 %v1747
        %1778 = vmatprep.subr.mxu0 0.0
        %1779 = vmatpush1.msra.mxu0 %v1746
        %1780 = vmatprep.subr.mxu0 0.0
        %1781 = vmatpush1.msra.mxu0 %v1745
        %1782 = vmatprep.subr.mxu0 0.0
        %1783 = vmatpush1.msra.mxu0 %v1744
        %1784 = vmatprep.subr.mxu0 0.0
        %1785 = vmatpush1.msra.mxu0 %v1743
        %1786 = vmatprep.subr.mxu0 0.0
        %1787 = vmatpush1.msra.mxu0 %v1742
        %1788 = vmatprep.subr.mxu0 0.0
        %1789 = vmatpush1.msra.mxu0 %v1741
        %1790 = vmatprep.subr.mxu0 0.0
        %1791 = vmatpush1.msra.mxu0 %v1740
        %1792 = vmatprep.subr.mxu0 0.0
        %1793 = vmatpush1.msra.mxu0 %v1739
        %1794 = vmatprep.subr.mxu0 0.0
        %1795 = vmatpush1.msra.mxu0 %v1738
        %1796 = vmatprep.subr.mxu0 0.0
        %1797 = vmatpush1.msra.mxu0 %v1737
        %1798 = vmatprep.subr.mxu0 0.0
        %1799 = vmatpush1.msra.mxu0 %v1736
        %1800 = vmatprep.subr.mxu0 0.0
        %1801 = vmatpush2.msra.mxu0 %v1767
        %1802 = vmatprep.subr.mxu0 0.0
        %1803 = vmatpush2.msra.mxu0 %v1766
        %1804 = vmatprep.subr.mxu0 0.0
        %1805 = vmatpush2.msra.mxu0 %v1765
        %1806 = vmatprep.subr.mxu0 0.0
        %1807 = vmatpush2.msra.mxu0 %v1764
        %1808 = vmatprep.subr.mxu0 0.0
        %1809 = vmatpush2.msra.mxu0 %v1763
        %1810 = vmatprep.subr.mxu0 0.0
        %1811 = vmatpush2.msra.mxu0 %v1762
        %1812 = vmatprep.subr.mxu0 0.0
        %1813 = vmatpush2.msra.mxu0 %v1761
        %1814 = vmatprep.subr.mxu0 0.0
        %1815 = vmatpush2.msra.mxu0 %v1760
        %1816 = vmatprep.subr.mxu0 0.0
        %1817 = vmatpush2.msra.mxu0 %v1759
        %1818 = vmatprep.subr.mxu0 0.0
        %1819 = vmatpush2.msra.mxu0 %v1758
        %1820 = vmatprep.subr.mxu0 0.0
        %1821 = vmatpush2.msra.mxu0 %v1757
        %1822 = vmatprep.subr.mxu0 0.0
        %1823 = vmatpush2.msra.mxu0 %v1756
        %1824 = vmatprep.subr.mxu0 0.0
        %1825 = vmatpush2.msra.mxu0 %v1755
        %1826 = vmatprep.subr.mxu0 0.0
        %1827 = vmatpush2.msra.mxu0 %v1754
        %1828 = vmatprep.subr.mxu0 0.0
        %1829 = vmatpush2.msra.mxu0 %v1753
        %1830 = vmatprep.subr.mxu0 0.0
        %1831 = vmatpush2.msra.mxu0 %v1752
        %1832 = vmatprep.mubr.f32.mxu0 %v1408
        %1833 = vmatmul.mubr.f32.gmra.mxu0 %v1407
        %v1834 = vpop.f32.mrf.mxu0
        %v1835 = vadd.f32 0.0, %v1834
        %v1836 = vpop.f32.mrf.mxu0
        %1837 = vmatprep.mubr.f32.mxu0 %v1410
        %1838 = vmatmul.mubr.f32.gmra.mxu0 %v1409
        %v1839 = vpop.f32.mrf.mxu0
        %v1840 = vadd.f32 0.0, %v1839
        %v1841 = vpop.f32.mrf.mxu0
        %1842 = vmatprep.mubr.f32.mxu0 %v1412
        %1843 = vmatmul.mubr.f32.gmra.mxu0 %v1411
        %v1844 = vpop.f32.mrf.mxu0
        %v1845 = vadd.f32 0.0, %v1844
        %v1846 = vpop.f32.mrf.mxu0
        %1847 = vmatprep.mubr.f32.mxu0 %v1414
        %1848 = vmatmul.mubr.f32.gmra.mxu0 %v1413
        %v1849 = vpop.f32.mrf.mxu0
        %v1850 = vadd.f32 0.0, %v1849
        %v1851 = vpop.f32.mrf.mxu0
        %1852 = vdwg.mxu0
        %1853 = vmatprep.subr.mxu0 0.0
        %1854 = vmatpush1.msra.mxu0 %v744
        %1855 = vmatprep.subr.mxu0 0.0
        %1856 = vmatpush1.msra.mxu0 %v743
        %1857 = vmatprep.subr.mxu0 0.0
        %1858 = vmatpush1.msra.mxu0 %v742
        %1859 = vmatprep.subr.mxu0 0.0
        %1860 = vmatpush1.msra.mxu0 %v741
        %1861 = vmatprep.subr.mxu0 0.0
        %1862 = vmatpush1.msra.mxu0 %v740
        %1863 = vmatprep.subr.mxu0 0.0
        %1864 = vmatpush1.msra.mxu0 %v739
        %1865 = vmatprep.subr.mxu0 0.0
        %1866 = vmatpush1.msra.mxu0 %v738
        %1867 = vmatprep.subr.mxu0 0.0
        %1868 = vmatpush1.msra.mxu0 %v737
        %1869 = vmatprep.subr.mxu0 0.0
        %1870 = vmatpush1.msra.mxu0 %v736
        %1871 = vmatprep.subr.mxu0 0.0
        %1872 = vmatpush1.msra.mxu0 %v735
        %1873 = vmatprep.subr.mxu0 0.0
        %1874 = vmatpush1.msra.mxu0 %v734
        %1875 = vmatprep.subr.mxu0 0.0
        %1876 = vmatpush1.msra.mxu0 %v733
        %1877 = vmatprep.subr.mxu0 0.0
        %1878 = vmatpush1.msra.mxu0 %v732
        %1879 = vmatprep.subr.mxu0 0.0
        %1880 = vmatpush1.msra.mxu0 %v731
        %1881 = vmatprep.subr.mxu0 0.0
        %1882 = vmatpush1.msra.mxu0 %v730
        %1883 = vmatprep.subr.mxu0 0.0
        %1884 = vmatpush1.msra.mxu0 %v729
        %1885 = vmatprep.subr.mxu0 0.0
        %1886 = vmatpush2.msra.mxu0 %v760
        %1887 = vmatprep.subr.mxu0 0.0
        %1888 = vmatpush2.msra.mxu0 %v759
        %1889 = vmatprep.subr.mxu0 0.0
        %1890 = vmatpush2.msra.mxu0 %v758
        %1891 = vmatprep.subr.mxu0 0.0
        %1892 = vmatpush2.msra.mxu0 %v757
        %1893 = vmatprep.subr.mxu0 0.0
        %1894 = vmatpush2.msra.mxu0 %v756
        %1895 = vmatprep.subr.mxu0 0.0
        %1896 = vmatpush2.msra.mxu0 %v755
        %1897 = vmatprep.subr.mxu0 0.0
        %1898 = vmatpush2.msra.mxu0 %v754
        %1899 = vmatprep.subr.mxu0 0.0
        %1900 = vmatpush2.msra.mxu0 %v753
        %1901 = vmatprep.subr.mxu0 0.0
        %1902 = vmatpush2.msra.mxu0 %v752
        %1903 = vmatprep.subr.mxu0 0.0
        %1904 = vmatpush2.msra.mxu0 %v751
        %1905 = vmatprep.subr.mxu0 0.0
        %1906 = vmatpush2.msra.mxu0 %v750
        %1907 = vmatprep.subr.mxu0 0.0
        %1908 = vmatpush2.msra.mxu0 %v749
        %1909 = vmatprep.subr.mxu0 0.0
        %1910 = vmatpush2.msra.mxu0 %v748
        %1911 = vmatprep.subr.mxu0 0.0
        %1912 = vmatpush2.msra.mxu0 %v747
        %1913 = vmatprep.subr.mxu0 0.0
        %1914 = vmatpush2.msra.mxu0 %v746
        %1915 = vmatprep.subr.mxu0 0.0
        %1916 = vmatpush2.msra.mxu0 %v745
        %1917 = vmatprep.mubr.f32.mxu0 %v1408
        %1918 = vmatmul.mubr.f32.gmra.mxu0 %v1407
        %v1919 = vpop.f32.mrf.mxu0
        %v1920 = vadd.f32 0.0, %v1919
        %v1921 = vpop.f32.mrf.mxu0
        %1922 = vmatprep.mubr.f32.mxu0 %v1410
        %1923 = vmatmul.mubr.f32.gmra.mxu0 %v1409
        %v1924 = vpop.f32.mrf.mxu0
        %v1925 = vadd.f32 0.0, %v1924
        %v1926 = vpop.f32.mrf.mxu0
        %1927 = vmatprep.mubr.f32.mxu0 %v1412
        %1928 = vmatmul.mubr.f32.gmra.mxu0 %v1411
        %v1929 = vpop.f32.mrf.mxu0
        %v1930 = vadd.f32 0.0, %v1929
        %v1931 = vpop.f32.mrf.mxu0
        %1932 = vmatprep.mubr.f32.mxu0 %v1414
        %1933 = vmatmul.mubr.f32.gmra.mxu0 %v1413
        %v1934 = vpop.f32.mrf.mxu0
        %v1935 = vadd.f32 0.0, %v1934
        %v1936 = vpop.f32.mrf.mxu0
        %1937 = vdwg.mxu0
        %v1938 = vrcp.pop %v1920
        %v1939 = vrcp.pop %v1925
        %v1940 = vrcp.pop %v1930
        %v1941 = vrcp.pop %v1935
        %vm1942 = vcmask 64512
        %v1944 = vsel %vm1942, %v1938, 0
        %v1947 = vsel %vm1942, %v1939, 0
        %v1950 = vsel %vm1942, %v1940, 0
        %v1953 = vsel %vm1942, %v1941, 0
        %1955 = vmatprep.subr.mxu0 0.0
        %1956 = vmatpush1.msra.mxu0 0.0
        %1957 = vmatprep.subr.mxu0 0.0
        %1958 = vmatpush1.msra.mxu0 0.0
        %1959 = vmatprep.subr.mxu0 0.0
        %1960 = vmatpush1.msra.mxu0 0.0
        %1961 = vmatprep.subr.mxu0 0.0
        %1962 = vmatpush1.msra.mxu0 0.0
        %1963 = vmatprep.subr.mxu0 0.0
        %1964 = vmatpush1.msra.mxu0 0.0
        %1965 = vmatprep.subr.mxu0 0.0
        %1966 = vmatpush1.msra.mxu0 0.0
        %1967 = vmatprep.subr.mxu0 0.0
        %1968 = vmatpush1.msra.mxu0 0.0
        %1969 = vmatprep.subr.mxu0 0.0
        %1970 = vmatpush1.msra.mxu0 0.0
        %1971 = vmatprep.subr.mxu0 0.0
        %1972 = vmatpush1.msra.mxu0 0.0
        %1973 = vmatprep.subr.mxu0 0.0
        %1974 = vmatpush1.msra.mxu0 0.0
        %1975 = vmatprep.subr.mxu0 0.0
        %1976 = vmatpush1.msra.mxu0 0.0
        %1977 = vmatprep.subr.mxu0 0.0
        %1978 = vmatpush1.msra.mxu0 0.0
        %1979 = vmatprep.subr.mxu0 0.0
        %1980 = vmatpush1.msra.mxu0 0.0
        %1981 = vmatprep.subr.mxu0 0.0
        %1982 = vmatpush1.msra.mxu0 0.0
        %1983 = vmatprep.subr.mxu0 0.0
        %1984 = vmatpush1.msra.mxu0 0.0
        %1985 = vmatprep.subr.mxu0 0.0
        %1986 = vmatpush1.msra.mxu0 %v761
        %1987 = vmatprep.subr.mxu0 0.0
        %1988 = vmatpush2.msra.mxu0 0.0
        %1989 = vmatprep.subr.mxu0 0.0
        %1990 = vmatpush2.msra.mxu0 0.0
        %1991 = vmatprep.subr.mxu0 0.0
        %1992 = vmatpush2.msra.mxu0 0.0
        %1993 = vmatprep.subr.mxu0 0.0
        %1994 = vmatpush2.msra.mxu0 0.0
        %1995 = vmatprep.subr.mxu0 0.0
        %1996 = vmatpush2.msra.mxu0 0.0
        %1997 = vmatprep.subr.mxu0 0.0
        %1998 = vmatpush2.msra.mxu0 0.0
        %1999 = vmatprep.subr.mxu0 0.0
        %2000 = vmatpush2.msra.mxu0 0.0
        %2001 = vmatprep.subr.mxu0 0.0
        %2002 = vmatpush2.msra.mxu0 0.0
        %2003 = vmatprep.subr.mxu0 0.0
        %2004 = vmatpush2.msra.mxu0 0.0
        %2005 = vmatprep.subr.mxu0 0.0
        %2006 = vmatpush2.msra.mxu0 0.0
        %2007 = vmatprep.subr.mxu0 0.0
        %2008 = vmatpush2.msra.mxu0 0.0
        %2009 = vmatprep.subr.mxu0 0.0
        %2010 = vmatpush2.msra.mxu0 0.0
        %2011 = vmatprep.subr.mxu0 0.0
        %2012 = vmatpush2.msra.mxu0 0.0
        %2013 = vmatprep.subr.mxu0 0.0
        %2014 = vmatpush2.msra.mxu0 0.0
        %2015 = vmatprep.subr.mxu0 0.0
        %2016 = vmatpush2.msra.mxu0 0.0
        %2017 = vmatprep.subr.mxu0 0.0
        %2018 = vmatpush2.msra.mxu0 0.0
        %2019 = vmatprep.mubr.f32.mxu0 0.0
        %2020 = vmatmul.mubr.f32.gmra.mxu0 %v1944
        %v2021 = vpop.f32.mrf.mxu0
        %v2022 = vadd.f32 0.0, %v2021
        %v2023 = vpop.f32.mrf.mxu0
        %2024 = vmatprep.mubr.f32.mxu0 0.0
        %2025 = vmatmul.mubr.f32.gmra.mxu0 %v1947
        %v2026 = vpop.f32.mrf.mxu0
        %v2027 = vadd.f32 0.0, %v2026
        %v2028 = vpop.f32.mrf.mxu0
        %2029 = vmatprep.mubr.f32.mxu0 0.0
        %2030 = vmatmul.mubr.f32.gmra.mxu0 %v1950
        %v2031 = vpop.f32.mrf.mxu0
        %v2032 = vadd.f32 0.0, %v2031
        %v2033 = vpop.f32.mrf.mxu0
        %2034 = vmatprep.mubr.f32.mxu0 0.0
        %2035 = vmatmul.mubr.f32.gmra.mxu0 %v1953
        %v2036 = vpop.f32.mrf.mxu0
        %v2037 = vadd.f32 0.0, %v2036
        %v2038 = vpop.f32.mrf.mxu0
        %2039 = vdwg.mxu0
        %v2040 = vmul.f32 %v1835, %v2022
        %v2041 = vmul.f32 %v1840, %v2027
        %v2042 = vmul.f32 %v1845, %v2032
        %v2043 = vmul.f32 %v1850, %v2037
        %v2044 = vsel %vm873, %v2040, 0.0
        %2045 = vadd.xlane.f32.xlu0 %v2044
        %v2046 = vpop.xlane.xlu0 %2045
        %v2047 = vsel %vm873, %v2041, 0.0
        %2048 = vadd.xlane.f32.xlu0 %v2047
        %v2049 = vpop.xlane.xlu0 %2048
        %v2050 = vsel %vm873, %v2042, 0.0
        %2051 = vadd.xlane.f32.xlu0 %v2050
        %v2052 = vpop.xlane.xlu0 %2051
        %v2053 = vsel %vm873, %v2043, 0.0
        %2054 = vadd.xlane.f32.xlu0 %v2053
        %v2055 = vpop.xlane.xlu0 %2054
        %v2056 = vrcp.pop 32.0
        %v2057 = vmul.f32 %v2046, %v2056
        %v2058 = vmul.f32 %v2049, %v2056
        %v2059 = vmul.f32 %v2052, %v2056
        %v2060 = vmul.f32 %v2055, %v2056
        %v2061 = vsub.f32 %v2040, %v2057
        %v2062 = vsub.f32 %v2041, %v2058
        %v2063 = vsub.f32 %v2042, %v2059
        %v2064 = vsub.f32 %v2043, %v2060
        %v2065 = vmul.f32 %v2061, %v2061
        %v2066 = vmul.f32 %v2062, %v2062
        %v2067 = vmul.f32 %v2063, %v2063
        %v2068 = vmul.f32 %v2064, %v2064
        %v2069 = vsel %vm873, %v2065, 0.0
        %2070 = vadd.xlane.f32.xlu0 %v2069
        %v2071 = vpop.xlane.xlu0 %2070
        %v2072 = vsel %vm873, %v2066, 0.0
        %2073 = vadd.xlane.f32.xlu0 %v2072
        %v2074 = vpop.xlane.xlu0 %2073
        %v2075 = vsel %vm873, %v2067, 0.0
        %2076 = vadd.xlane.f32.xlu0 %v2075
        %v2077 = vpop.xlane.xlu0 %2076
        %v2078 = vsel %vm873, %v2068, 0.0
        %2079 = vadd.xlane.f32.xlu0 %v2078
        %v2080 = vpop.xlane.xlu0 %2079
        %v2081 = vmul.f32 %v2071, %v2056
        %v2082 = vmul.f32 %v2074, %v2056
        %v2083 = vmul.f32 %v2077, %v2056
        %v2084 = vmul.f32 %v2080, %v2056
        %v2085 = vadd.f32 %v2081, 1e-05
        %v2086 = vadd.f32 %v2082, 1e-05
        %v2087 = vadd.f32 %v2083, 1e-05
        %v2088 = vadd.f32 %v2084, 1e-05
        %v2089 = vrsqrt.pop %v2085
        %v2090 = vrsqrt.pop %v2086
        %v2091 = vrsqrt.pop %v2087
        %v2092 = vrsqrt.pop %v2088
        %v2093 = vmul.f32 %v2061, %v2089
        %v2094 = vmul.f32 %v2062, %v2090
        %v2095 = vmul.f32 %v2063, %v2091
        %v2096 = vmul.f32 %v2064, %v2092
        %v2097 = vmax.f32 %v2093, 0.0
        %v2098 = vmax.f32 %v2094, 0.0
        %v2099 = vmax.f32 %v2095, 0.0
        %v2100 = vmax.f32 %v2096, 0.0
        %v2101 = vld [vmem:[%s7] sm:$0xff]
        %v2102 = vld [vmem:[%s7 + $0x8] sm:$0xff]
        %v2103 = vld [vmem:[%s7 + $0x10] sm:$0xff]
        %v2104 = vld [vmem:[%s7 + $0x18] sm:$0xff]
        %v2106 = vsel %vm873, %v2097, 0
        %v2109 = vsel %vm873, %v2098, 0
        %v2112 = vsel %vm873, %v2099, 0
        %v2115 = vsel %vm873, %v2100, 0
        %2117 = vmatprep.subr.mxu0 0.0
        %2118 = vmatpush1.msra.mxu0 0.0
        %2119 = vmatprep.subr.mxu0 0.0
        %2120 = vmatpush1.msra.mxu0 0.0
        %2121 = vmatprep.subr.mxu0 0.0
        %2122 = vmatpush1.msra.mxu0 0.0
        %2123 = vmatprep.subr.mxu0 0.0
        %2124 = vmatpush1.msra.mxu0 0.0
        %2125 = vmatprep.subr.mxu0 0.0
        %2126 = vmatpush1.msra.mxu0 0.0
        %2127 = vmatprep.subr.mxu0 0.0
        %2128 = vmatpush1.msra.mxu0 0.0
        %2129 = vmatprep.subr.mxu0 0.0
        %2130 = vmatpush1.msra.mxu0 0.0
        %2131 = vmatprep.subr.mxu0 0.0
        %2132 = vmatpush1.msra.mxu0 0.0
        %2133 = vmatprep.subr.mxu0 0.0
        %2134 = vmatpush1.msra.mxu0 0.0
        %2135 = vmatprep.subr.mxu0 0.0
        %2136 = vmatpush1.msra.mxu0 0.0
        %2137 = vmatprep.subr.mxu0 0.0
        %2138 = vmatpush1.msra.mxu0 0.0
        %2139 = vmatprep.subr.mxu0 0.0
        %2140 = vmatpush1.msra.mxu0 0.0
        %2141 = vmatprep.subr.mxu0 0.0
        %2142 = vmatpush1.msra.mxu0 %v2104
        %2143 = vmatprep.subr.mxu0 0.0
        %2144 = vmatpush1.msra.mxu0 %v2103
        %2145 = vmatprep.subr.mxu0 0.0
        %2146 = vmatpush1.msra.mxu0 %v2102
        %2147 = vmatprep.subr.mxu0 0.0
        %2148 = vmatpush1.msra.mxu0 %v2101
        %2149 = vmatprep.subr.mxu0 0.0
        %2150 = vmatpush2.msra.mxu0 0.0
        %2151 = vmatprep.subr.mxu0 0.0
        %2152 = vmatpush2.msra.mxu0 0.0
        %2153 = vmatprep.subr.mxu0 0.0
        %2154 = vmatpush2.msra.mxu0 0.0
        %2155 = vmatprep.subr.mxu0 0.0
        %2156 = vmatpush2.msra.mxu0 0.0
        %2157 = vmatprep.subr.mxu0 0.0
        %2158 = vmatpush2.msra.mxu0 0.0
        %2159 = vmatprep.subr.mxu0 0.0
        %2160 = vmatpush2.msra.mxu0 0.0
        %2161 = vmatprep.subr.mxu0 0.0
        %2162 = vmatpush2.msra.mxu0 0.0
        %2163 = vmatprep.subr.mxu0 0.0
        %2164 = vmatpush2.msra.mxu0 0.0
        %2165 = vmatprep.subr.mxu0 0.0
        %2166 = vmatpush2.msra.mxu0 0.0
        %2167 = vmatprep.subr.mxu0 0.0
        %2168 = vmatpush2.msra.mxu0 0.0
        %2169 = vmatprep.subr.mxu0 0.0
        %2170 = vmatpush2.msra.mxu0 0.0
        %2171 = vmatprep.subr.mxu0 0.0
        %2172 = vmatpush2.msra.mxu0 0.0
        %2173 = vmatprep.subr.mxu0 0.0
        %2174 = vmatpush2.msra.mxu0 0.0
        %2175 = vmatprep.subr.mxu0 0.0
        %2176 = vmatpush2.msra.mxu0 0.0
        %2177 = vmatprep.subr.mxu0 0.0
        %2178 = vmatpush2.msra.mxu0 0.0
        %2179 = vmatprep.subr.mxu0 0.0
        %2180 = vmatpush2.msra.mxu0 0.0
        %2181 = vmatprep.mubr.f32.mxu0 0.0
        %2182 = vmatmul.mubr.f32.gmra.mxu0 %v2106
        %v2183 = vpop.f32.mrf.mxu0
        %v2184 = vadd.f32 0.0, %v2183
        %v2185 = vpop.f32.mrf.mxu0
        %2186 = vmatprep.mubr.f32.mxu0 0.0
        %2187 = vmatmul.mubr.f32.gmra.mxu0 %v2109
        %v2188 = vpop.f32.mrf.mxu0
        %v2189 = vadd.f32 0.0, %v2188
        %v2190 = vpop.f32.mrf.mxu0
        %2191 = vmatprep.mubr.f32.mxu0 0.0
        %2192 = vmatmul.mubr.f32.gmra.mxu0 %v2112
        %v2193 = vpop.f32.mrf.mxu0
        %v2194 = vadd.f32 0.0, %v2193
        %v2195 = vpop.f32.mrf.mxu0
        %2196 = vmatprep.mubr.f32.mxu0 0.0
        %2197 = vmatmul.mubr.f32.gmra.mxu0 %v2115
        %v2198 = vpop.f32.mrf.mxu0
        %v2199 = vadd.f32 0.0, %v2198
        %v2200 = vpop.f32.mrf.mxu0
        %2201 = vdwg.mxu0
        %v2202 = vld [vmem:[%s8] sm:$0xff]
        %v2203 = vld [vmem:[%s8 + $0x8] sm:$0xff]
        %v2204 = vld [vmem:[%s8 + $0x10] sm:$0xff]
        %v2205 = vld [vmem:[%s8 + $0x18] sm:$0xff]
        %v2206 = vld [vmem:[%s8 + $0x20] sm:$0xff]
        %v2207 = vld [vmem:[%s8 + $0x28] sm:$0xff]
        %v2208 = vld [vmem:[%s8 + $0x30] sm:$0xff]
        %v2209 = vld [vmem:[%s8 + $0x38] sm:$0xff]
        %v2210 = vld [vmem:[%s9] sm:$0xff]
        %v2212 = vsel %vm873, %v2210, 0
        %v2215 = vsel %vm873, %v2184, 0
        %v2218 = vsel %vm873, %v2189, 0
        %v2221 = vsel %vm873, %v2194, 0
        %v2224 = vsel %vm873, %v2199, 0
        %2226 = vmatprep.subr.mxu0 0.0
        %2227 = vmatpush1.xpose.msra.mxu0 0.0
        %2228 = vmatprep.subr.mxu0 0.0
        %2229 = vmatpush1.xpose.msra.mxu0 0.0
        %2230 = vmatprep.subr.mxu0 0.0
        %2231 = vmatpush1.xpose.msra.mxu0 0.0
        %2232 = vmatprep.subr.mxu0 0.0
        %2233 = vmatpush1.xpose.msra.mxu0 0.0
        %2234 = vmatprep.subr.mxu0 0.0
        %2235 = vmatpush1.xpose.msra.mxu0 0.0
        %2236 = vmatprep.subr.mxu0 0.0
        %2237 = vmatpush1.xpose.msra.mxu0 0.0
        %2238 = vmatprep.subr.mxu0 0.0
        %2239 = vmatpush1.xpose.msra.mxu0 0.0
        %2240 = vmatprep.subr.mxu0 0.0
        %2241 = vmatpush1.xpose.msra.mxu0 0.0
        %2242 = vmatprep.subr.mxu0 0.0
        %2243 = vmatpush1.xpose.msra.mxu0 0.0
        %2244 = vmatprep.subr.mxu0 0.0
        %2245 = vmatpush1.xpose.msra.mxu0 0.0
        %2246 = vmatprep.subr.mxu0 0.0
        %2247 = vmatpush1.xpose.msra.mxu0 0.0
        %2248 = vmatprep.subr.mxu0 0.0
        %2249 = vmatpush1.xpose.msra.mxu0 0.0
        %2250 = vmatprep.subr.mxu0 0.0
        %2251 = vmatpush1.xpose.msra.mxu0 %v2224
        %2252 = vmatprep.subr.mxu0 0.0
        %2253 = vmatpush1.xpose.msra.mxu0 %v2221
        %2254 = vmatprep.subr.mxu0 0.0
        %2255 = vmatpush1.xpose.msra.mxu0 %v2218
        %2256 = vmatprep.subr.mxu0 0.0
        %2257 = vmatpush1.xpose.msra.mxu0 %v2215
        %2258 = vmatprep.subr.mxu0 0.0
        %2259 = vmatpush2.xpose.msra.mxu0 0.0
        %2260 = vmatprep.subr.mxu0 0.0
        %2261 = vmatpush2.xpose.msra.mxu0 0.0
        %2262 = vmatprep.subr.mxu0 0.0
        %2263 = vmatpush2.xpose.msra.mxu0 0.0
        %2264 = vmatprep.subr.mxu0 0.0
        %2265 = vmatpush2.xpose.msra.mxu0 0.0
        %2266 = vmatprep.subr.mxu0 0.0
        %2267 = vmatpush2.xpose.msra.mxu0 0.0
        %2268 = vmatprep.subr.mxu0 0.0
        %2269 = vmatpush2.xpose.msra.mxu0 0.0
        %2270 = vmatprep.subr.mxu0 0.0
        %2271 = vmatpush2.xpose.msra.mxu0 0.0
        %2272 = vmatprep.subr.mxu0 0.0
        %2273 = vmatpush2.xpose.msra.mxu0 0.0
        %2274 = vmatprep.subr.mxu0 0.0
        %2275 = vmatpush2.xpose.msra.mxu0 0.0
        %2276 = vmatprep.subr.mxu0 0.0
        %2277 = vmatpush2.xpose.msra.mxu0 0.0
        %2278 = vmatprep.subr.mxu0 0.0
        %2279 = vmatpush2.xpose.msra.mxu0 0.0
        %2280 = vmatprep.subr.mxu0 0.0
        %2281 = vmatpush2.xpose.msra.mxu0 0.0
        %2282 = vmatprep.subr.mxu0 0.0
        %2283 = vmatpush2.xpose.msra.mxu0 0.0
        %2284 = vmatprep.subr.mxu0 0.0
        %2285 = vmatpush2.xpose.msra.mxu0 0.0
        %2286 = vmatprep.subr.mxu0 0.0
        %2287 = vmatpush2.xpose.msra.mxu0 0.0
        %2288 = vmatprep.subr.mxu0 0.0
        %2289 = vmatpush2.xpose.msra.mxu0 0.0
        %2290 = vmatprep.mubr.f32.mxu0 0.0
        %2291 = vmatmul.mubr.f32.gmra.mxu0 %v2212
        %v2292 = vpop.f32.mrf.mxu0
        %v2293 = vadd.f32 0.0, %v2292
        %v2294 = vpop.f32.mrf.mxu0
        %2295 = vdwg.mxu0
        %v2297 = vsel %vm873, %v2293, 0
        %2299 = vmatprep.subr.mxu0 0.0
        %2300 = vmatpush1.msra.mxu0 0.0
        %2301 = vmatprep.subr.mxu0 0.0
        %2302 = vmatpush1.msra.mxu0 0.0
        %2303 = vmatprep.subr.mxu0 0.0
        %2304 = vmatpush1.msra.mxu0 0.0
        %2305 = vmatprep.subr.mxu0 0.0
        %2306 = vmatpush1.msra.mxu0 0.0
        %2307 = vmatprep.subr.mxu0 0.0
        %2308 = vmatpush1.msra.mxu0 0.0
        %2309 = vmatprep.subr.mxu0 0.0
        %2310 = vmatpush1.msra.mxu0 0.0
        %2311 = vmatprep.subr.mxu0 0.0
        %2312 = vmatpush1.msra.mxu0 0.0
        %2313 = vmatprep.subr.mxu0 0.0
        %2314 = vmatpush1.msra.mxu0 0.0
        %2315 = vmatprep.subr.mxu0 0.0
        %2316 = vmatpush1.msra.mxu0 0.0
        %2317 = vmatprep.subr.mxu0 0.0
        %2318 = vmatpush1.msra.mxu0 0.0
        %2319 = vmatprep.subr.mxu0 0.0
        %2320 = vmatpush1.msra.mxu0 0.0
        %2321 = vmatprep.subr.mxu0 0.0
        %2322 = vmatpush1.msra.mxu0 0.0
        %2323 = vmatprep.subr.mxu0 %v662
        %2324 = vmatpush1.msra.mxu0 %v661
        %2325 = vmatprep.subr.mxu0 %v660
        %2326 = vmatpush1.msra.mxu0 %v659
        %2327 = vmatprep.subr.mxu0 %v658
        %2328 = vmatpush1.msra.mxu0 %v657
        %2329 = vmatprep.subr.mxu0 %v656
        %2330 = vmatpush1.msra.mxu0 %v655
        %2331 = vmatprep.subr.mxu0 0.0
        %2332 = vmatpush2.msra.mxu0 0.0
        %2333 = vmatprep.subr.mxu0 0.0
        %2334 = vmatpush2.msra.mxu0 0.0
        %2335 = vmatprep.subr.mxu0 0.0
        %2336 = vmatpush2.msra.mxu0 0.0
        %2337 = vmatprep.subr.mxu0 0.0
        %2338 = vmatpush2.msra.mxu0 0.0
        %2339 = vmatprep.subr.mxu0 0.0
        %2340 = vmatpush2.msra.mxu0 0.0
        %2341 = vmatprep.subr.mxu0 0.0
        %2342 = vmatpush2.msra.mxu0 0.0
        %2343 = vmatprep.subr.mxu0 0.0
        %2344 = vmatpush2.msra.mxu0 0.0
        %2345 = vmatprep.subr.mxu0 0.0
        %2346 = vmatpush2.msra.mxu0 0.0
        %2347 = vmatprep.subr.mxu0 0.0
        %2348 = vmatpush2.msra.mxu0 0.0
        %2349 = vmatprep.subr.mxu0 0.0
        %2350 = vmatpush2.msra.mxu0 0.0
        %2351 = vmatprep.subr.mxu0 0.0
        %2352 = vmatpush2.msra.mxu0 0.0
        %2353 = vmatprep.subr.mxu0 0.0
        %2354 = vmatpush2.msra.mxu0 0.0
        %2355 = vmatprep.subr.mxu0 0.0
        %2356 = vmatpush2.msra.mxu0 0.0
        %2357 = vmatprep.subr.mxu0 0.0
        %2358 = vmatpush2.msra.mxu0 0.0
        %2359 = vmatprep.subr.mxu0 0.0
        %2360 = vmatpush2.msra.mxu0 0.0
        %2361 = vmatprep.subr.mxu0 0.0
        %2362 = vmatpush2.msra.mxu0 0.0
        %2363 = vmatprep.mubr.f32.mxu0 0.0
        %2364 = vmatmul.mubr.f32.gmra.mxu0 %v2297
        %v2365 = vpop.f32.mrf.mxu0
        %v2366 = vadd.f32 0.0, %v2365
        %v2367 = vpop.f32.mrf.mxu0
        %v2368 = vadd.f32 0.0, %v2367
        %2369 = vdwg.mxu0
        %v2370 = vmul.f32 %v2366, %v695
        %v2371 = vmul.f32 %v2368, %v696
        %v2372 = vrot.slane %v2370, 4
        %v2373 = vadd.f32 %v2370, %v2372
        %v2374 = vrot.slane %v2373, 2
        %v2375 = vadd.f32 %v2373, %v2374
        %v2376 = vrot.slane %v2375, 1
        %v2377 = vadd.f32 %v2375, %v2376
        %v2378 = vrot.slane %v2371, 4
        %v2379 = vadd.f32 %v2371, %v2378
        %v2380 = vrot.slane %v2379, 2
        %v2381 = vadd.f32 %v2379, %v2380
        %v2382 = vrot.slane %v2381, 1
        %v2383 = vadd.f32 %v2381, %v2382
        %2384 = vmatprep.subr.mxu0 0.0
        %2385 = vmatpush1.msra.mxu0 0.0
        %2386 = vmatprep.subr.mxu0 0.0
        %2387 = vmatpush1.msra.mxu0 0.0
        %2388 = vmatprep.subr.mxu0 0.0
        %2389 = vmatpush1.msra.mxu0 0.0
        %2390 = vmatprep.subr.mxu0 0.0
        %2391 = vmatpush1.msra.mxu0 0.0
        %2392 = vmatprep.subr.mxu0 0.0
        %2393 = vmatpush1.msra.mxu0 0.0
        %2394 = vmatprep.subr.mxu0 0.0
        %2395 = vmatpush1.msra.mxu0 0.0
        %2396 = vmatprep.subr.mxu0 0.0
        %2397 = vmatpush1.msra.mxu0 0.0
        %2398 = vmatprep.subr.mxu0 0.0
        %2399 = vmatpush1.msra.mxu0 0.0
        %2400 = vmatprep.subr.mxu0 0.0
        %2401 = vmatpush1.msra.mxu0 0.0
        %2402 = vmatprep.subr.mxu0 0.0
        %2403 = vmatpush1.msra.mxu0 0.0
        %2404 = vmatprep.subr.mxu0 0.0
        %2405 = vmatpush1.msra.mxu0 0.0
        %2406 = vmatprep.subr.mxu0 0.0
        %2407 = vmatpush1.msra.mxu0 0.0
        %2408 = vmatprep.subr.mxu0 %v2209
        %2409 = vmatpush1.msra.mxu0 %v2208
        %2410 = vmatprep.subr.mxu0 %v2207
        %2411 = vmatpush1.msra.mxu0 %v2206
        %2412 = vmatprep.subr.mxu0 %v2205
        %2413 = vmatpush1.msra.mxu0 %v2204
        %2414 = vmatprep.subr.mxu0 %v2203
        %2415 = vmatpush1.msra.mxu0 %v2202
        %2416 = vmatprep.subr.mxu0 0.0
        %2417 = vmatpush2.msra.mxu0 0.0
        %2418 = vmatprep.subr.mxu0 0.0
        %2419 = vmatpush2.msra.mxu0 0.0
        %2420 = vmatprep.subr.mxu0 0.0
        %2421 = vmatpush2.msra.mxu0 0.0
        %2422 = vmatprep.subr.mxu0 0.0
        %2423 = vmatpush2.msra.mxu0 0.0
        %2424 = vmatprep.subr.mxu0 0.0
        %2425 = vmatpush2.msra.mxu0 0.0
        %2426 = vmatprep.subr.mxu0 0.0
        %2427 = vmatpush2.msra.mxu0 0.0
        %2428 = vmatprep.subr.mxu0 0.0
        %2429 = vmatpush2.msra.mxu0 0.0
        %2430 = vmatprep.subr.mxu0 0.0
        %2431 = vmatpush2.msra.mxu0 0.0
        %2432 = vmatprep.subr.mxu0 0.0
        %2433 = vmatpush2.msra.mxu0 0.0
        %2434 = vmatprep.subr.mxu0 0.0
        %2435 = vmatpush2.msra.mxu0 0.0
        %2436 = vmatprep.subr.mxu0 0.0
        %2437 = vmatpush2.msra.mxu0 0.0
        %2438 = vmatprep.subr.mxu0 0.0
        %2439 = vmatpush2.msra.mxu0 0.0
        %2440 = vmatprep.subr.mxu0 0.0
        %2441 = vmatpush2.msra.mxu0 0.0
        %2442 = vmatprep.subr.mxu0 0.0
        %2443 = vmatpush2.msra.mxu0 0.0
        %2444 = vmatprep.subr.mxu0 0.0
        %2445 = vmatpush2.msra.mxu0 0.0
        %2446 = vmatprep.subr.mxu0 0.0
        %2447 = vmatpush2.msra.mxu0 0.0
        %2448 = vmatprep.mubr.f32.mxu0 0.0
        %2449 = vmatmul.mubr.f32.gmra.mxu0 %v2215
        %v2450 = vpop.f32.mrf.mxu0
        %v2451 = vadd.f32 %v2377, %v2450
        %v2452 = vpop.f32.mrf.mxu0
        %v2453 = vadd.f32 %v2383, %v2452
        %2454 = vmatprep.mubr.f32.mxu0 0.0
        %2455 = vmatmul.mubr.f32.gmra.mxu0 %v2218
        %v2456 = vpop.f32.mrf.mxu0
        %v2457 = vadd.f32 %v2377, %v2456
        %v2458 = vpop.f32.mrf.mxu0
        %v2459 = vadd.f32 %v2383, %v2458
        %2460 = vmatprep.mubr.f32.mxu0 0.0
        %2461 = vmatmul.mubr.f32.gmra.mxu0 %v2221
        %v2462 = vpop.f32.mrf.mxu0
        %v2463 = vadd.f32 %v2377, %v2462
        %v2464 = vpop.f32.mrf.mxu0
        %v2465 = vadd.f32 %v2383, %v2464
        %2466 = vmatprep.mubr.f32.mxu0 0.0
        %2467 = vmatmul.mubr.f32.gmra.mxu0 %v2224
        %v2468 = vpop.f32.mrf.mxu0
        %v2469 = vadd.f32 %v2377, %v2468
        %v2470 = vpop.f32.mrf.mxu0
        %v2471 = vadd.f32 %v2383, %v2470
        %2472 = vdwg.mxu0
        %vm2473 = vcmp.gt.f32.partialorder %v2451, 0.0
        %vm2474 = vcmp.gt.f32.partialorder %v2453, 0.0
        %vm2475 = vcmp.gt.f32.partialorder %v2457, 0.0
        %vm2476 = vcmp.gt.f32.partialorder %v2459, 0.0
        %vm2477 = vcmp.gt.f32.partialorder %v2463, 0.0
        %vm2478 = vcmp.gt.f32.partialorder %v2465, 0.0
        %vm2479 = vcmp.gt.f32.partialorder %v2469, 0.0
        %vm2480 = vcmp.gt.f32.partialorder %v2471, 0.0
        %v2481 = vmul.f32 %v2451, 0.2
        %v2482 = vmul.f32 %v2453, 0.2
        %v2483 = vmul.f32 %v2457, 0.2
        %v2484 = vmul.f32 %v2459, 0.2
        %v2485 = vmul.f32 %v2463, 0.2
        %v2486 = vmul.f32 %v2465, 0.2
        %v2487 = vmul.f32 %v2469, 0.2
        %v2488 = vmul.f32 %v2471, 0.2
        %v2489 = vsel %vm2473, %v2451, %v2481
        %v2490 = vsel %vm2474, %v2453, %v2482
        %v2491 = vsel %vm2475, %v2457, %v2483
        %v2492 = vsel %vm2476, %v2459, %v2484
        %v2493 = vsel %vm2477, %v2463, %v2485
        %v2494 = vsel %vm2478, %v2465, %v2486
        %v2495 = vsel %vm2479, %v2469, %v2487
        %v2496 = vsel %vm2480, %v2471, %v2488
        %v2497 = vmax.f32 %v2489, %v2490
        %2498 = vmax.xlane.f32.xlu0 %v2497
        %v2499 = vpop.xlane.xlu0 %2498
        %v2500 = vmax.f32 %v2491, %v2492
        %2501 = vmax.xlane.f32.xlu0 %v2500
        %v2502 = vpop.xlane.xlu0 %2501
        %v2503 = vmax.f32 %v2493, %v2494
        %2504 = vmax.xlane.f32.xlu0 %v2503
        %v2505 = vpop.xlane.xlu0 %2504
        %v2506 = vmax.f32 %v2495, %v2496
        %2507 = vmax.xlane.f32.xlu0 %v2506
        %v2508 = vpop.xlane.xlu0 %2507
        %v2509 = vsub.f32 %v2489, %v2499
        %v2510 = vsub.f32 %v2490, %v2499
        %v2511 = vsub.f32 %v2491, %v2502
        %v2512 = vsub.f32 %v2492, %v2502
        %v2513 = vsub.f32 %v2493, %v2505
        %v2514 = vsub.f32 %v2494, %v2505
        %v2515 = vsub.f32 %v2495, %v2508
        %v2516 = vsub.f32 %v2496, %v2508
        %v2517 = vmul.f32 %v2509, 1.442695
        %v2518 = vpow.pop %v2517
        %v2519 = vmul.f32 %v2510, 1.442695
        %v2520 = vpow.pop %v2519
        %v2521 = vmul.f32 %v2511, 1.442695
        %v2522 = vpow.pop %v2521
        %v2523 = vmul.f32 %v2512, 1.442695
        %v2524 = vpow.pop %v2523
        %v2525 = vmul.f32 %v2513, 1.442695
        %v2526 = vpow.pop %v2525
        %v2527 = vmul.f32 %v2514, 1.442695
        %v2528 = vpow.pop %v2527
        %v2529 = vmul.f32 %v2515, 1.442695
        %v2530 = vpow.pop %v2529
        %v2531 = vmul.f32 %v2516, 1.442695
        %v2532 = vpow.pop %v2531
        %v2533 = vmul.f32 %v2518, %v953
        %v2534 = vmul.f32 %v2520, %v955
        %v2535 = vmul.f32 %v2522, %v959
        %v2536 = vmul.f32 %v2524, %v961
        %v2537 = vmul.f32 %v2526, %v965
        %v2538 = vmul.f32 %v2528, %v967
        %v2539 = vmul.f32 %v2530, %v971
        %v2540 = vmul.f32 %v2532, %v973
        %2541 = vmatprep.subr.mxu0 0.0
        %2542 = vmatpush1.msra.mxu0 0.0
        %2543 = vmatprep.subr.mxu0 0.0
        %2544 = vmatpush1.msra.mxu0 0.0
        %2545 = vmatprep.subr.mxu0 0.0
        %2546 = vmatpush1.msra.mxu0 0.0
        %2547 = vmatprep.subr.mxu0 0.0
        %2548 = vmatpush1.msra.mxu0 0.0
        %2549 = vmatprep.subr.mxu0 0.0
        %2550 = vmatpush1.msra.mxu0 0.0
        %2551 = vmatprep.subr.mxu0 0.0
        %2552 = vmatpush1.msra.mxu0 0.0
        %2553 = vmatprep.subr.mxu0 0.0
        %2554 = vmatpush1.msra.mxu0 0.0
        %2555 = vmatprep.subr.mxu0 0.0
        %2556 = vmatpush1.msra.mxu0 0.0
        %2557 = vmatprep.subr.mxu0 0.0
        %2558 = vmatpush1.msra.mxu0 0.0
        %2559 = vmatprep.subr.mxu0 0.0
        %2560 = vmatpush1.msra.mxu0 0.0
        %2561 = vmatprep.subr.mxu0 0.0
        %2562 = vmatpush1.msra.mxu0 0.0
        %2563 = vmatprep.subr.mxu0 0.0
        %2564 = vmatpush1.msra.mxu0 0.0
        %2565 = vmatprep.subr.mxu0 0.0
        %2566 = vmatpush1.msra.mxu0 %v2199
        %2567 = vmatprep.subr.mxu0 0.0
        %2568 = vmatpush1.msra.mxu0 %v2194
        %2569 = vmatprep.subr.mxu0 0.0
        %2570 = vmatpush1.msra.mxu0 %v2189
        %2571 = vmatprep.subr.mxu0 0.0
        %2572 = vmatpush1.msra.mxu0 %v2184
        %2573 = vmatprep.subr.mxu0 0.0
        %2574 = vmatpush2.msra.mxu0 0.0
        %2575 = vmatprep.subr.mxu0 0.0
        %2576 = vmatpush2.msra.mxu0 0.0
        %2577 = vmatprep.subr.mxu0 0.0
        %2578 = vmatpush2.msra.mxu0 0.0
        %2579 = vmatprep.subr.mxu0 0.0
        %2580 = vmatpush2.msra.mxu0 0.0
        %2581 = vmatprep.subr.mxu0 0.0
        %2582 = vmatpush2.msra.mxu0 0.0
        %2583 = vmatprep.subr.mxu0 0.0
        %2584 = vmatpush2.msra.mxu0 0.0
        %2585 = vmatprep.subr.mxu0 0.0
        %2586 = vmatpush2.msra.mxu0 0.0
        %2587 = vmatprep.subr.mxu0 0.0
        %2588 = vmatpush2.msra.mxu0 0.0
        %2589 = vmatprep.subr.mxu0 0.0
        %2590 = vmatpush2.msra.mxu0 0.0
        %2591 = vmatprep.subr.mxu0 0.0
        %2592 = vmatpush2.msra.mxu0 0.0
        %2593 = vmatprep.subr.mxu0 0.0
        %2594 = vmatpush2.msra.mxu0 0.0
        %2595 = vmatprep.subr.mxu0 0.0
        %2596 = vmatpush2.msra.mxu0 0.0
        %2597 = vmatprep.subr.mxu0 0.0
        %2598 = vmatpush2.msra.mxu0 0.0
        %2599 = vmatprep.subr.mxu0 0.0
        %2600 = vmatpush2.msra.mxu0 0.0
        %2601 = vmatprep.subr.mxu0 0.0
        %2602 = vmatpush2.msra.mxu0 0.0
        %2603 = vmatprep.subr.mxu0 0.0
        %2604 = vmatpush2.msra.mxu0 0.0
        %2605 = vmatprep.mubr.f32.mxu0 0.0
        %2606 = vmatmul.mubr.f32.gmra.mxu0 %v1416
        %v2607 = vpop.f32.mrf.mxu0
        %v2608 = vadd.f32 0.0, %v2607
        %v2609 = vpop.f32.mrf.mxu0
        %2610 = vmatprep.mubr.f32.mxu0 0.0
        %2611 = vmatmul.mubr.f32.gmra.mxu0 %v1419
        %v2612 = vpop.f32.mrf.mxu0
        %v2613 = vadd.f32 0.0, %v2612
        %v2614 = vpop.f32.mrf.mxu0
        %2615 = vmatprep.mubr.f32.mxu0 0.0
        %2616 = vmatmul.mubr.f32.gmra.mxu0 %v1422
        %v2617 = vpop.f32.mrf.mxu0
        %v2618 = vadd.f32 0.0, %v2617
        %v2619 = vpop.f32.mrf.mxu0
        %2620 = vmatprep.mubr.f32.mxu0 0.0
        %2621 = vmatmul.mubr.f32.gmra.mxu0 %v1425
        %v2622 = vpop.f32.mrf.mxu0
        %v2623 = vadd.f32 0.0, %v2622
        %v2624 = vpop.f32.mrf.mxu0
        %2625 = vmatprep.mubr.f32.mxu0 0.0
        %2626 = vmatmul.mubr.f32.gmra.mxu0 %v1428
        %v2627 = vpop.f32.mrf.mxu0
        %v2628 = vadd.f32 0.0, %v2627
        %v2629 = vpop.f32.mrf.mxu0
        %2630 = vmatprep.mubr.f32.mxu0 0.0
        %2631 = vmatmul.mubr.f32.gmra.mxu0 %v1431
        %v2632 = vpop.f32.mrf.mxu0
        %v2633 = vadd.f32 0.0, %v2632
        %v2634 = vpop.f32.mrf.mxu0
        %2635 = vmatprep.mubr.f32.mxu0 0.0
        %2636 = vmatmul.mubr.f32.gmra.mxu0 %v1434
        %v2637 = vpop.f32.mrf.mxu0
        %v2638 = vadd.f32 0.0, %v2637
        %v2639 = vpop.f32.mrf.mxu0
        %2640 = vmatprep.mubr.f32.mxu0 0.0
        %2641 = vmatmul.mubr.f32.gmra.mxu0 %v1437
        %v2642 = vpop.f32.mrf.mxu0
        %v2643 = vadd.f32 0.0, %v2642
        %v2644 = vpop.f32.mrf.mxu0
        %2645 = vmatprep.mubr.f32.mxu0 0.0
        %2646 = vmatmul.mubr.f32.gmra.mxu0 %v1440
        %v2647 = vpop.f32.mrf.mxu0
        %v2648 = vadd.f32 0.0, %v2647
        %v2649 = vpop.f32.mrf.mxu0
        %2650 = vmatprep.mubr.f32.mxu0 0.0
        %2651 = vmatmul.mubr.f32.gmra.mxu0 %v1443
        %v2652 = vpop.f32.mrf.mxu0
        %v2653 = vadd.f32 0.0, %v2652
        %v2654 = vpop.f32.mrf.mxu0
        %2655 = vmatprep.mubr.f32.mxu0 0.0
        %2656 = vmatmul.mubr.f32.gmra.mxu0 %v1446
        %v2657 = vpop.f32.mrf.mxu0
        %v2658 = vadd.f32 0.0, %v2657
        %v2659 = vpop.f32.mrf.mxu0
        %2660 = vmatprep.mubr.f32.mxu0 0.0
        %2661 = vmatmul.mubr.f32.gmra.mxu0 %v1449
        %v2662 = vpop.f32.mrf.mxu0
        %v2663 = vadd.f32 0.0, %v2662
        %v2664 = vpop.f32.mrf.mxu0
        %2665 = vmatprep.mubr.f32.mxu0 0.0
        %2666 = vmatmul.mubr.f32.gmra.mxu0 %v1452
        %v2667 = vpop.f32.mrf.mxu0
        %v2668 = vadd.f32 0.0, %v2667
        %v2669 = vpop.f32.mrf.mxu0
        %2670 = vmatprep.mubr.f32.mxu0 0.0
        %2671 = vmatmul.mubr.f32.gmra.mxu0 %v1455
        %v2672 = vpop.f32.mrf.mxu0
        %v2673 = vadd.f32 0.0, %v2672
        %v2674 = vpop.f32.mrf.mxu0
        %2675 = vmatprep.mubr.f32.mxu0 0.0
        %2676 = vmatmul.mubr.f32.gmra.mxu0 %v1458
        %v2677 = vpop.f32.mrf.mxu0
        %v2678 = vadd.f32 0.0, %v2677
        %v2679 = vpop.f32.mrf.mxu0
        %2680 = vmatprep.mubr.f32.mxu0 0.0
        %2681 = vmatmul.mubr.f32.gmra.mxu0 %v1461
        %v2682 = vpop.f32.mrf.mxu0
        %v2683 = vadd.f32 0.0, %v2682
        %v2684 = vpop.f32.mrf.mxu0
        %2685 = vmatprep.mubr.f32.mxu0 0.0
        %2686 = vmatmul.mubr.f32.gmra.mxu0 %v1464
        %v2687 = vpop.f32.mrf.mxu0
        %v2688 = vadd.f32 0.0, %v2687
        %v2689 = vpop.f32.mrf.mxu0
        %2690 = vmatprep.mubr.f32.mxu0 0.0
        %2691 = vmatmul.mubr.f32.gmra.mxu0 %v1467
        %v2692 = vpop.f32.mrf.mxu0
        %v2693 = vadd.f32 0.0, %v2692
        %v2694 = vpop.f32.mrf.mxu0
        %2695 = vmatprep.mubr.f32.mxu0 0.0
        %2696 = vmatmul.mubr.f32.gmra.mxu0 %v1470
        %v2697 = vpop.f32.mrf.mxu0
        %v2698 = vadd.f32 0.0, %v2697
        %v2699 = vpop.f32.mrf.mxu0
        %2700 = vmatprep.mubr.f32.mxu0 0.0
        %2701 = vmatmul.mubr.f32.gmra.mxu0 %v1473
        %v2702 = vpop.f32.mrf.mxu0
        %v2703 = vadd.f32 0.0, %v2702
        %v2704 = vpop.f32.mrf.mxu0
        %2705 = vmatprep.mubr.f32.mxu0 0.0
        %2706 = vmatmul.mubr.f32.gmra.mxu0 %v1476
        %v2707 = vpop.f32.mrf.mxu0
        %v2708 = vadd.f32 0.0, %v2707
        %v2709 = vpop.f32.mrf.mxu0
        %2710 = vmatprep.mubr.f32.mxu0 0.0
        %2711 = vmatmul.mubr.f32.gmra.mxu0 %v1479
        %v2712 = vpop.f32.mrf.mxu0
        %v2713 = vadd.f32 0.0, %v2712
        %v2714 = vpop.f32.mrf.mxu0
        %2715 = vmatprep.mubr.f32.mxu0 0.0
        %2716 = vmatmul.mubr.f32.gmra.mxu0 %v1482
        %v2717 = vpop.f32.mrf.mxu0
        %v2718 = vadd.f32 0.0, %v2717
        %v2719 = vpop.f32.mrf.mxu0
        %2720 = vmatprep.mubr.f32.mxu0 0.0
        %2721 = vmatmul.mubr.f32.gmra.mxu0 %v1485
        %v2722 = vpop.f32.mrf.mxu0
        %v2723 = vadd.f32 0.0, %v2722
        %v2724 = vpop.f32.mrf.mxu0
        %2725 = vmatprep.mubr.f32.mxu0 0.0
        %2726 = vmatmul.mubr.f32.gmra.mxu0 %v1488
        %v2727 = vpop.f32.mrf.mxu0
        %v2728 = vadd.f32 0.0, %v2727
        %v2729 = vpop.f32.mrf.mxu0
        %2730 = vmatprep.mubr.f32.mxu0 0.0
        %2731 = vmatmul.mubr.f32.gmra.mxu0 %v1491
        %v2732 = vpop.f32.mrf.mxu0
        %v2733 = vadd.f32 0.0, %v2732
        %v2734 = vpop.f32.mrf.mxu0
        %2735 = vmatprep.mubr.f32.mxu0 0.0
        %2736 = vmatmul.mubr.f32.gmra.mxu0 %v1494
        %v2737 = vpop.f32.mrf.mxu0
        %v2738 = vadd.f32 0.0, %v2737
        %v2739 = vpop.f32.mrf.mxu0
        %2740 = vmatprep.mubr.f32.mxu0 0.0
        %2741 = vmatmul.mubr.f32.gmra.mxu0 %v1497
        %v2742 = vpop.f32.mrf.mxu0
        %v2743 = vadd.f32 0.0, %v2742
        %v2744 = vpop.f32.mrf.mxu0
        %2745 = vmatprep.mubr.f32.mxu0 0.0
        %2746 = vmatmul.mubr.f32.gmra.mxu0 %v1500
        %v2747 = vpop.f32.mrf.mxu0
        %v2748 = vadd.f32 0.0, %v2747
        %v2749 = vpop.f32.mrf.mxu0
        %2750 = vmatprep.mubr.f32.mxu0 0.0
        %2751 = vmatmul.mubr.f32.gmra.mxu0 %v1503
        %v2752 = vpop.f32.mrf.mxu0
        %v2753 = vadd.f32 0.0, %v2752
        %v2754 = vpop.f32.mrf.mxu0
        %2755 = vmatprep.mubr.f32.mxu0 0.0
        %2756 = vmatmul.mubr.f32.gmra.mxu0 %v1506
        %v2757 = vpop.f32.mrf.mxu0
        %v2758 = vadd.f32 0.0, %v2757
        %v2759 = vpop.f32.mrf.mxu0
        %2760 = vmatprep.mubr.f32.mxu0 0.0
        %2761 = vmatmul.mubr.f32.gmra.mxu0 %v1509
        %v2762 = vpop.f32.mrf.mxu0
        %v2763 = vadd.f32 0.0, %v2762
        %v2764 = vpop.f32.mrf.mxu0
        %2765 = vdwg.mxu0
        %v2766 = vmul.f32 %v2608, %v697
        %v2767 = vmul.f32 %v2613, %v698
        %v2768 = vmul.f32 %v2618, %v699
        %v2769 = vmul.f32 %v2623, %v700
        %v2770 = vmul.f32 %v2628, %v701
        %v2771 = vmul.f32 %v2633, %v702
        %v2772 = vmul.f32 %v2638, %v703
        %v2773 = vmul.f32 %v2643, %v704
        %v2774 = vmul.f32 %v2648, %v705
        %v2775 = vmul.f32 %v2653, %v706
        %v2776 = vmul.f32 %v2658, %v707
        %v2777 = vmul.f32 %v2663, %v708
        %v2778 = vmul.f32 %v2668, %v709
        %v2779 = vmul.f32 %v2673, %v710
        %v2780 = vmul.f32 %v2678, %v711
        %v2781 = vmul.f32 %v2683, %v712
        %v2782 = vmul.f32 %v2688, %v713
        %v2783 = vmul.f32 %v2693, %v714
        %v2784 = vmul.f32 %v2698, %v715
        %v2785 = vmul.f32 %v2703, %v716
        %v2786 = vmul.f32 %v2708, %v717
        %v2787 = vmul.f32 %v2713, %v718
        %v2788 = vmul.f32 %v2718, %v719
        %v2789 = vmul.f32 %v2723, %v720
        %v2790 = vmul.f32 %v2728, %v721
        %v2791 = vmul.f32 %v2733, %v722
        %v2792 = vmul.f32 %v2738, %v723
        %v2793 = vmul.f32 %v2743, %v724
        %v2794 = vmul.f32 %v2748, %v725
        %v2795 = vmul.f32 %v2753, %v726
        %v2796 = vmul.f32 %v2758, %v727
        %v2797 = vmul.f32 %v2763, %v728
        %2798 = vmatprep.subr.mxu0 0.0
        %2799 = vmatpush1.msra.mxu0 %v2781
        %2800 = vmatprep.subr.mxu0 0.0
        %2801 = vmatpush1.msra.mxu0 %v2780
        %2802 = vmatprep.subr.mxu0 0.0
        %2803 = vmatpush1.msra.mxu0 %v2779
        %2804 = vmatprep.subr.mxu0 0.0
        %2805 = vmatpush1.msra.mxu0 %v2778
        %2806 = vmatprep.subr.mxu0 0.0
        %2807 = vmatpush1.msra.mxu0 %v2777
        %2808 = vmatprep.subr.mxu0 0.0
        %2809 = vmatpush1.msra.mxu0 %v2776
        %2810 = vmatprep.subr.mxu0 0.0
        %2811 = vmatpush1.msra.mxu0 %v2775
        %2812 = vmatprep.subr.mxu0 0.0
        %2813 = vmatpush1.msra.mxu0 %v2774
        %2814 = vmatprep.subr.mxu0 0.0
        %2815 = vmatpush1.msra.mxu0 %v2773
        %2816 = vmatprep.subr.mxu0 0.0
        %2817 = vmatpush1.msra.mxu0 %v2772
        %2818 = vmatprep.subr.mxu0 0.0
        %2819 = vmatpush1.msra.mxu0 %v2771
        %2820 = vmatprep.subr.mxu0 0.0
        %2821 = vmatpush1.msra.mxu0 %v2770
        %2822 = vmatprep.subr.mxu0 0.0
        %2823 = vmatpush1.msra.mxu0 %v2769
        %2824 = vmatprep.subr.mxu0 0.0
        %2825 = vmatpush1.msra.mxu0 %v2768
        %2826 = vmatprep.subr.mxu0 0.0
        %2827 = vmatpush1.msra.mxu0 %v2767
        %2828 = vmatprep.subr.mxu0 0.0
        %2829 = vmatpush1.msra.mxu0 %v2766
        %2830 = vmatprep.subr.mxu0 0.0
        %2831 = vmatpush2.msra.mxu0 %v2797
        %2832 = vmatprep.subr.mxu0 0.0
        %2833 = vmatpush2.msra.mxu0 %v2796
        %2834 = vmatprep.subr.mxu0 0.0
        %2835 = vmatpush2.msra.mxu0 %v2795
        %2836 = vmatprep.subr.mxu0 0.0
        %2837 = vmatpush2.msra.mxu0 %v2794
        %2838 = vmatprep.subr.mxu0 0.0
        %2839 = vmatpush2.msra.mxu0 %v2793
        %2840 = vmatprep.subr.mxu0 0.0
        %2841 = vmatpush2.msra.mxu0 %v2792
        %2842 = vmatprep.subr.mxu0 0.0
        %2843 = vmatpush2.msra.mxu0 %v2791
        %2844 = vmatprep.subr.mxu0 0.0
        %2845 = vmatpush2.msra.mxu0 %v2790
        %2846 = vmatprep.subr.mxu0 0.0
        %2847 = vmatpush2.msra.mxu0 %v2789
        %2848 = vmatprep.subr.mxu0 0.0
        %2849 = vmatpush2.msra.mxu0 %v2788
        %2850 = vmatprep.subr.mxu0 0.0
        %2851 = vmatpush2.msra.mxu0 %v2787
        %2852 = vmatprep.subr.mxu0 0.0
        %2853 = vmatpush2.msra.mxu0 %v2786
        %2854 = vmatprep.subr.mxu0 0.0
        %2855 = vmatpush2.msra.mxu0 %v2785
        %2856 = vmatprep.subr.mxu0 0.0
        %2857 = vmatpush2.msra.mxu0 %v2784
        %2858 = vmatprep.subr.mxu0 0.0
        %2859 = vmatpush2.msra.mxu0 %v2783
        %2860 = vmatprep.subr.mxu0 0.0
        %2861 = vmatpush2.msra.mxu0 %v2782
        %2862 = vmatprep.mubr.f32.mxu0 %v2534
        %2863 = vmatmul.mubr.f32.gmra.mxu0 %v2533
        %v2864 = vpop.f32.mrf.mxu0
        %v2865 = vadd.f32 0.0, %v2864
        %v2866 = vpop.f32.mrf.mxu0
        %2867 = vmatprep.mubr.f32.mxu0 %v2536
        %2868 = vmatmul.mubr.f32.gmra.mxu0 %v2535
        %v2869 = vpop.f32.mrf.mxu0
        %v2870 = vadd.f32 0.0, %v2869
        %v2871 = vpop.f32.mrf.mxu0
        %2872 = vmatprep.mubr.f32.mxu0 %v2538
        %2873 = vmatmul.mubr.f32.gmra.mxu0 %v2537
        %v2874 = vpop.f32.mrf.mxu0
        %v2875 = vadd.f32 0.0, %v2874
        %v2876 = vpop.f32.mrf.mxu0
        %2877 = vmatprep.mubr.f32.mxu0 %v2540
        %2878 = vmatmul.mubr.f32.gmra.mxu0 %v2539
        %v2879 = vpop.f32.mrf.mxu0
        %v2880 = vadd.f32 0.0, %v2879
        %v2881 = vpop.f32.mrf.mxu0
        %2882 = vdwg.mxu0
        %2883 = vmatprep.subr.mxu0 0.0
        %2884 = vmatpush1.msra.mxu0 %v744
        %2885 = vmatprep.subr.mxu0 0.0
        %2886 = vmatpush1.msra.mxu0 %v743
        %2887 = vmatprep.subr.mxu0 0.0
        %2888 = vmatpush1.msra.mxu0 %v742
        %2889 = vmatprep.subr.mxu0 0.0
        %2890 = vmatpush1.msra.mxu0 %v741
        %2891 = vmatprep.subr.mxu0 0.0
        %2892 = vmatpush1.msra.mxu0 %v740
        %2893 = vmatprep.subr.mxu0 0.0
        %2894 = vmatpush1.msra.mxu0 %v739
        %2895 = vmatprep.subr.mxu0 0.0
        %2896 = vmatpush1.msra.mxu0 %v738
        %2897 = vmatprep.subr.mxu0 0.0
        %2898 = vmatpush1.msra.mxu0 %v737
        %2899 = vmatprep.subr.mxu0 0.0
        %2900 = vmatpush1.msra.mxu0 %v736
        %2901 = vmatprep.subr.mxu0 0.0
        %2902 = vmatpush1.msra.mxu0 %v735
        %2903 = vmatprep.subr.mxu0 0.0
        %2904 = vmatpush1.msra.mxu0 %v734
        %2905 = vmatprep.subr.mxu0 0.0
        %2906 = vmatpush1.msra.mxu0 %v733
        %2907 = vmatprep.subr.mxu0 0.0
        %2908 = vmatpush1.msra.mxu0 %v732
        %2909 = vmatprep.subr.mxu0 0.0
        %2910 = vmatpush1.msra.mxu0 %v731
        %2911 = vmatprep.subr.mxu0 0.0
        %2912 = vmatpush1.msra.mxu0 %v730
        %2913 = vmatprep.subr.mxu0 0.0
        %2914 = vmatpush1.msra.mxu0 %v729
        %2915 = vmatprep.subr.mxu0 0.0
        %2916 = vmatpush2.msra.mxu0 %v760
        %2917 = vmatprep.subr.mxu0 0.0
        %2918 = vmatpush2.msra.mxu0 %v759
        %2919 = vmatprep.subr.mxu0 0.0
        %2920 = vmatpush2.msra.mxu0 %v758
        %2921 = vmatprep.subr.mxu0 0.0
        %2922 = vmatpush2.msra.mxu0 %v757
        %2923 = vmatprep.subr.mxu0 0.0
        %2924 = vmatpush2.msra.mxu0 %v756
        %2925 = vmatprep.subr.mxu0 0.0
        %2926 = vmatpush2.msra.mxu0 %v755
        %2927 = vmatprep.subr.mxu0 0.0
        %2928 = vmatpush2.msra.mxu0 %v754
        %2929 = vmatprep.subr.mxu0 0.0
        %2930 = vmatpush2.msra.mxu0 %v753
        %2931 = vmatprep.subr.mxu0 0.0
        %2932 = vmatpush2.msra.mxu0 %v752
        %2933 = vmatprep.subr.mxu0 0.0
        %2934 = vmatpush2.msra.mxu0 %v751
        %2935 = vmatprep.subr.mxu0 0.0
        %2936 = vmatpush2.msra.mxu0 %v750
        %2937 = vmatprep.subr.mxu0 0.0
        %2938 = vmatpush2.msra.mxu0 %v749
        %2939 = vmatprep.subr.mxu0 0.0
        %2940 = vmatpush2.msra.mxu0 %v748
        %2941 = vmatprep.subr.mxu0 0.0
        %2942 = vmatpush2.msra.mxu0 %v747
        %2943 = vmatprep.subr.mxu0 0.0
        %2944 = vmatpush2.msra.mxu0 %v746
        %2945 = vmatprep.subr.mxu0 0.0
        %2946 = vmatpush2.msra.mxu0 %v745
        %2947 = vmatprep.mubr.f32.mxu0 %v2534
        %2948 = vmatmul.mubr.f32.gmra.mxu0 %v2533
        %v2949 = vpop.f32.mrf.mxu0
        %v2950 = vadd.f32 0.0, %v2949
        %v2951 = vpop.f32.mrf.mxu0
        %2952 = vmatprep.mubr.f32.mxu0 %v2536
        %2953 = vmatmul.mubr.f32.gmra.mxu0 %v2535
        %v2954 = vpop.f32.mrf.mxu0
        %v2955 = vadd.f32 0.0, %v2954
        %v2956 = vpop.f32.mrf.mxu0
        %2957 = vmatprep.mubr.f32.mxu0 %v2538
        %2958 = vmatmul.mubr.f32.gmra.mxu0 %v2537
        %v2959 = vpop.f32.mrf.mxu0
        %v2960 = vadd.f32 0.0, %v2959
        %v2961 = vpop.f32.mrf.mxu0
        %2962 = vmatprep.mubr.f32.mxu0 %v2540
        %2963 = vmatmul.mubr.f32.gmra.mxu0 %v2539
        %v2964 = vpop.f32.mrf.mxu0
        %v2965 = vadd.f32 0.0, %v2964
        %v2966 = vpop.f32.mrf.mxu0
        %2967 = vdwg.mxu0
        %v2968 = vrcp.pop %v2950
        %v2969 = vrcp.pop %v2955
        %v2970 = vrcp.pop %v2960
        %v2971 = vrcp.pop %v2965
        %v2973 = vsel %vm1942, %v2968, 0
        %v2976 = vsel %vm1942, %v2969, 0
        %v2979 = vsel %vm1942, %v2970, 0
        %v2982 = vsel %vm1942, %v2971, 0
        %2984 = vmatprep.subr.mxu0 0.0
        %2985 = vmatpush1.msra.mxu0 0.0
        %2986 = vmatprep.subr.mxu0 0.0
        %2987 = vmatpush1.msra.mxu0 0.0
        %2988 = vmatprep.subr.mxu0 0.0
        %2989 = vmatpush1.msra.mxu0 0.0
        %2990 = vmatprep.subr.mxu0 0.0
        %2991 = vmatpush1.msra.mxu0 0.0
        %2992 = vmatprep.subr.mxu0 0.0
        %2993 = vmatpush1.msra.mxu0 0.0
        %2994 = vmatprep.subr.mxu0 0.0
        %2995 = vmatpush1.msra.mxu0 0.0
        %2996 = vmatprep.subr.mxu0 0.0
        %2997 = vmatpush1.msra.mxu0 0.0
        %2998 = vmatprep.subr.mxu0 0.0
        %2999 = vmatpush1.msra.mxu0 0.0
        %3000 = vmatprep.subr.mxu0 0.0
        %3001 = vmatpush1.msra.mxu0 0.0
        %3002 = vmatprep.subr.mxu0 0.0
        %3003 = vmatpush1.msra.mxu0 0.0
        %3004 = vmatprep.subr.mxu0 0.0
        %3005 = vmatpush1.msra.mxu0 0.0
        %3006 = vmatprep.subr.mxu0 0.0
        %3007 = vmatpush1.msra.mxu0 0.0
        %3008 = vmatprep.subr.mxu0 0.0
        %3009 = vmatpush1.msra.mxu0 0.0
        %3010 = vmatprep.subr.mxu0 0.0
        %3011 = vmatpush1.msra.mxu0 0.0
        %3012 = vmatprep.subr.mxu0 0.0
        %3013 = vmatpush1.msra.mxu0 0.0
        %3014 = vmatprep.subr.mxu0 0.0
        %3015 = vmatpush1.msra.mxu0 %v761
        %3016 = vmatprep.subr.mxu0 0.0
        %3017 = vmatpush2.msra.mxu0 0.0
        %3018 = vmatprep.subr.mxu0 0.0
        %3019 = vmatpush2.msra.mxu0 0.0
        %3020 = vmatprep.subr.mxu0 0.0
        %3021 = vmatpush2.msra.mxu0 0.0
        %3022 = vmatprep.subr.mxu0 0.0
        %3023 = vmatpush2.msra.mxu0 0.0
        %3024 = vmatprep.subr.mxu0 0.0
        %3025 = vmatpush2.msra.mxu0 0.0
        %3026 = vmatprep.subr.mxu0 0.0
        %3027 = vmatpush2.msra.mxu0 0.0
        %3028 = vmatprep.subr.mxu0 0.0
        %3029 = vmatpush2.msra.mxu0 0.0
        %3030 = vmatprep.subr.mxu0 0.0
        %3031 = vmatpush2.msra.mxu0 0.0
        %3032 = vmatprep.subr.mxu0 0.0
        %3033 = vmatpush2.msra.mxu0 0.0
        %3034 = vmatprep.subr.mxu0 0.0
        %3035 = vmatpush2.msra.mxu0 0.0
        %3036 = vmatprep.subr.mxu0 0.0
        %3037 = vmatpush2.msra.mxu0 0.0
        %3038 = vmatprep.subr.mxu0 0.0
        %3039 = vmatpush2.msra.mxu0 0.0
        %3040 = vmatprep.subr.mxu0 0.0
        %3041 = vmatpush2.msra.mxu0 0.0
        %3042 = vmatprep.subr.mxu0 0.0
        %3043 = vmatpush2.msra.mxu0 0.0
        %3044 = vmatprep.subr.mxu0 0.0
        %3045 = vmatpush2.msra.mxu0 0.0
        %3046 = vmatprep.subr.mxu0 0.0
        %3047 = vmatpush2.msra.mxu0 0.0
        %3048 = vmatprep.mubr.f32.mxu0 0.0
        %3049 = vmatmul.mubr.f32.gmra.mxu0 %v2973
        %v3050 = vpop.f32.mrf.mxu0
        %v3051 = vadd.f32 0.0, %v3050
        %v3052 = vpop.f32.mrf.mxu0
        %3053 = vmatprep.mubr.f32.mxu0 0.0
        %3054 = vmatmul.mubr.f32.gmra.mxu0 %v2976
        %v3055 = vpop.f32.mrf.mxu0
        %v3056 = vadd.f32 0.0, %v3055
        %v3057 = vpop.f32.mrf.mxu0
        %3058 = vmatprep.mubr.f32.mxu0 0.0
        %3059 = vmatmul.mubr.f32.gmra.mxu0 %v2979
        %v3060 = vpop.f32.mrf.mxu0
        %v3061 = vadd.f32 0.0, %v3060
        %v3062 = vpop.f32.mrf.mxu0
        %3063 = vmatprep.mubr.f32.mxu0 0.0
        %3064 = vmatmul.mubr.f32.gmra.mxu0 %v2982
        %v3065 = vpop.f32.mrf.mxu0
        %v3066 = vadd.f32 0.0, %v3065
        %v3067 = vpop.f32.mrf.mxu0
        %3068 = vdwg.mxu0
        %v3069 = vmul.f32 %v2865, %v3051
        %v3070 = vmul.f32 %v2870, %v3056
        %v3071 = vmul.f32 %v2875, %v3061
        %v3072 = vmul.f32 %v2880, %v3066
        %v3073 = vsel %vm873, %v3069, 0.0
        %3074 = vadd.xlane.f32.xlu0 %v3073
        %v3075 = vpop.xlane.xlu0 %3074
        %v3076 = vsel %vm873, %v3070, 0.0
        %3077 = vadd.xlane.f32.xlu0 %v3076
        %v3078 = vpop.xlane.xlu0 %3077
        %v3079 = vsel %vm873, %v3071, 0.0
        %3080 = vadd.xlane.f32.xlu0 %v3079
        %v3081 = vpop.xlane.xlu0 %3080
        %v3082 = vsel %vm873, %v3072, 0.0
        %3083 = vadd.xlane.f32.xlu0 %v3082
        %v3084 = vpop.xlane.xlu0 %3083
        %v3085 = vmul.f32 %v3075, %v2056
        %v3086 = vmul.f32 %v3078, %v2056
        %v3087 = vmul.f32 %v3081, %v2056
        %v3088 = vmul.f32 %v3084, %v2056
        %v3089 = vsub.f32 %v3069, %v3085
        %v3090 = vsub.f32 %v3070, %v3086
        %v3091 = vsub.f32 %v3071, %v3087
        %v3092 = vsub.f32 %v3072, %v3088
        %v3093 = vmul.f32 %v3089, %v3089
        %v3094 = vmul.f32 %v3090, %v3090
        %v3095 = vmul.f32 %v3091, %v3091
        %v3096 = vmul.f32 %v3092, %v3092
        %v3097 = vsel %vm873, %v3093, 0.0
        %3098 = vadd.xlane.f32.xlu0 %v3097
        %v3099 = vpop.xlane.xlu0 %3098
        %v3100 = vsel %vm873, %v3094, 0.0
        %3101 = vadd.xlane.f32.xlu0 %v3100
        %v3102 = vpop.xlane.xlu0 %3101
        %v3103 = vsel %vm873, %v3095, 0.0
        %3104 = vadd.xlane.f32.xlu0 %v3103
        %v3105 = vpop.xlane.xlu0 %3104
        %v3106 = vsel %vm873, %v3096, 0.0
        %3107 = vadd.xlane.f32.xlu0 %v3106
        %v3108 = vpop.xlane.xlu0 %3107
        %v3109 = vmul.f32 %v3099, %v2056
        %v3110 = vmul.f32 %v3102, %v2056
        %v3111 = vmul.f32 %v3105, %v2056
        %v3112 = vmul.f32 %v3108, %v2056
        %v3113 = vadd.f32 %v3109, 1e-05
        %v3114 = vadd.f32 %v3110, 1e-05
        %v3115 = vadd.f32 %v3111, 1e-05
        %v3116 = vadd.f32 %v3112, 1e-05
        %v3117 = vrsqrt.pop %v3113
        %v3118 = vrsqrt.pop %v3114
        %v3119 = vrsqrt.pop %v3115
        %v3120 = vrsqrt.pop %v3116
        %v3121 = vmul.f32 %v3089, %v3117
        %v3122 = vmul.f32 %v3090, %v3118
        %v3123 = vmul.f32 %v3091, %v3119
        %v3124 = vmul.f32 %v3092, %v3120
        %v3125 = vmax.f32 %v3121, 0.0
        %v3126 = vmax.f32 %v3122, 0.0
        %v3127 = vmax.f32 %v3123, 0.0
        %v3128 = vmax.f32 %v3124, 0.0
        %v3129 = vsel %vm873, %v3125, 0.0
        %v3130 = vsel %vm873, %v3126, 0.0
        %v3131 = vadd.f32 %v3129, %v3130
        %v3132 = vsel %vm873, %v3127, 0.0
        %v3133 = vadd.f32 %v3131, %v3132
        %v3134 = vsel %vm873, %v3128, 0.0
        %v3135 = vadd.f32 %v3133, %v3134
        %v3136 = vrot.slane %v3135, 4
        %v3137 = vadd.f32 %v3135, %v3136
        %v3138 = vrot.slane %v3137, 2
        %v3139 = vadd.f32 %v3137, %v3138
        %v3140 = vrot.slane %v3139, 1
        %v3141 = vadd.f32 %v3139, %v3140
        %v3142 = vmul.f32 %v3141, %v2056
        %v3143 = vld [vmem:[%s10] sm:$0xff]
        %v3144 = vld [vmem:[%s10 + $0x8] sm:$0xff]
        %v3145 = vld [vmem:[%s10 + $0x10] sm:$0xff]
        %v3146 = vld [vmem:[%s10 + $0x18] sm:$0xff]
        %v3147 = vld [vmem:[%s11] sm:$0x1]
        %v3149 = vsel %vm873, %v3142, 0
        %3151 = vmatprep.subr.mxu0 0.0
        %3152 = vmatpush1.msra.mxu0 0.0
        %3153 = vmatprep.subr.mxu0 0.0
        %3154 = vmatpush1.msra.mxu0 0.0
        %3155 = vmatprep.subr.mxu0 0.0
        %3156 = vmatpush1.msra.mxu0 0.0
        %3157 = vmatprep.subr.mxu0 0.0
        %3158 = vmatpush1.msra.mxu0 0.0
        %3159 = vmatprep.subr.mxu0 0.0
        %3160 = vmatpush1.msra.mxu0 0.0
        %3161 = vmatprep.subr.mxu0 0.0
        %3162 = vmatpush1.msra.mxu0 0.0
        %3163 = vmatprep.subr.mxu0 0.0
        %3164 = vmatpush1.msra.mxu0 0.0
        %3165 = vmatprep.subr.mxu0 0.0
        %3166 = vmatpush1.msra.mxu0 0.0
        %3167 = vmatprep.subr.mxu0 0.0
        %3168 = vmatpush1.msra.mxu0 0.0
        %3169 = vmatprep.subr.mxu0 0.0
        %3170 = vmatpush1.msra.mxu0 0.0
        %3171 = vmatprep.subr.mxu0 0.0
        %3172 = vmatpush1.msra.mxu0 0.0
        %3173 = vmatprep.subr.mxu0 0.0
        %3174 = vmatpush1.msra.mxu0 0.0
        %3175 = vmatprep.subr.mxu0 0.0
        %3176 = vmatpush1.msra.mxu0 %v3146
        %3177 = vmatprep.subr.mxu0 0.0
        %3178 = vmatpush1.msra.mxu0 %v3145
        %3179 = vmatprep.subr.mxu0 0.0
        %3180 = vmatpush1.msra.mxu0 %v3144
        %3181 = vmatprep.subr.mxu0 0.0
        %3182 = vmatpush1.msra.mxu0 %v3143
        %3183 = vmatprep.subr.mxu0 0.0
        %3184 = vmatpush2.msra.mxu0 0.0
        %3185 = vmatprep.subr.mxu0 0.0
        %3186 = vmatpush2.msra.mxu0 0.0
        %3187 = vmatprep.subr.mxu0 0.0
        %3188 = vmatpush2.msra.mxu0 0.0
        %3189 = vmatprep.subr.mxu0 0.0
        %3190 = vmatpush2.msra.mxu0 0.0
        %3191 = vmatprep.subr.mxu0 0.0
        %3192 = vmatpush2.msra.mxu0 0.0
        %3193 = vmatprep.subr.mxu0 0.0
        %3194 = vmatpush2.msra.mxu0 0.0
        %3195 = vmatprep.subr.mxu0 0.0
        %3196 = vmatpush2.msra.mxu0 0.0
        %3197 = vmatprep.subr.mxu0 0.0
        %3198 = vmatpush2.msra.mxu0 0.0
        %3199 = vmatprep.subr.mxu0 0.0
        %3200 = vmatpush2.msra.mxu0 0.0
        %3201 = vmatprep.subr.mxu0 0.0
        %3202 = vmatpush2.msra.mxu0 0.0
        %3203 = vmatprep.subr.mxu0 0.0
        %3204 = vmatpush2.msra.mxu0 0.0
        %3205 = vmatprep.subr.mxu0 0.0
        %3206 = vmatpush2.msra.mxu0 0.0
        %3207 = vmatprep.subr.mxu0 0.0
        %3208 = vmatpush2.msra.mxu0 0.0
        %3209 = vmatprep.subr.mxu0 0.0
        %3210 = vmatpush2.msra.mxu0 0.0
        %3211 = vmatprep.subr.mxu0 0.0
        %3212 = vmatpush2.msra.mxu0 0.0
        %3213 = vmatprep.subr.mxu0 0.0
        %3214 = vmatpush2.msra.mxu0 0.0
        %3215 = vmatprep.mubr.f32.mxu0 0.0
        %3216 = vmatmul.mubr.f32.gmra.mxu0 %v3149
        %v3217 = vpop.f32.mrf.mxu0
        %v3218 = vadd.f32 %v3147, %v3217
        %v3219 = vpop.f32.mrf.mxu0
        %3220 = vdwg.mxu0
        %v3221 = vmax.f32 %v3218, 0.0
        %v3222 = vld [vmem:[%s12] sm:$0xff]
        %v3223 = vld [vmem:[%s12 + $0x8] sm:$0xff]
        %v3224 = vld [vmem:[%s13] sm:$0x1]
        %v3226 = vsel %vm771, %v3221, 0
        %3228 = vmatprep.subr.mxu0 0.0
        %3229 = vmatpush1.msra.mxu0 0.0
        %3230 = vmatprep.subr.mxu0 0.0
        %3231 = vmatpush1.msra.mxu0 0.0
        %3232 = vmatprep.subr.mxu0 0.0
        %3233 = vmatpush1.msra.mxu0 0.0
        %3234 = vmatprep.subr.mxu0 0.0
        %3235 = vmatpush1.msra.mxu0 0.0
        %3236 = vmatprep.subr.mxu0 0.0
        %3237 = vmatpush1.msra.mxu0 0.0
        %3238 = vmatprep.subr.mxu0 0.0
        %3239 = vmatpush1.msra.mxu0 0.0
        %3240 = vmatprep.subr.mxu0 0.0
        %3241 = vmatpush1.msra.mxu0 0.0
        %3242 = vmatprep.subr.mxu0 0.0
        %3243 = vmatpush1.msra.mxu0 0.0
        %3244 = vmatprep.subr.mxu0 0.0
        %3245 = vmatpush1.msra.mxu0 0.0
        %3246 = vmatprep.subr.mxu0 0.0
        %3247 = vmatpush1.msra.mxu0 0.0
        %3248 = vmatprep.subr.mxu0 0.0
        %3249 = vmatpush1.msra.mxu0 0.0
        %3250 = vmatprep.subr.mxu0 0.0
        %3251 = vmatpush1.msra.mxu0 0.0
        %3252 = vmatprep.subr.mxu0 0.0
        %3253 = vmatpush1.msra.mxu0 0.0
        %3254 = vmatprep.subr.mxu0 0.0
        %3255 = vmatpush1.msra.mxu0 0.0
        %3256 = vmatprep.subr.mxu0 0.0
        %3257 = vmatpush1.msra.mxu0 %v3223
        %3258 = vmatprep.subr.mxu0 0.0
        %3259 = vmatpush1.msra.mxu0 %v3222
        %3260 = vmatprep.subr.mxu0 0.0
        %3261 = vmatpush2.msra.mxu0 0.0
        %3262 = vmatprep.subr.mxu0 0.0
        %3263 = vmatpush2.msra.mxu0 0.0
        %3264 = vmatprep.subr.mxu0 0.0
        %3265 = vmatpush2.msra.mxu0 0.0
        %3266 = vmatprep.subr.mxu0 0.0
        %3267 = vmatpush2.msra.mxu0 0.0
        %3268 = vmatprep.subr.mxu0 0.0
        %3269 = vmatpush2.msra.mxu0 0.0
        %3270 = vmatprep.subr.mxu0 0.0
        %3271 = vmatpush2.msra.mxu0 0.0
        %3272 = vmatprep.subr.mxu0 0.0
        %3273 = vmatpush2.msra.mxu0 0.0
        %3274 = vmatprep.subr.mxu0 0.0
        %3275 = vmatpush2.msra.mxu0 0.0
        %3276 = vmatprep.subr.mxu0 0.0
        %3277 = vmatpush2.msra.mxu0 0.0
        %3278 = vmatprep.subr.mxu0 0.0
        %3279 = vmatpush2.msra.mxu0 0.0
        %3280 = vmatprep.subr.mxu0 0.0
        %3281 = vmatpush2.msra.mxu0 0.0
        %3282 = vmatprep.subr.mxu0 0.0
        %3283 = vmatpush2.msra.mxu0 0.0
        %3284 = vmatprep.subr.mxu0 0.0
        %3285 = vmatpush2.msra.mxu0 0.0
        %3286 = vmatprep.subr.mxu0 0.0
        %3287 = vmatpush2.msra.mxu0 0.0
        %3288 = vmatprep.subr.mxu0 0.0
        %3289 = vmatpush2.msra.mxu0 0.0
        %3290 = vmatprep.subr.mxu0 0.0
        %3291 = vmatpush2.msra.mxu0 0.0
        %3292 = vmatprep.mubr.f32.mxu0 0.0
        %3293 = vmatmul.mubr.f32.gmra.mxu0 %v3226
        %v3294 = vpop.f32.mrf.mxu0
        %v3295 = vadd.f32 %v3224, %v3294
        %v3296 = vpop.f32.mrf.mxu0
        %3297 = vdwg.mxu0
        %vm3298 = vcmask 57344
        %3299 = vst.msk [vmem:[%s636] sm:$0x1] %vm3298, %v3295
        %s3300 = sand.u32 %s472, 1
        %s3301 = scalar_lea.sflag [#allocation3], %s3300
        %s3302 = sand.u32 %s472, 1
        %s3303 = scalar_lea.vmem [#allocation2], %s3302
        // Predicated region
        $region101: #{tpu_custom_call.1} parent=99 // pred_check
          %p3304 = pneg %p482
        $region102: #{tpu_custom_call.1} parent=99 // pred_check_branch
          %3306 = sbr.rel (%p3304) target = $region104
        $region103: #{tpu_custom_call.1} parent=99 // pred_region
          %s3308 = ssub.s32 16, 16
          %3309 = vsyncadd %s3301, %s3308
          %s3310 = smul.addr %s34, 16
          %s3311 = scalar_lea.hbm %s20, %s3310
          %s3313 = sshll.u32 %s3303, 4
          %s3314 = int_to_ptr.vmem [resolvable:$true] %s3313
          %3316 = dma.vmem_to_hbm [thread:$0]  %s3314, 16, %s3311, %s3301
        $region104: #{tpu_custom_call.1} parent=99 // pred_fallthru
          _
      $region100: #{tpu_custom_call.1} parent=5 // pred_fallthru
        _
      %p3317 = scmp.le.s32.totalorder 2, %s29
      // Predicated region
      $region105: #{tpu_custom_call.1} parent=5 // pred_check
        %p3318 = pneg %p3317
      $region106: #{tpu_custom_call.1} parent=5 // pred_check_branch
        %3320 = sbr.rel (%p3318) target = $region108
      $region107: #{tpu_custom_call.1} parent=5 // pred_region
        %s3321 = ssub.s32 %s29, 2
        // Predicated region
        $region109: #{tpu_custom_call.1} parent=107 // pred_check
          %p3322 = pneg %p488
        $region110: #{tpu_custom_call.1} parent=107 // pred_check_branch
          %3324 = sbr.rel (%p3322) target = $region112
        $region111: #{tpu_custom_call.1} parent=107 // pred_region
          %s3325 = sand.u32 %s473, 1
          %s3326 = scalar_lea.sflag [#allocation3], %s3325
          %s3327 = sand.u32 %s473, 1
          %s3328 = scalar_lea.vmem [#allocation2], %s3327
          %3329 = dma.done %s3326, 16
        $region112: #{tpu_custom_call.1} parent=107 // pred_fallthru
          _
      $region108: #{tpu_custom_call.1} parent=5 // pred_fallthru
        _
    $region6: #{tpu_custom_call.1} parent=1 // loop_footer
      %s33 = sadd.s32 1, %s29
    $region7: #{tpu_custom_call.1} parent=1 // loop_footer_branch
      %28 = sbr.rel target = $region3
    $region8: #{tpu_custom_call.1} parent=1 // loop_exit
      _
    %3330 = vsyncpa [#allocation3], 1
    %s3331 = scalar_lea.sflag [#allocation3], 1
    %3332 = vsyncpa %s3331, 1

</llo_original>
